<compile_context>
chip_gen: v6e
topology: v6e:2x2x1
jax: 0.10.0
libtpu: 0.0.40
codegen_flags: <defaults>
</compile_context>

<pallas_src>
import functools

import jax
import jax.numpy as jnp
from jax.experimental import pallas as pl
from jax.experimental.pallas import tpu as pltpu


# ----------------------------------------------------------------------------
# Pallas kernels
# ----------------------------------------------------------------------------
def _conv_relu_pool_kernel(x_ref, we_ref, wo_ref, b_ref, sv_ref, o_ref, *,
                           kh: int, ho: int, tb: int):
    """Fused VALID conv (stride 1) + bias + ReLU + 2x2 max-pool for `tb` images.

    x_ref : [tb, H, W*Cin]         (bf16) image tile, H = ho + kh - 1
    we_ref: [kh, W*Cin, Wp*Cout]   (bf16) width-conv matrices, even output cols
    wo_ref: [kh, W*Cin, Wp*Cout]   (bf16) width-conv matrices, odd  output cols
    b_ref : [1, Wp*Cout]           (f32)  bias tiled over pooled width
    sv_ref: [ho//2, ho-1]          (bf16) 0/1 even-row selection matrix
    o_ref : [tb, ho//2, Wp*Cout]   (bf16) pooled output tile
    """
    b_row = b_ref[...]                               # [1, Wp*Cout] f32
    sv = sv_ref[...]                                 # [ho//2, ho-1]
    w_even = [we_ref[dy] for dy in range(kh)]        # hoisted weight loads
    w_odd = [wo_ref[dy] for dy in range(kh)]
    woh = b_row.shape[1]

    for b in range(tb):                              # static unroll over images
        xb = x_ref[b]                                # [H, W*Cin], VMEM-resident
        acc_e = jnp.zeros((ho, woh), jnp.float32)
        acc_o = jnp.zeros((ho, woh), jnp.float32)
        for dy in range(kh):                         # conv = sum over kernel rows
            xs = xb[dy:dy + ho, :]                   # shifted rows (no HBM traffic)
            acc_e = acc_e + jnp.dot(xs, w_even[dy],
                                    preferred_element_type=jnp.float32)
            acc_o = acc_o + jnp.dot(xs, w_odd[dy],
                                    preferred_element_type=jnp.float32)
        act_e = jnp.maximum(acc_e + b_row, 0.0)      # bias + ReLU (even cols)
        act_o = jnp.maximum(acc_o + b_row, 0.0)      # bias + ReLU (odd cols)
        hmax = jnp.maximum(act_e, act_o)             # horizontal 2-wide max
        vmax = jnp.maximum(hmax[:ho - 1, :], hmax[1:, :])   # adjacent-row max
        pooled = jnp.dot(sv, vmax.astype(sv.dtype),         # pick even rows
                         preferred_element_type=jnp.float32)
        o_ref[b] = pooled.astype(o_ref.dtype)


def _fc_head_kernel(x_ref, w1_ref, b1_ref, w2_ref, b2_ref, w3_ref, b3_ref,
                    o_ref):
    """Fused Linear(256,128)+ReLU -> Linear(128,64)+ReLU -> Linear(64,128pad)."""
    h1 = jnp.dot(x_ref[...], w1_ref[...], preferred_element_type=jnp.float32)
    h1 = jnp.maximum(h1 + b1_ref[...], 0.0).astype(w2_ref.dtype)
    h2 = jnp.dot(h1, w2_ref[...], preferred_element_type=jnp.float32)
    h2 = jnp.maximum(h2 + b2_ref[...], 0.0).astype(w3_ref.dtype)
    out = jnp.dot(h2, w3_ref[...], preferred_element_type=jnp.float32)
    o_ref[...] = (out + b3_ref[...]).astype(o_ref.dtype)


# ----------------------------------------------------------------------------
# Pallas wrappers
# ----------------------------------------------------------------------------
def conv_relu_pool(x, stage):
    """x: [B, H, W*Cin] bf16 -> [B, Ho//2, (Wo//2)*Cout] bf16."""
    w_even, w_odd = stage["w_even"], stage["w_odd"]
    b_row, sv = stage["b_row"], stage["sv"]
    B, H, WC = x.shape
    kh = w_even.shape[0]
    woh = w_even.shape[2]
    ho = H - kh + 1
    hp = ho // 2

    tb = min(8, B)                                   # images per grid step
    bp = pl.cdiv(B, tb) * tb
    if bp != B:
        x = jnp.pad(x, ((0, bp - B), (0, 0), (0, 0)))

    flops = bp * (4 * kh * ho * WC * woh + 2 * hp * (ho - 1) * woh)
    bytes_accessed = 2 * (bp * H * WC + bp * hp * woh + 2 * kh * WC * woh) \
        + 4 * (woh + hp * (ho - 1))

    kernel = functools.partial(_conv_relu_pool_kernel, kh=kh, ho=ho, tb=tb)
    out = pl.pallas_call(
        kernel,
        out_shape=jax.ShapeDtypeStruct((bp, hp, woh), jnp.bfloat16),
        grid=(bp // tb,),
        in_specs=[
            pl.BlockSpec((tb, H, WC), lambda i: (i, 0, 0)),
            pl.BlockSpec((kh, WC, woh), lambda i: (0, 0, 0)),
            pl.BlockSpec((kh, WC, woh), lambda i: (0, 0, 0)),
            pl.BlockSpec((1, woh), lambda i: (0, 0)),
            pl.BlockSpec((hp, ho - 1), lambda i: (0, 0)),
        ],
        out_specs=pl.BlockSpec((tb, hp, woh), lambda i: (i, 0, 0)),
        compiler_params=pltpu.CompilerParams(
            dimension_semantics=("parallel",),
            vmem_limit_bytes=32 * 1024 * 1024,
        ),
        cost_estimate=pl.CostEstimate(flops=int(flops), transcendentals=0,
                                      bytes_accessed=int(bytes_accessed)),
    )(x, w_even, w_odd, b_row, sv)
    return out[:B]


def fc_head(x, fc):
    """x: [B, 256] bf16 -> [B, 128] f32 (last FC padded to lane-dense N=128)."""
    B, K = x.shape
    w1, b1 = fc["w1"], fc["b1"]
    w2, b2 = fc["w2"], fc["b2"]
    w3, b3 = fc["w3"], fc["b3"]
    n1, n2, n3 = w1.shape[1], w2.shape[1], w3.shape[1]

    tm = min(256, B)                                 # batch rows per grid step
    bp = pl.cdiv(B, tm) * tm
    if bp != B:
        x = jnp.pad(x, ((0, bp - B), (0, 0)))

    flops = 2 * bp * (K * n1 + n1 * n2 + n2 * n3)
    bytes_accessed = 2 * (bp * K + K * n1 + n1 * n2 + n2 * n3) + 4 * bp * n3

    out = pl.pallas_call(
        _fc_head_kernel,
        out_shape=jax.ShapeDtypeStruct((bp, n3), jnp.float32),
        grid=(bp // tm,),
        in_specs=[
            pl.BlockSpec((tm, K), lambda i: (i, 0)),
            pl.BlockSpec((K, n1), lambda i: (0, 0)),
            pl.BlockSpec((1, n1), lambda i: (0, 0)),
            pl.BlockSpec((n1, n2), lambda i: (0, 0)),
            pl.BlockSpec((1, n2), lambda i: (0, 0)),
            pl.BlockSpec((n2, n3), lambda i: (0, 0)),
            pl.BlockSpec((1, n3), lambda i: (0, 0)),
        ],
        out_specs=pl.BlockSpec((tm, n3), lambda i: (i, 0)),
        compiler_params=pltpu.CompilerParams(
            dimension_semantics=("parallel",),
            vmem_limit_bytes=32 * 1024 * 1024,
        ),
        cost_estimate=pl.CostEstimate(flops=int(flops), transcendentals=0,
                                      bytes_accessed=int(bytes_accessed)),
    )(x, w1, b1, w2, b2, w3, b3)
    return out[:B]


# ----------------------------------------------------------------------------
# Parameter construction / preprocessing
# ----------------------------------------------------------------------------
def init_params(key):
    ks = jax.random.split(key, 10)
    s = 0.1
    return {
        "w_conv1": jax.random.normal(ks[0], (5, 5, 1, 8), jnp.float32) * s,
        "b_conv1": jax.random.normal(ks[1], (8,), jnp.float32) * s,
        "w_conv2": jax.random.normal(ks[2], (5, 5, 8, 16), jnp.float32) * s,
        "b_conv2": jax.random.normal(ks[3], (16,), jnp.float32) * s,
        "w_fc1": jax.random.normal(ks[4], (16 * 4 * 4, 128), jnp.float32) * s,
        "b_fc1": jax.random.normal(ks[5], (128,), jnp.float32) * s,
        "w_fc2": jax.random.normal(ks[6], (128, 64), jnp.float32) * s,
        "b_fc2": jax.random.normal(ks[7], (64,), jnp.float32) * s,
        "w_fc3": jax.random.normal(ks[8], (64, 10), jnp.float32) * s,
        "b_fc3": jax.random.normal(ks[9], (10,), jnp.float32) * s,
    }


def _prep_conv_stage(w, b, in_width):
    """Build even/odd width-convolution matrices for a VALID conv + 2x2 pool.

    Output columns of each matrix are ordered (pooled_w, cout), so the pooled
    result directly has the [H', W'*Cout] layout the next conv stage consumes.
    """
    kh, kw, cin, cout = w.shape
    wo = in_width - kw + 1            # conv output width (= height, square input)
    wp = wo // 2                      # pooled width
    ho, hp = wo, wo // 2

    halves = {0: [], 1: []}
    for dy in range(kh):
        wdy = w[dy].reshape(kw * cin, cout)              # rows (dx, ci), cols co
        for p in (0, 1):
            m = jnp.zeros((in_width * cin, wp * cout), jnp.float32)
            for j in range(wp):
                w0 = 2 * j + p                           # leftmost input column
                m = m.at[w0 * cin:(w0 + kw) * cin,
                         j * cout:(j + 1) * cout].set(wdy)
            halves[p].append(m)
    w_even = jnp.stack(halves[0]).astype(jnp.bfloat16)   # [kh, W*Cin, wp*cout]
    w_odd = jnp.stack(halves[1]).astype(jnp.bfloat16)
    b_row = jnp.tile(b, wp).reshape(1, wp * cout).astype(jnp.float32)
    sv = jnp.zeros((hp, ho - 1), jnp.float32)
    sv = sv.at[jnp.arange(hp), 2 * jnp.arange(hp)].set(1.0)
    return {"w_even": w_even, "w_odd": w_odd, "b_row": b_row,
            "sv": sv.astype(jnp.bfloat16)}


def prepare_params(params):
    conv1 = _prep_conv_stage(params["w_conv1"], params["b_conv1"], in_width=28)
    conv2 = _prep_conv_stage(params["w_conv2"], params["b_conv2"], in_width=12)

    # Our flattened conv2 output order is (h, w, c); PyTorch nn.Flatten on NCHW
    # is (c, h, w).  Permute fc1's input rows once (weight-side, no data cost)
    # so the kernel input is a plain row-major reshape of the pooled output.
    w1 = params["w_fc1"].reshape(16, 4, 4, 128)          # rows in (c, h, w) order
    w1 = jnp.transpose(w1, (1, 2, 0, 3)).reshape(256, 128)

    # Pad fc3 (N=10) to lane-dense N=128; the wrapper slices [:, :10].
    w3 = jnp.zeros((64, 128), jnp.float32).at[:, :10].set(params["w_fc3"])
    b3 = jnp.zeros((128,), jnp.float32).at[:10].set(params["b_fc3"])

    fc = {
        "w1": w1.astype(jnp.bfloat16),
        "b1": params["b_fc1"].reshape(1, 128).astype(jnp.float32),
        "w2": params["w_fc2"].astype(jnp.bfloat16),
        "b2": params["b_fc2"].reshape(1, 64).astype(jnp.float32),
        "w3": w3.astype(jnp.bfloat16),
        "b3": b3.reshape(1, 128).astype(jnp.float32),
    }
    return {"conv1": conv1, "conv2": conv2, "fc": fc}


# ----------------------------------------------------------------------------
# Forward pass
# ----------------------------------------------------------------------------
def simple_cnn_forward(x_nchw, prepared):
    """x_nchw: [B, 1, 28, 28] float32 (PyTorch layout) -> logits [B, 10] f32."""
    B, cin, H, W = x_nchw.shape
    # Layout glue: NCHW -> [B, H, W*Cin] (rows = height, lanes = (width, cin)).
    x = jnp.transpose(x_nchw, (0, 2, 3, 1)).reshape(B, H, W * cin)
    x = x.astype(jnp.bfloat16)

    h = conv_relu_pool(x, prepared["conv1"])     # [B, 12, 12*8 = 96]
    h = conv_relu_pool(h, prepared["conv2"])     # [B, 4, 4*16 = 64]

    flat = h.reshape(B, 16 * 4 * 4)              # (h, w, c) order; fc1 permuted
    logits = fc_head(flat, prepared["fc"])       # [B, 128] f32 (padded head)
    return logits[:, :10]


if __name__ == "__main__":
    key = jax.random.PRNGKey(0)
    k_x, k_p = jax.random.split(key)
    # 28x28 input is implied by the module (16*4*4 flatten); batch kept small.
    x = jax.random.normal(k_x, (2, 1, 28, 28), jnp.float32)
    params = init_params(k_p)
    prepared = prepare_params(params)

    fwd = jax.jit(simple_cnn_forward)
    logits = jax.block_until_ready(fwd(x, prepared))
    assert logits.shape == (2, 10), logits.shape
    assert bool(jnp.all(jnp.isfinite(logits)))
    print("KERNEL_OK")
</pallas_src>

<mosaic_0001>
module attributes {stable_mosaic.version = 11 : i64} {
  func.func @_conv_relu_pool_kernel(%arg0: i32, %arg1: memref<2x28x28xbf16, #tpu.memory_space<vmem>>, %arg2: memref<5x28x96xbf16, #tpu.memory_space<vmem>>, %arg3: memref<5x28x96xbf16, #tpu.memory_space<vmem>>, %arg4: memref<1x96xf32, #tpu.memory_space<vmem>>, %arg5: memref<12x23xbf16, #tpu.memory_space<vmem>>, %arg6: memref<2x12x96xbf16, #tpu.memory_space<vmem>>) attributes {dimension_semantics = [#tpu.dimension_semantics<parallel>], iteration_bounds = array<i64: 1>, scalar_prefetch = 0 : i64, scratch_operands = 0 : i64, tpu.core_type = #tpu.core_type<tc>, window_params = [{transform_indices = @transform_0, window_bounds = array<i64: 2, 28, 28>}, {pipeline_mode = #tpu.pipeline_mode<synchronous>, transform_indices = @transform_1, window_bounds = array<i64: 5, 28, 96>}, {pipeline_mode = #tpu.pipeline_mode<synchronous>, transform_indices = @transform_2, window_bounds = array<i64: 5, 28, 96>}, {pipeline_mode = #tpu.pipeline_mode<synchronous>, transform_indices = @transform_3, window_bounds = array<i64: 1, 96>}, {pipeline_mode = #tpu.pipeline_mode<synchronous>, transform_indices = @transform_4, window_bounds = array<i64: 12, 23>}, {transform_indices = @transform_5, window_bounds = array<i64: 2, 12, 96>}]} {
    %c0 = arith.constant 0 : index
    %c0_0 = arith.constant 0 : index
    %0 = vector.load %arg4[%c0, %c0_0] : memref<1x96xf32, #tpu.memory_space<vmem>>, vector<1x96xf32>
    %c0_1 = arith.constant 0 : index
    %c0_2 = arith.constant 0 : index
    %1 = vector.load %arg5[%c0_1, %c0_2] : memref<12x23xbf16, #tpu.memory_space<vmem>>, vector<12x23xbf16>
    %c0_3 = arith.constant 0 : index
    %c0_4 = arith.constant 0 : index
    %c0_5 = arith.constant 0 : index
    %2 = vector.load %arg2[%c0_3, %c0_4, %c0_5] : memref<5x28x96xbf16, #tpu.memory_space<vmem>>, vector<1x28x96xbf16>
    %3 = vector.shape_cast %2 : vector<1x28x96xbf16> to vector<28x96xbf16>
    %c1 = arith.constant 1 : index
    %c0_6 = arith.constant 0 : index
    %c0_7 = arith.constant 0 : index
    %4 = vector.load %arg2[%c1, %c0_6, %c0_7] : memref<5x28x96xbf16, #tpu.memory_space<vmem>>, vector<1x28x96xbf16>
    %5 = vector.shape_cast %4 : vector<1x28x96xbf16> to vector<28x96xbf16>
    %c2 = arith.constant 2 : index
    %c0_8 = arith.constant 0 : index
    %c0_9 = arith.constant 0 : index
    %6 = vector.load %arg2[%c2, %c0_8, %c0_9] : memref<5x28x96xbf16, #tpu.memory_space<vmem>>, vector<1x28x96xbf16>
    %7 = vector.shape_cast %6 : vector<1x28x96xbf16> to vector<28x96xbf16>
    %c3 = arith.constant 3 : index
    %c0_10 = arith.constant 0 : index
    %c0_11 = arith.constant 0 : index
    %8 = vector.load %arg2[%c3, %c0_10, %c0_11] : memref<5x28x96xbf16, #tpu.memory_space<vmem>>, vector<1x28x96xbf16>
    %9 = vector.shape_cast %8 : vector<1x28x96xbf16> to vector<28x96xbf16>
    %c4 = arith.constant 4 : index
    %c0_12 = arith.constant 0 : index
    %c0_13 = arith.constant 0 : index
    %10 = vector.load %arg2[%c4, %c0_12, %c0_13] : memref<5x28x96xbf16, #tpu.memory_space<vmem>>, vector<1x28x96xbf16>
    %11 = vector.shape_cast %10 : vector<1x28x96xbf16> to vector<28x96xbf16>
    %c0_14 = arith.constant 0 : index
    %c0_15 = arith.constant 0 : index
    %c0_16 = arith.constant 0 : index
    %12 = vector.load %arg3[%c0_14, %c0_15, %c0_16] : memref<5x28x96xbf16, #tpu.memory_space<vmem>>, vector<1x28x96xbf16>
    %13 = vector.shape_cast %12 : vector<1x28x96xbf16> to vector<28x96xbf16>
    %c1_17 = arith.constant 1 : index
    %c0_18 = arith.constant 0 : index
    %c0_19 = arith.constant 0 : index
    %14 = vector.load %arg3[%c1_17, %c0_18, %c0_19] : memref<5x28x96xbf16, #tpu.memory_space<vmem>>, vector<1x28x96xbf16>
    %15 = vector.shape_cast %14 : vector<1x28x96xbf16> to vector<28x96xbf16>
    %c2_20 = arith.constant 2 : index
    %c0_21 = arith.constant 0 : index
    %c0_22 = arith.constant 0 : index
    %16 = vector.load %arg3[%c2_20, %c0_21, %c0_22] : memref<5x28x96xbf16, #tpu.memory_space<vmem>>, vector<1x28x96xbf16>
    %17 = vector.shape_cast %16 : vector<1x28x96xbf16> to vector<28x96xbf16>
    %c3_23 = arith.constant 3 : index
    %c0_24 = arith.constant 0 : index
    %c0_25 = arith.constant 0 : index
    %18 = vector.load %arg3[%c3_23, %c0_24, %c0_25] : memref<5x28x96xbf16, #tpu.memory_space<vmem>>, vector<1x28x96xbf16>
    %19 = vector.shape_cast %18 : vector<1x28x96xbf16> to vector<28x96xbf16>
    %c4_26 = arith.constant 4 : index
    %c0_27 = arith.constant 0 : index
    %c0_28 = arith.constant 0 : index
    %20 = vector.load %arg3[%c4_26, %c0_27, %c0_28] : memref<5x28x96xbf16, #tpu.memory_space<vmem>>, vector<1x28x96xbf16>
    %21 = vector.shape_cast %20 : vector<1x28x96xbf16> to vector<28x96xbf16>
    %c0_29 = arith.constant 0 : index
    %c0_30 = arith.constant 0 : index
    %c0_31 = arith.constant 0 : index
    %22 = vector.load %arg1[%c0_29, %c0_30, %c0_31] : memref<2x28x28xbf16, #tpu.memory_space<vmem>>, vector<1x28x28xbf16>
    %23 = vector.shape_cast %22 : vector<1x28x28xbf16> to vector<28x28xbf16>
    %cst = arith.constant 0.000000e+00 : f32
    %24 = vector.broadcast %cst : f32 to vector<24x96xf32>
    %cst_32 = arith.constant 0.000000e+00 : f32
    %25 = vector.broadcast %cst_32 : f32 to vector<24x96xf32>
    %26 = vector.extract_strided_slice %23 {offsets = [0, 0], sizes = [24, 28], strides = [1, 1]} : vector<28x28xbf16> to vector<24x28xbf16>
    %cst_33 = arith.constant dense<0.000000e+00> : vector<24x96xf32>
    %27 = tpu.matmul %26, %3, %cst_33 {dimension_numbers = #tpu.dot_dimension_numbers<[1], [0], [0], [1], [0, 0, 1, 1], [], []>} : vector<24x28xbf16>, vector<28x96xbf16>, vector<24x96xf32> -> vector<24x96xf32>
    %28 = arith.addf %24, %27 : vector<24x96xf32>
    %cst_34 = arith.constant dense<0.000000e+00> : vector<24x96xf32>
    %29 = tpu.matmul %26, %13, %cst_34 {dimension_numbers = #tpu.dot_dimension_numbers<[1], [0], [0], [1], [0, 0, 1, 1], [], []>} : vector<24x28xbf16>, vector<28x96xbf16>, vector<24x96xf32> -> vector<24x96xf32>
    %30 = arith.addf %25, %29 : vector<24x96xf32>
    %31 = vector.extract_strided_slice %23 {offsets = [1, 0], sizes = [24, 28], strides = [1, 1]} : vector<28x28xbf16> to vector<24x28xbf16>
    %cst_35 = arith.constant dense<0.000000e+00> : vector<24x96xf32>
    %32 = tpu.matmul %31, %5, %cst_35 {dimension_numbers = #tpu.dot_dimension_numbers<[1], [0], [0], [1], [0, 0, 1, 1], [], []>} : vector<24x28xbf16>, vector<28x96xbf16>, vector<24x96xf32> -> vector<24x96xf32>
    %33 = arith.addf %28, %32 : vector<24x96xf32>
    %cst_36 = arith.constant dense<0.000000e+00> : vector<24x96xf32>
    %34 = tpu.matmul %31, %15, %cst_36 {dimension_numbers = #tpu.dot_dimension_numbers<[1], [0], [0], [1], [0, 0, 1, 1], [], []>} : vector<24x28xbf16>, vector<28x96xbf16>, vector<24x96xf32> -> vector<24x96xf32>
    %35 = arith.addf %30, %34 : vector<24x96xf32>
    %36 = vector.extract_strided_slice %23 {offsets = [2, 0], sizes = [24, 28], strides = [1, 1]} : vector<28x28xbf16> to vector<24x28xbf16>
    %cst_37 = arith.constant dense<0.000000e+00> : vector<24x96xf32>
    %37 = tpu.matmul %36, %7, %cst_37 {dimension_numbers = #tpu.dot_dimension_numbers<[1], [0], [0], [1], [0, 0, 1, 1], [], []>} : vector<24x28xbf16>, vector<28x96xbf16>, vector<24x96xf32> -> vector<24x96xf32>
    %38 = arith.addf %33, %37 : vector<24x96xf32>
    %cst_38 = arith.constant dense<0.000000e+00> : vector<24x96xf32>
    %39 = tpu.matmul %36, %17, %cst_38 {dimension_numbers = #tpu.dot_dimension_numbers<[1], [0], [0], [1], [0, 0, 1, 1], [], []>} : vector<24x28xbf16>, vector<28x96xbf16>, vector<24x96xf32> -> vector<24x96xf32>
    %40 = arith.addf %35, %39 : vector<24x96xf32>
    %41 = vector.extract_strided_slice %23 {offsets = [3, 0], sizes = [24, 28], strides = [1, 1]} : vector<28x28xbf16> to vector<24x28xbf16>
    %cst_39 = arith.constant dense<0.000000e+00> : vector<24x96xf32>
    %42 = tpu.matmul %41, %9, %cst_39 {dimension_numbers = #tpu.dot_dimension_numbers<[1], [0], [0], [1], [0, 0, 1, 1], [], []>} : vector<24x28xbf16>, vector<28x96xbf16>, vector<24x96xf32> -> vector<24x96xf32>
    %43 = arith.addf %38, %42 : vector<24x96xf32>
    %cst_40 = arith.constant dense<0.000000e+00> : vector<24x96xf32>
    %44 = tpu.matmul %41, %19, %cst_40 {dimension_numbers = #tpu.dot_dimension_numbers<[1], [0], [0], [1], [0, 0, 1, 1], [], []>} : vector<24x28xbf16>, vector<28x96xbf16>, vector<24x96xf32> -> vector<24x96xf32>
    %45 = arith.addf %40, %44 : vector<24x96xf32>
    %46 = vector.extract_strided_slice %23 {offsets = [4, 0], sizes = [24, 28], strides = [1, 1]} : vector<28x28xbf16> to vector<24x28xbf16>
    %cst_41 = arith.constant dense<0.000000e+00> : vector<24x96xf32>
    %47 = tpu.matmul %46, %11, %cst_41 {dimension_numbers = #tpu.dot_dimension_numbers<[1], [0], [0], [1], [0, 0, 1, 1], [], []>} : vector<24x28xbf16>, vector<28x96xbf16>, vector<24x96xf32> -> vector<24x96xf32>
    %48 = arith.addf %43, %47 : vector<24x96xf32>
    %cst_42 = arith.constant dense<0.000000e+00> : vector<24x96xf32>
    %49 = tpu.matmul %46, %21, %cst_42 {dimension_numbers = #tpu.dot_dimension_numbers<[1], [0], [0], [1], [0, 0, 1, 1], [], []>} : vector<24x28xbf16>, vector<28x96xbf16>, vector<24x96xf32> -> vector<24x96xf32>
    %50 = arith.addf %45, %49 : vector<24x96xf32>
    %51 = vector.broadcast %0 : vector<1x96xf32> to vector<24x96xf32>
    %52 = arith.addf %48, %51 : vector<24x96xf32>
    %cst_43 = arith.constant 0.000000e+00 : f32
    %53 = vector.broadcast %cst_43 : f32 to vector<24x96xf32>
    %54 = arith.maximumf %52, %53 : vector<24x96xf32>
    %55 = vector.broadcast %0 : vector<1x96xf32> to vector<24x96xf32>
    %56 = arith.addf %50, %55 : vector<24x96xf32>
    %cst_44 = arith.constant 0.000000e+00 : f32
    %57 = vector.broadcast %cst_44 : f32 to vector<24x96xf32>
    %58 = arith.maximumf %56, %57 : vector<24x96xf32>
    %59 = arith.maximumf %54, %58 : vector<24x96xf32>
    %60 = vector.extract_strided_slice %59 {offsets = [0, 0], sizes = [23, 96], strides = [1, 1]} : vector<24x96xf32> to vector<23x96xf32>
    %61 = vector.extract_strided_slice %59 {offsets = [1, 0], sizes = [23, 96], strides = [1, 1]} : vector<24x96xf32> to vector<23x96xf32>
    %62 = arith.maximumf %60, %61 : vector<23x96xf32>
    %63 = arith.truncf %62 : vector<23x96xf32> to vector<23x96xbf16>
    %cst_45 = arith.constant dense<0.000000e+00> : vector<12x96xf32>
    %64 = tpu.matmul %1, %63, %cst_45 {dimension_numbers = #tpu.dot_dimension_numbers<[1], [0], [0], [1], [0, 0, 1, 1], [], []>} : vector<12x23xbf16>, vector<23x96xbf16>, vector<12x96xf32> -> vector<12x96xf32>
    %65 = arith.truncf %64 : vector<12x96xf32> to vector<12x96xbf16>
    %c0_46 = arith.constant 0 : index
    %c0_47 = arith.constant 0 : index
    %c0_48 = arith.constant 0 : index
    %66 = vector.load %arg6[%c0_46, %c0_47, %c0_48] : memref<2x12x96xbf16, #tpu.memory_space<vmem>>, vector<1x12x96xbf16>
    %67 = vector.shape_cast %66 : vector<1x12x96xbf16> to vector<12x96xbf16>
    %68 = vector.shape_cast %65 : vector<12x96xbf16> to vector<1x12x96xbf16>
    tpu.vector_store %arg6[%c0_46, %c0_47, %c0_48], %68 {strides = array<i32>} : memref<2x12x96xbf16, #tpu.memory_space<vmem>>, vector<1x12x96xbf16>,
    %c1_49 = arith.constant 1 : index
    %c0_50 = arith.constant 0 : index
    %c0_51 = arith.constant 0 : index
    %69 = vector.load %arg1[%c1_49, %c0_50, %c0_51] : memref<2x28x28xbf16, #tpu.memory_space<vmem>>, vector<1x28x28xbf16>
    %70 = vector.shape_cast %69 : vector<1x28x28xbf16> to vector<28x28xbf16>
    %cst_52 = arith.constant 0.000000e+00 : f32
    %71 = vector.broadcast %cst_52 : f32 to vector<24x96xf32>
    %cst_53 = arith.constant 0.000000e+00 : f32
    %72 = vector.broadcast %cst_53 : f32 to vector<24x96xf32>
    %73 = vector.extract_strided_slice %70 {offsets = [0, 0], sizes = [24, 28], strides = [1, 1]} : vector<28x28xbf16> to vector<24x28xbf16>
    %cst_54 = arith.constant dense<0.000000e+00> : vector<24x96xf32>
    %74 = tpu.matmul %73, %3, %cst_54 {dimension_numbers = #tpu.dot_dimension_numbers<[1], [0], [0], [1], [0, 0, 1, 1], [], []>} : vector<24x28xbf16>, vector<28x96xbf16>, vector<24x96xf32> -> vector<24x96xf32>
    %75 = arith.addf %71, %74 : vector<24x96xf32>
    %cst_55 = arith.constant dense<0.000000e+00> : vector<24x96xf32>
    %76 = tpu.matmul %73, %13, %cst_55 {dimension_numbers = #tpu.dot_dimension_numbers<[1], [0], [0], [1], [0, 0, 1, 1], [], []>} : vector<24x28xbf16>, vector<28x96xbf16>, vector<24x96xf32> -> vector<24x96xf32>
    %77 = arith.addf %72, %76 : vector<24x96xf32>
    %78 = vector.extract_strided_slice %70 {offsets = [1, 0], sizes = [24, 28], strides = [1, 1]} : vector<28x28xbf16> to vector<24x28xbf16>
    %cst_56 = arith.constant dense<0.000000e+00> : vector<24x96xf32>
    %79 = tpu.matmul %78, %5, %cst_56 {dimension_numbers = #tpu.dot_dimension_numbers<[1], [0], [0], [1], [0, 0, 1, 1], [], []>} : vector<24x28xbf16>, vector<28x96xbf16>, vector<24x96xf32> -> vector<24x96xf32>
    %80 = arith.addf %75, %79 : vector<24x96xf32>
    %cst_57 = arith.constant dense<0.000000e+00> : vector<24x96xf32>
    %81 = tpu.matmul %78, %15, %cst_57 {dimension_numbers = #tpu.dot_dimension_numbers<[1], [0], [0], [1], [0, 0, 1, 1], [], []>} : vector<24x28xbf16>, vector<28x96xbf16>, vector<24x96xf32> -> vector<24x96xf32>
    %82 = arith.addf %77, %81 : vector<24x96xf32>
    %83 = vector.extract_strided_slice %70 {offsets = [2, 0], sizes = [24, 28], strides = [1, 1]} : vector<28x28xbf16> to vector<24x28xbf16>
    %cst_58 = arith.constant dense<0.000000e+00> : vector<24x96xf32>
    %84 = tpu.matmul %83, %7, %cst_58 {dimension_numbers = #tpu.dot_dimension_numbers<[1], [0], [0], [1], [0, 0, 1, 1], [], []>} : vector<24x28xbf16>, vector<28x96xbf16>, vector<24x96xf32> -> vector<24x96xf32>
    %85 = arith.addf %80, %84 : vector<24x96xf32>
    %cst_59 = arith.constant dense<0.000000e+00> : vector<24x96xf32>
    %86 = tpu.matmul %83, %17, %cst_59 {dimension_numbers = #tpu.dot_dimension_numbers<[1], [0], [0], [1], [0, 0, 1, 1], [], []>} : vector<24x28xbf16>, vector<28x96xbf16>, vector<24x96xf32> -> vector<24x96xf32>
    %87 = arith.addf %82, %86 : vector<24x96xf32>
    %88 = vector.extract_strided_slice %70 {offsets = [3, 0], sizes = [24, 28], strides = [1, 1]} : vector<28x28xbf16> to vector<24x28xbf16>
    %cst_60 = arith.constant dense<0.000000e+00> : vector<24x96xf32>
    %89 = tpu.matmul %88, %9, %cst_60 {dimension_numbers = #tpu.dot_dimension_numbers<[1], [0], [0], [1], [0, 0, 1, 1], [], []>} : vector<24x28xbf16>, vector<28x96xbf16>, vector<24x96xf32> -> vector<24x96xf32>
    %90 = arith.addf %85, %89 : vector<24x96xf32>
    %cst_61 = arith.constant dense<0.000000e+00> : vector<24x96xf32>
    %91 = tpu.matmul %88, %19, %cst_61 {dimension_numbers = #tpu.dot_dimension_numbers<[1], [0], [0], [1], [0, 0, 1, 1], [], []>} : vector<24x28xbf16>, vector<28x96xbf16>, vector<24x96xf32> -> vector<24x96xf32>
    %92 = arith.addf %87, %91 : vector<24x96xf32>
    %93 = vector.extract_strided_slice %70 {offsets = [4, 0], sizes = [24, 28], strides = [1, 1]} : vector<28x28xbf16> to vector<24x28xbf16>
    %cst_62 = arith.constant dense<0.000000e+00> : vector<24x96xf32>
    %94 = tpu.matmul %93, %11, %cst_62 {dimension_numbers = #tpu.dot_dimension_numbers<[1], [0], [0], [1], [0, 0, 1, 1], [], []>} : vector<24x28xbf16>, vector<28x96xbf16>, vector<24x96xf32> -> vector<24x96xf32>
    %95 = arith.addf %90, %94 : vector<24x96xf32>
    %cst_63 = arith.constant dense<0.000000e+00> : vector<24x96xf32>
    %96 = tpu.matmul %93, %21, %cst_63 {dimension_numbers = #tpu.dot_dimension_numbers<[1], [0], [0], [1], [0, 0, 1, 1], [], []>} : vector<24x28xbf16>, vector<28x96xbf16>, vector<24x96xf32> -> vector<24x96xf32>
    %97 = arith.addf %92, %96 : vector<24x96xf32>
    %98 = vector.broadcast %0 : vector<1x96xf32> to vector<24x96xf32>
    %99 = arith.addf %95, %98 : vector<24x96xf32>
    %cst_64 = arith.constant 0.000000e+00 : f32
    %100 = vector.broadcast %cst_64 : f32 to vector<24x96xf32>
    %101 = arith.maximumf %99, %100 : vector<24x96xf32>
    %102 = vector.broadcast %0 : vector<1x96xf32> to vector<24x96xf32>
    %103 = arith.addf %97, %102 : vector<24x96xf32>
    %cst_65 = arith.constant 0.000000e+00 : f32
    %104 = vector.broadcast %cst_65 : f32 to vector<24x96xf32>
    %105 = arith.maximumf %103, %104 : vector<24x96xf32>
    %106 = arith.maximumf %101, %105 : vector<24x96xf32>
    %107 = vector.extract_strided_slice %106 {offsets = [0, 0], sizes = [23, 96], strides = [1, 1]} : vector<24x96xf32> to vector<23x96xf32>
    %108 = vector.extract_strided_slice %106 {offsets = [1, 0], sizes = [23, 96], strides = [1, 1]} : vector<24x96xf32> to vector<23x96xf32>
    %109 = arith.maximumf %107, %108 : vector<23x96xf32>
    %110 = arith.truncf %109 : vector<23x96xf32> to vector<23x96xbf16>
    %cst_66 = arith.constant dense<0.000000e+00> : vector<12x96xf32>
    %111 = tpu.matmul %1, %110, %cst_66 {dimension_numbers = #tpu.dot_dimension_numbers<[1], [0], [0], [1], [0, 0, 1, 1], [], []>} : vector<12x23xbf16>, vector<23x96xbf16>, vector<12x96xf32> -> vector<12x96xf32>
    %112 = arith.truncf %111 : vector<12x96xf32> to vector<12x96xbf16>
    %c1_67 = arith.constant 1 : index
    %c0_68 = arith.constant 0 : index
    %c0_69 = arith.constant 0 : index
    %113 = vector.load %arg6[%c1_67, %c0_68, %c0_69] : memref<2x12x96xbf16, #tpu.memory_space<vmem>>, vector<1x12x96xbf16>
    %114 = vector.shape_cast %113 : vector<1x12x96xbf16> to vector<12x96xbf16>
    %115 = vector.shape_cast %112 : vector<12x96xbf16> to vector<1x12x96xbf16>
    tpu.vector_store %arg6[%c1_67, %c0_68, %c0_69], %115 {strides = array<i32>} : memref<2x12x96xbf16, #tpu.memory_space<vmem>>, vector<1x12x96xbf16>,
    return
  }
  func.func @transform_0(%arg0: i32) -> (i32, i32, i32) {
    %c0_i32 = arith.constant 0 : i32
    %c0_i32_0 = arith.constant 0 : i32
    %c0_i32_1 = arith.constant 0 : i32
    return %arg0, %c0_i32, %c0_i32_0 : i32, i32, i32
  }
  func.func @transform_1(%arg0: i32) -> (i32, i32, i32) {
    %c0_i32 = arith.constant 0 : i32
    %c0_i32_0 = arith.constant 0 : i32
    %c0_i32_1 = arith.constant 0 : i32
    %c0_i32_2 = arith.constant 0 : i32
    return %c0_i32, %c0_i32_0, %c0_i32_1 : i32, i32, i32
  }
  func.func @transform_2(%arg0: i32) -> (i32, i32, i32) {
    %c0_i32 = arith.constant 0 : i32
    %c0_i32_0 = arith.constant 0 : i32
    %c0_i32_1 = arith.constant 0 : i32
    %c0_i32_2 = arith.constant 0 : i32
    return %c0_i32, %c0_i32_0, %c0_i32_1 : i32, i32, i32
  }
  func.func @transform_3(%arg0: i32) -> (i32, i32) {
    %c0_i32 = arith.constant 0 : i32
    %c0_i32_0 = arith.constant 0 : i32
    %c0_i32_1 = arith.constant 0 : i32
    return %c0_i32, %c0_i32_0 : i32, i32
  }
  func.func @transform_4(%arg0: i32) -> (i32, i32) {
    %c0_i32 = arith.constant 0 : i32
    %c0_i32_0 = arith.constant 0 : i32
    %c0_i32_1 = arith.constant 0 : i32
    return %c0_i32, %c0_i32_0 : i32, i32
  }
  func.func @transform_5(%arg0: i32) -> (i32, i32, i32) {
    %c0_i32 = arith.constant 0 : i32
    %c0_i32_0 = arith.constant 0 : i32
    %c0_i32_1 = arith.constant 0 : i32
    return %arg0, %c0_i32, %c0_i32_0 : i32, i32, i32
  }
}

module attributes {stable_mosaic.version = 11 : i64} {
  func.func @_conv_relu_pool_kernel(%arg0: i32, %arg1: memref<2x12x96xbf16, #tpu.memory_space<vmem>>, %arg2: memref<5x96x64xbf16, #tpu.memory_space<vmem>>, %arg3: memref<5x96x64xbf16, #tpu.memory_space<vmem>>, %arg4: memref<1x64xf32, #tpu.memory_space<vmem>>, %arg5: memref<4x7xbf16, #tpu.memory_space<vmem>>, %arg6: memref<2x4x64xbf16, #tpu.memory_space<vmem>>) attributes {dimension_semantics = [#tpu.dimension_semantics<parallel>], iteration_bounds = array<i64: 1>, scalar_prefetch = 0 : i64, scratch_operands = 0 : i64, tpu.core_type = #tpu.core_type<tc>, window_params = [{transform_indices = @transform_0, window_bounds = array<i64: 2, 12, 96>}, {pipeline_mode = #tpu.pipeline_mode<synchronous>, transform_indices = @transform_1, window_bounds = array<i64: 5, 96, 64>}, {pipeline_mode = #tpu.pipeline_mode<synchronous>, transform_indices = @transform_2, window_bounds = array<i64: 5, 96, 64>}, {pipeline_mode = #tpu.pipeline_mode<synchronous>, transform_indices = @transform_3, window_bounds = array<i64: 1, 64>}, {pipeline_mode = #tpu.pipeline_mode<synchronous>, transform_indices = @transform_4, window_bounds = array<i64: 4, 7>}, {transform_indices = @transform_5, window_bounds = array<i64: 2, 4, 64>}]} {
    %c0 = arith.constant 0 : index
    %c0_0 = arith.constant 0 : index
    %0 = vector.load %arg4[%c0, %c0_0] : memref<1x64xf32, #tpu.memory_space<vmem>>, vector<1x64xf32>
    %c0_1 = arith.constant 0 : index
    %c0_2 = arith.constant 0 : index
    %1 = vector.load %arg5[%c0_1, %c0_2] : memref<4x7xbf16, #tpu.memory_space<vmem>>, vector<4x7xbf16>
    %c0_3 = arith.constant 0 : index
    %c0_4 = arith.constant 0 : index
    %c0_5 = arith.constant 0 : index
    %2 = vector.load %arg2[%c0_3, %c0_4, %c0_5] : memref<5x96x64xbf16, #tpu.memory_space<vmem>>, vector<1x96x64xbf16>
    %3 = vector.shape_cast %2 : vector<1x96x64xbf16> to vector<96x64xbf16>
    %c1 = arith.constant 1 : index
    %c0_6 = arith.constant 0 : index
    %c0_7 = arith.constant 0 : index
    %4 = vector.load %arg2[%c1, %c0_6, %c0_7] : memref<5x96x64xbf16, #tpu.memory_space<vmem>>, vector<1x96x64xbf16>
    %5 = vector.shape_cast %4 : vector<1x96x64xbf16> to vector<96x64xbf16>
    %c2 = arith.constant 2 : index
    %c0_8 = arith.constant 0 : index
    %c0_9 = arith.constant 0 : index
    %6 = vector.load %arg2[%c2, %c0_8, %c0_9] : memref<5x96x64xbf16, #tpu.memory_space<vmem>>, vector<1x96x64xbf16>
    %7 = vector.shape_cast %6 : vector<1x96x64xbf16> to vector<96x64xbf16>
    %c3 = arith.constant 3 : index
    %c0_10 = arith.constant 0 : index
    %c0_11 = arith.constant 0 : index
    %8 = vector.load %arg2[%c3, %c0_10, %c0_11] : memref<5x96x64xbf16, #tpu.memory_space<vmem>>, vector<1x96x64xbf16>
    %9 = vector.shape_cast %8 : vector<1x96x64xbf16> to vector<96x64xbf16>
    %c4 = arith.constant 4 : index
    %c0_12 = arith.constant 0 : index
    %c0_13 = arith.constant 0 : index
    %10 = vector.load %arg2[%c4, %c0_12, %c0_13] : memref<5x96x64xbf16, #tpu.memory_space<vmem>>, vector<1x96x64xbf16>
    %11 = vector.shape_cast %10 : vector<1x96x64xbf16> to vector<96x64xbf16>
    %c0_14 = arith.constant 0 : index
    %c0_15 = arith.constant 0 : index
    %c0_16 = arith.constant 0 : index
    %12 = vector.load %arg3[%c0_14, %c0_15, %c0_16] : memref<5x96x64xbf16, #tpu.memory_space<vmem>>, vector<1x96x64xbf16>
    %13 = vector.shape_cast %12 : vector<1x96x64xbf16> to vector<96x64xbf16>
    %c1_17 = arith.constant 1 : index
    %c0_18 = arith.constant 0 : index
    %c0_19 = arith.constant 0 : index
    %14 = vector.load %arg3[%c1_17, %c0_18, %c0_19] : memref<5x96x64xbf16, #tpu.memory_space<vmem>>, vector<1x96x64xbf16>
    %15 = vector.shape_cast %14 : vector<1x96x64xbf16> to vector<96x64xbf16>
    %c2_20 = arith.constant 2 : index
    %c0_21 = arith.constant 0 : index
    %c0_22 = arith.constant 0 : index
    %16 = vector.load %arg3[%c2_20, %c0_21, %c0_22] : memref<5x96x64xbf16, #tpu.memory_space<vmem>>, vector<1x96x64xbf16>
    %17 = vector.shape_cast %16 : vector<1x96x64xbf16> to vector<96x64xbf16>
    %c3_23 = arith.constant 3 : index
    %c0_24 = arith.constant 0 : index
    %c0_25 = arith.constant 0 : index
    %18 = vector.load %arg3[%c3_23, %c0_24, %c0_25] : memref<5x96x64xbf16, #tpu.memory_space<vmem>>, vector<1x96x64xbf16>
    %19 = vector.shape_cast %18 : vector<1x96x64xbf16> to vector<96x64xbf16>
    %c4_26 = arith.constant 4 : index
    %c0_27 = arith.constant 0 : index
    %c0_28 = arith.constant 0 : index
    %20 = vector.load %arg3[%c4_26, %c0_27, %c0_28] : memref<5x96x64xbf16, #tpu.memory_space<vmem>>, vector<1x96x64xbf16>
    %21 = vector.shape_cast %20 : vector<1x96x64xbf16> to vector<96x64xbf16>
    %c0_29 = arith.constant 0 : index
    %c0_30 = arith.constant 0 : index
    %c0_31 = arith.constant 0 : index
    %22 = vector.load %arg1[%c0_29, %c0_30, %c0_31] : memref<2x12x96xbf16, #tpu.memory_space<vmem>>, vector<1x12x96xbf16>
    %23 = vector.shape_cast %22 : vector<1x12x96xbf16> to vector<12x96xbf16>
    %cst = arith.constant 0.000000e+00 : f32
    %24 = vector.broadcast %cst : f32 to vector<8x64xf32>
    %cst_32 = arith.constant 0.000000e+00 : f32
    %25 = vector.broadcast %cst_32 : f32 to vector<8x64xf32>
    %26 = vector.extract_strided_slice %23 {offsets = [0, 0], sizes = [8, 96], strides = [1, 1]} : vector<12x96xbf16> to vector<8x96xbf16>
    %cst_33 = arith.constant dense<0.000000e+00> : vector<8x64xf32>
    %27 = tpu.matmul %26, %3, %cst_33 {dimension_numbers = #tpu.dot_dimension_numbers<[1], [0], [0], [1], [0, 0, 1, 1], [], []>} : vector<8x96xbf16>, vector<96x64xbf16>, vector<8x64xf32> -> vector<8x64xf32>
    %28 = arith.addf %24, %27 : vector<8x64xf32>
    %cst_34 = arith.constant dense<0.000000e+00> : vector<8x64xf32>
    %29 = tpu.matmul %26, %13, %cst_34 {dimension_numbers = #tpu.dot_dimension_numbers<[1], [0], [0], [1], [0, 0, 1, 1], [], []>} : vector<8x96xbf16>, vector<96x64xbf16>, vector<8x64xf32> -> vector<8x64xf32>
    %30 = arith.addf %25, %29 : vector<8x64xf32>
    %31 = vector.extract_strided_slice %23 {offsets = [1, 0], sizes = [8, 96], strides = [1, 1]} : vector<12x96xbf16> to vector<8x96xbf16>
    %cst_35 = arith.constant dense<0.000000e+00> : vector<8x64xf32>
    %32 = tpu.matmul %31, %5, %cst_35 {dimension_numbers = #tpu.dot_dimension_numbers<[1], [0], [0], [1], [0, 0, 1, 1], [], []>} : vector<8x96xbf16>, vector<96x64xbf16>, vector<8x64xf32> -> vector<8x64xf32>
    %33 = arith.addf %28, %32 : vector<8x64xf32>
    %cst_36 = arith.constant dense<0.000000e+00> : vector<8x64xf32>
    %34 = tpu.matmul %31, %15, %cst_36 {dimension_numbers = #tpu.dot_dimension_numbers<[1], [0], [0], [1], [0, 0, 1, 1], [], []>} : vector<8x96xbf16>, vector<96x64xbf16>, vector<8x64xf32> -> vector<8x64xf32>
    %35 = arith.addf %30, %34 : vector<8x64xf32>
    %36 = vector.extract_strided_slice %23 {offsets = [2, 0], sizes = [8, 96], strides = [1, 1]} : vector<12x96xbf16> to vector<8x96xbf16>
    %cst_37 = arith.constant dense<0.000000e+00> : vector<8x64xf32>
    %37 = tpu.matmul %36, %7, %cst_37 {dimension_numbers = #tpu.dot_dimension_numbers<[1], [0], [0], [1], [0, 0, 1, 1], [], []>} : vector<8x96xbf16>, vector<96x64xbf16>, vector<8x64xf32> -> vector<8x64xf32>
    %38 = arith.addf %33, %37 : vector<8x64xf32>
    %cst_38 = arith.constant dense<0.000000e+00> : vector<8x64xf32>
    %39 = tpu.matmul %36, %17, %cst_38 {dimension_numbers = #tpu.dot_dimension_numbers<[1], [0], [0], [1], [0, 0, 1, 1], [], []>} : vector<8x96xbf16>, vector<96x64xbf16>, vector<8x64xf32> -> vector<8x64xf32>
    %40 = arith.addf %35, %39 : vector<8x64xf32>
    %41 = vector.extract_strided_slice %23 {offsets = [3, 0], sizes = [8, 96], strides = [1, 1]} : vector<12x96xbf16> to vector<8x96xbf16>
    %cst_39 = arith.constant dense<0.000000e+00> : vector<8x64xf32>
    %42 = tpu.matmul %41, %9, %cst_39 {dimension_numbers = #tpu.dot_dimension_numbers<[1], [0], [0], [1], [0, 0, 1, 1], [], []>} : vector<8x96xbf16>, vector<96x64xbf16>, vector<8x64xf32> -> vector<8x64xf32>
    %43 = arith.addf %38, %42 : vector<8x64xf32>
    %cst_40 = arith.constant dense<0.000000e+00> : vector<8x64xf32>
    %44 = tpu.matmul %41, %19, %cst_40 {dimension_numbers = #tpu.dot_dimension_numbers<[1], [0], [0], [1], [0, 0, 1, 1], [], []>} : vector<8x96xbf16>, vector<96x64xbf16>, vector<8x64xf32> -> vector<8x64xf32>
    %45 = arith.addf %40, %44 : vector<8x64xf32>
    %46 = vector.extract_strided_slice %23 {offsets = [4, 0], sizes = [8, 96], strides = [1, 1]} : vector<12x96xbf16> to vector<8x96xbf16>
    %cst_41 = arith.constant dense<0.000000e+00> : vector<8x64xf32>
    %47 = tpu.matmul %46, %11, %cst_41 {dimension_numbers = #tpu.dot_dimension_numbers<[1], [0], [0], [1], [0, 0, 1, 1], [], []>} : vector<8x96xbf16>, vector<96x64xbf16>, vector<8x64xf32> -> vector<8x64xf32>
    %48 = arith.addf %43, %47 : vector<8x64xf32>
    %cst_42 = arith.constant dense<0.000000e+00> : vector<8x64xf32>
    %49 = tpu.matmul %46, %21, %cst_42 {dimension_numbers = #tpu.dot_dimension_numbers<[1], [0], [0], [1], [0, 0, 1, 1], [], []>} : vector<8x96xbf16>, vector<96x64xbf16>, vector<8x64xf32> -> vector<8x64xf32>
    %50 = arith.addf %45, %49 : vector<8x64xf32>
    %51 = vector.broadcast %0 : vector<1x64xf32> to vector<8x64xf32>
    %52 = arith.addf %48, %51 : vector<8x64xf32>
    %cst_43 = arith.constant 0.000000e+00 : f32
    %53 = vector.broadcast %cst_43 : f32 to vector<8x64xf32>
    %54 = arith.maximumf %52, %53 : vector<8x64xf32>
    %55 = vector.broadcast %0 : vector<1x64xf32> to vector<8x64xf32>
    %56 = arith.addf %50, %55 : vector<8x64xf32>
    %cst_44 = arith.constant 0.000000e+00 : f32
    %57 = vector.broadcast %cst_44 : f32 to vector<8x64xf32>
    %58 = arith.maximumf %56, %57 : vector<8x64xf32>
    %59 = arith.maximumf %54, %58 : vector<8x64xf32>
    %60 = vector.extract_strided_slice %59 {offsets = [0, 0], sizes = [7, 64], strides = [1, 1]} : vector<8x64xf32> to vector<7x64xf32>
    %61 = vector.extract_strided_slice %59 {offsets = [1, 0], sizes = [7, 64], strides = [1, 1]} : vector<8x64xf32> to vector<7x64xf32>
    %62 = arith.maximumf %60, %61 : vector<7x64xf32>
    %63 = arith.truncf %62 : vector<7x64xf32> to vector<7x64xbf16>
    %cst_45 = arith.constant dense<0.000000e+00> : vector<4x64xf32>
    %64 = tpu.matmul %1, %63, %cst_45 {dimension_numbers = #tpu.dot_dimension_numbers<[1], [0], [0], [1], [0, 0, 1, 1], [], []>} : vector<4x7xbf16>, vector<7x64xbf16>, vector<4x64xf32> -> vector<4x64xf32>
    %65 = arith.truncf %64 : vector<4x64xf32> to vector<4x64xbf16>
    %c0_46 = arith.constant 0 : index
    %c0_47 = arith.constant 0 : index
    %c0_48 = arith.constant 0 : index
    %66 = vector.load %arg6[%c0_46, %c0_47, %c0_48] : memref<2x4x64xbf16, #tpu.memory_space<vmem>>, vector<1x4x64xbf16>
    %67 = vector.shape_cast %66 : vector<1x4x64xbf16> to vector<4x64xbf16>
    %68 = vector.shape_cast %65 : vector<4x64xbf16> to vector<1x4x64xbf16>
    tpu.vector_store %arg6[%c0_46, %c0_47, %c0_48], %68 {strides = array<i32>} : memref<2x4x64xbf16, #tpu.memory_space<vmem>>, vector<1x4x64xbf16>,
    %c1_49 = arith.constant 1 : index
    %c0_50 = arith.constant 0 : index
    %c0_51 = arith.constant 0 : index
    %69 = vector.load %arg1[%c1_49, %c0_50, %c0_51] : memref<2x12x96xbf16, #tpu.memory_space<vmem>>, vector<1x12x96xbf16>
    %70 = vector.shape_cast %69 : vector<1x12x96xbf16> to vector<12x96xbf16>
    %cst_52 = arith.constant 0.000000e+00 : f32
    %71 = vector.broadcast %cst_52 : f32 to vector<8x64xf32>
    %cst_53 = arith.constant 0.000000e+00 : f32
    %72 = vector.broadcast %cst_53 : f32 to vector<8x64xf32>
    %73 = vector.extract_strided_slice %70 {offsets = [0, 0], sizes = [8, 96], strides = [1, 1]} : vector<12x96xbf16> to vector<8x96xbf16>
    %cst_54 = arith.constant dense<0.000000e+00> : vector<8x64xf32>
    %74 = tpu.matmul %73, %3, %cst_54 {dimension_numbers = #tpu.dot_dimension_numbers<[1], [0], [0], [1], [0, 0, 1, 1], [], []>} : vector<8x96xbf16>, vector<96x64xbf16>, vector<8x64xf32> -> vector<8x64xf32>
    %75 = arith.addf %71, %74 : vector<8x64xf32>
    %cst_55 = arith.constant dense<0.000000e+00> : vector<8x64xf32>
    %76 = tpu.matmul %73, %13, %cst_55 {dimension_numbers = #tpu.dot_dimension_numbers<[1], [0], [0], [1], [0, 0, 1, 1], [], []>} : vector<8x96xbf16>, vector<96x64xbf16>, vector<8x64xf32> -> vector<8x64xf32>
    %77 = arith.addf %72, %76 : vector<8x64xf32>
    %78 = vector.extract_strided_slice %70 {offsets = [1, 0], sizes = [8, 96], strides = [1, 1]} : vector<12x96xbf16> to vector<8x96xbf16>
    %cst_56 = arith.constant dense<0.000000e+00> : vector<8x64xf32>
    %79 = tpu.matmul %78, %5, %cst_56 {dimension_numbers = #tpu.dot_dimension_numbers<[1], [0], [0], [1], [0, 0, 1, 1], [], []>} : vector<8x96xbf16>, vector<96x64xbf16>, vector<8x64xf32> -> vector<8x64xf32>
    %80 = arith.addf %75, %79 : vector<8x64xf32>
    %cst_57 = arith.constant dense<0.000000e+00> : vector<8x64xf32>
    %81 = tpu.matmul %78, %15, %cst_57 {dimension_numbers = #tpu.dot_dimension_numbers<[1], [0], [0], [1], [0, 0, 1, 1], [], []>} : vector<8x96xbf16>, vector<96x64xbf16>, vector<8x64xf32> -> vector<8x64xf32>
    %82 = arith.addf %77, %81 : vector<8x64xf32>
    %83 = vector.extract_strided_slice %70 {offsets = [2, 0], sizes = [8, 96], strides = [1, 1]} : vector<12x96xbf16> to vector<8x96xbf16>
    %cst_58 = arith.constant dense<0.000000e+00> : vector<8x64xf32>
    %84 = tpu.matmul %83, %7, %cst_58 {dimension_numbers = #tpu.dot_dimension_numbers<[1], [0], [0], [1], [0, 0, 1, 1], [], []>} : vector<8x96xbf16>, vector<96x64xbf16>, vector<8x64xf32> -> vector<8x64xf32>
    %85 = arith.addf %80, %84 : vector<8x64xf32>
    %cst_59 = arith.constant dense<0.000000e+00> : vector<8x64xf32>
    %86 = tpu.matmul %83, %17, %cst_59 {dimension_numbers = #tpu.dot_dimension_numbers<[1], [0], [0], [1], [0, 0, 1, 1], [], []>} : vector<8x96xbf16>, vector<96x64xbf16>, vector<8x64xf32> -> vector<8x64xf32>
    %87 = arith.addf %82, %86 : vector<8x64xf32>
    %88 = vector.extract_strided_slice %70 {offsets = [3, 0], sizes = [8, 96], strides = [1, 1]} : vector<12x96xbf16> to vector<8x96xbf16>
    %cst_60 = arith.constant dense<0.000000e+00> : vector<8x64xf32>
    %89 = tpu.matmul %88, %9, %cst_60 {dimension_numbers = #tpu.dot_dimension_numbers<[1], [0], [0], [1], [0, 0, 1, 1], [], []>} : vector<8x96xbf16>, vector<96x64xbf16>, vector<8x64xf32> -> vector<8x64xf32>
    %90 = arith.addf %85, %89 : vector<8x64xf32>
    %cst_61 = arith.constant dense<0.000000e+00> : vector<8x64xf32>
    %91 = tpu.matmul %88, %19, %cst_61 {dimension_numbers = #tpu.dot_dimension_numbers<[1], [0], [0], [1], [0, 0, 1, 1], [], []>} : vector<8x96xbf16>, vector<96x64xbf16>, vector<8x64xf32> -> vector<8x64xf32>
    %92 = arith.addf %87, %91 : vector<8x64xf32>
    %93 = vector.extract_strided_slice %70 {offsets = [4, 0], sizes = [8, 96], strides = [1, 1]} : vector<12x96xbf16> to vector<8x96xbf16>
    %cst_62 = arith.constant dense<0.000000e+00> : vector<8x64xf32>
    %94 = tpu.matmul %93, %11, %cst_62 {dimension_numbers = #tpu.dot_dimension_numbers<[1], [0], [0], [1], [0, 0, 1, 1], [], []>} : vector<8x96xbf16>, vector<96x64xbf16>, vector<8x64xf32> -> vector<8x64xf32>
    %95 = arith.addf %90, %94 : vector<8x64xf32>
    %cst_63 = arith.constant dense<0.000000e+00> : vector<8x64xf32>
    %96 = tpu.matmul %93, %21, %cst_63 {dimension_numbers = #tpu.dot_dimension_numbers<[1], [0], [0], [1], [0, 0, 1, 1], [], []>} : vector<8x96xbf16>, vector<96x64xbf16>, vector<8x64xf32> -> vector<8x64xf32>
    %97 = arith.addf %92, %96 : vector<8x64xf32>
    %98 = vector.broadcast %0 : vector<1x64xf32> to vector<8x64xf32>
    %99 = arith.addf %95, %98 : vector<8x64xf32>
    %cst_64 = arith.constant 0.000000e+00 : f32
    %100 = vector.broadcast %cst_64 : f32 to vector<8x64xf32>
    %101 = arith.maximumf %99, %100 : vector<8x64xf32>
    %102 = vector.broadcast %0 : vector<1x64xf32> to vector<8x64xf32>
    %103 = arith.addf %97, %102 : vector<8x64xf32>
    %cst_65 = arith.constant 0.000000e+00 : f32
    %104 = vector.broadcast %cst_65 : f32 to vector<8x64xf32>
    %105 = arith.maximumf %103, %104 : vector<8x64xf32>
    %106 = arith.maximumf %101, %105 : vector<8x64xf32>
    %107 = vector.extract_strided_slice %106 {offsets = [0, 0], sizes = [7, 64], strides = [1, 1]} : vector<8x64xf32> to vector<7x64xf32>
    %108 = vector.extract_strided_slice %106 {offsets = [1, 0], sizes = [7, 64], strides = [1, 1]} : vector<8x64xf32> to vector<7x64xf32>
    %109 = arith.maximumf %107, %108 : vector<7x64xf32>
    %110 = arith.truncf %109 : vector<7x64xf32> to vector<7x64xbf16>
    %cst_66 = arith.constant dense<0.000000e+00> : vector<4x64xf32>
    %111 = tpu.matmul %1, %110, %cst_66 {dimension_numbers = #tpu.dot_dimension_numbers<[1], [0], [0], [1], [0, 0, 1, 1], [], []>} : vector<4x7xbf16>, vector<7x64xbf16>, vector<4x64xf32> -> vector<4x64xf32>
    %112 = arith.truncf %111 : vector<4x64xf32> to vector<4x64xbf16>
    %c1_67 = arith.constant 1 : index
    %c0_68 = arith.constant 0 : index
    %c0_69 = arith.constant 0 : index
    %113 = vector.load %arg6[%c1_67, %c0_68, %c0_69] : memref<2x4x64xbf16, #tpu.memory_space<vmem>>, vector<1x4x64xbf16>
    %114 = vector.shape_cast %113 : vector<1x4x64xbf16> to vector<4x64xbf16>
    %115 = vector.shape_cast %112 : vector<4x64xbf16> to vector<1x4x64xbf16>
    tpu.vector_store %arg6[%c1_67, %c0_68, %c0_69], %115 {strides = array<i32>} : memref<2x4x64xbf16, #tpu.memory_space<vmem>>, vector<1x4x64xbf16>,
    return
  }
  func.func @transform_0(%arg0: i32) -> (i32, i32, i32) {
    %c0_i32 = arith.constant 0 : i32
    %c0_i32_0 = arith.constant 0 : i32
    %c0_i32_1 = arith.constant 0 : i32
    return %arg0, %c0_i32, %c0_i32_0 : i32, i32, i32
  }
  func.func @transform_1(%arg0: i32) -> (i32, i32, i32) {
    %c0_i32 = arith.constant 0 : i32
    %c0_i32_0 = arith.constant 0 : i32
    %c0_i32_1 = arith.constant 0 : i32
    %c0_i32_2 = arith.constant 0 : i32
    return %c0_i32, %c0_i32_0, %c0_i32_1 : i32, i32, i32
  }
  func.func @transform_2(%arg0: i32) -> (i32, i32, i32) {
    %c0_i32 = arith.constant 0 : i32
    %c0_i32_0 = arith.constant 0 : i32
    %c0_i32_1 = arith.constant 0 : i32
    %c0_i32_2 = arith.constant 0 : i32
    return %c0_i32, %c0_i32_0, %c0_i32_1 : i32, i32, i32
  }
  func.func @transform_3(%arg0: i32) -> (i32, i32) {
    %c0_i32 = arith.constant 0 : i32
    %c0_i32_0 = arith.constant 0 : i32
    %c0_i32_1 = arith.constant 0 : i32
    return %c0_i32, %c0_i32_0 : i32, i32
  }
  func.func @transform_4(%arg0: i32) -> (i32, i32) {
    %c0_i32 = arith.constant 0 : i32
    %c0_i32_0 = arith.constant 0 : i32
    %c0_i32_1 = arith.constant 0 : i32
    return %c0_i32, %c0_i32_0 : i32, i32
  }
  func.func @transform_5(%arg0: i32) -> (i32, i32, i32) {
    %c0_i32 = arith.constant 0 : i32
    %c0_i32_0 = arith.constant 0 : i32
    %c0_i32_1 = arith.constant 0 : i32
    return %arg0, %c0_i32, %c0_i32_0 : i32, i32, i32
  }
}

module attributes {stable_mosaic.version = 11 : i64} {
  func.func @_fc_head_kernel(%arg0: i32, %arg1: memref<2x256xbf16, #tpu.memory_space<vmem>>, %arg2: memref<256x128xbf16, #tpu.memory_space<vmem>>, %arg3: memref<1x128xf32, #tpu.memory_space<vmem>>, %arg4: memref<128x64xbf16, #tpu.memory_space<vmem>>, %arg5: memref<1x64xf32, #tpu.memory_space<vmem>>, %arg6: memref<64x128xbf16, #tpu.memory_space<vmem>>, %arg7: memref<1x128xf32, #tpu.memory_space<vmem>>, %arg8: memref<2x128xf32, #tpu.memory_space<vmem>>) attributes {dimension_semantics = [#tpu.dimension_semantics<parallel>], iteration_bounds = array<i64: 1>, scalar_prefetch = 0 : i64, scratch_operands = 0 : i64, tpu.core_type = #tpu.core_type<tc>, window_params = [{transform_indices = @transform_0, window_bounds = array<i64: 2, 256>}, {pipeline_mode = #tpu.pipeline_mode<synchronous>, transform_indices = @transform_1, window_bounds = array<i64: 256, 128>}, {pipeline_mode = #tpu.pipeline_mode<synchronous>, transform_indices = @transform_2, window_bounds = array<i64: 1, 128>}, {pipeline_mode = #tpu.pipeline_mode<synchronous>, transform_indices = @transform_3, window_bounds = array<i64: 128, 64>}, {pipeline_mode = #tpu.pipeline_mode<synchronous>, transform_indices = @transform_4, window_bounds = array<i64: 1, 64>}, {pipeline_mode = #tpu.pipeline_mode<synchronous>, transform_indices = @transform_5, window_bounds = array<i64: 64, 128>}, {pipeline_mode = #tpu.pipeline_mode<synchronous>, transform_indices = @transform_6, window_bounds = array<i64: 1, 128>}, {transform_indices = @transform_7, window_bounds = array<i64: 2, 128>}]} {
    %c0 = arith.constant 0 : index
    %c0_0 = arith.constant 0 : index
    %0 = vector.load %arg1[%c0, %c0_0] : memref<2x256xbf16, #tpu.memory_space<vmem>>, vector<2x256xbf16>
    %c0_1 = arith.constant 0 : index
    %c0_2 = arith.constant 0 : index
    %1 = vector.load %arg2[%c0_1, %c0_2] : memref<256x128xbf16, #tpu.memory_space<vmem>>, vector<256x128xbf16>
    %cst = arith.constant dense<0.000000e+00> : vector<2x128xf32>
    %2 = tpu.matmul %0, %1, %cst {dimension_numbers = #tpu.dot_dimension_numbers<[1], [0], [0], [1], [0, 0, 1, 1], [], []>} : vector<2x256xbf16>, vector<256x128xbf16>, vector<2x128xf32> -> vector<2x128xf32>
    %c0_3 = arith.constant 0 : index
    %c0_4 = arith.constant 0 : index
    %3 = vector.load %arg3[%c0_3, %c0_4] : memref<1x128xf32, #tpu.memory_space<vmem>>, vector<1x128xf32>
    %4 = vector.broadcast %3 : vector<1x128xf32> to vector<2x128xf32>
    %5 = arith.addf %2, %4 : vector<2x128xf32>
    %cst_5 = arith.constant 0.000000e+00 : f32
    %6 = vector.broadcast %cst_5 : f32 to vector<2x128xf32>
    %7 = arith.maximumf %5, %6 : vector<2x128xf32>
    %8 = arith.truncf %7 : vector<2x128xf32> to vector<2x128xbf16>
    %c0_6 = arith.constant 0 : index
    %c0_7 = arith.constant 0 : index
    %9 = vector.load %arg4[%c0_6, %c0_7] : memref<128x64xbf16, #tpu.memory_space<vmem>>, vector<128x64xbf16>
    %cst_8 = arith.constant dense<0.000000e+00> : vector<2x64xf32>
    %10 = tpu.matmul %8, %9, %cst_8 {dimension_numbers = #tpu.dot_dimension_numbers<[1], [0], [0], [1], [0, 0, 1, 1], [], []>} : vector<2x128xbf16>, vector<128x64xbf16>, vector<2x64xf32> -> vector<2x64xf32>
    %c0_9 = arith.constant 0 : index
    %c0_10 = arith.constant 0 : index
    %11 = vector.load %arg5[%c0_9, %c0_10] : memref<1x64xf32, #tpu.memory_space<vmem>>, vector<1x64xf32>
    %12 = vector.broadcast %11 : vector<1x64xf32> to vector<2x64xf32>
    %13 = arith.addf %10, %12 : vector<2x64xf32>
    %cst_11 = arith.constant 0.000000e+00 : f32
    %14 = vector.broadcast %cst_11 : f32 to vector<2x64xf32>
    %15 = arith.maximumf %13, %14 : vector<2x64xf32>
    %16 = arith.truncf %15 : vector<2x64xf32> to vector<2x64xbf16>
    %c0_12 = arith.constant 0 : index
    %c0_13 = arith.constant 0 : index
    %17 = vector.load %arg6[%c0_12, %c0_13] : memref<64x128xbf16, #tpu.memory_space<vmem>>, vector<64x128xbf16>
    %cst_14 = arith.constant dense<0.000000e+00> : vector<2x128xf32>
    %18 = tpu.matmul %16, %17, %cst_14 {dimension_numbers = #tpu.dot_dimension_numbers<[1], [0], [0], [1], [0, 0, 1, 1], [], []>} : vector<2x64xbf16>, vector<64x128xbf16>, vector<2x128xf32> -> vector<2x128xf32>
    %c0_15 = arith.constant 0 : index
    %c0_16 = arith.constant 0 : index
    %19 = vector.load %arg7[%c0_15, %c0_16] : memref<1x128xf32, #tpu.memory_space<vmem>>, vector<1x128xf32>
    %20 = vector.broadcast %19 : vector<1x128xf32> to vector<2x128xf32>
    %21 = arith.addf %18, %20 : vector<2x128xf32>
    %c0_17 = arith.constant 0 : index
    %c0_18 = arith.constant 0 : index
    %22 = vector.load %arg8[%c0_17, %c0_18] : memref<2x128xf32, #tpu.memory_space<vmem>>, vector<2x128xf32>
    tpu.vector_store %arg8[%c0_17, %c0_18], %21 {strides = array<i32>} : memref<2x128xf32, #tpu.memory_space<vmem>>, vector<2x128xf32>,
    return
  }
  func.func @transform_0(%arg0: i32) -> (i32, i32) {
    %c0_i32 = arith.constant 0 : i32
    %c0_i32_0 = arith.constant 0 : i32
    return %arg0, %c0_i32 : i32, i32
  }
  func.func @transform_1(%arg0: i32) -> (i32, i32) {
    %c0_i32 = arith.constant 0 : i32
    %c0_i32_0 = arith.constant 0 : i32
    %c0_i32_1 = arith.constant 0 : i32
    return %c0_i32, %c0_i32_0 : i32, i32
  }
  func.func @transform_2(%arg0: i32) -> (i32, i32) {
    %c0_i32 = arith.constant 0 : i32
    %c0_i32_0 = arith.constant 0 : i32
    %c0_i32_1 = arith.constant 0 : i32
    return %c0_i32, %c0_i32_0 : i32, i32
  }
  func.func @transform_3(%arg0: i32) -> (i32, i32) {
    %c0_i32 = arith.constant 0 : i32
    %c0_i32_0 = arith.constant 0 : i32
    %c0_i32_1 = arith.constant 0 : i32
    return %c0_i32, %c0_i32_0 : i32, i32
  }
  func.func @transform_4(%arg0: i32) -> (i32, i32) {
    %c0_i32 = arith.constant 0 : i32
    %c0_i32_0 = arith.constant 0 : i32
    %c0_i32_1 = arith.constant 0 : i32
    return %c0_i32, %c0_i32_0 : i32, i32
  }
  func.func @transform_5(%arg0: i32) -> (i32, i32) {
    %c0_i32 = arith.constant 0 : i32
    %c0_i32_0 = arith.constant 0 : i32
    %c0_i32_1 = arith.constant 0 : i32
    return %c0_i32, %c0_i32_0 : i32, i32
  }
  func.func @transform_6(%arg0: i32) -> (i32, i32) {
    %c0_i32 = arith.constant 0 : i32
    %c0_i32_0 = arith.constant 0 : i32
    %c0_i32_1 = arith.constant 0 : i32
    return %c0_i32, %c0_i32_0 : i32, i32
  }
  func.func @transform_7(%arg0: i32) -> (i32, i32) {
    %c0_i32 = arith.constant 0 : i32
    %c0_i32_0 = arith.constant 0 : i32
    return %arg0, %c0_i32 : i32, i32
  }
}

</mosaic_0001>

<llo_original>
// kernel: simple_cnn_forward.5
$region0: #{simple_cnn_forward.5}
  #allocation0 [shape = 'u32[]', space=smem, size = 0x4, offset = 0x4, fixed_abs, tag = 'smem constant byte address 0x4 - core index']
  #allocation1 [shape = 'u32[144,128]{1,0:T(1,128)}', space=vmem, size = 0x12000, scoped, tag = 'internal scratch']
  %s0 = inlined_call_operand.vmem [shape: bf16[2,256], index: 0, kind: input, shape index: {}]
  %s1 = inlined_call_operand.vmem [shape: bf16[256,128], index: 1, kind: input, shape index: {}]
  %s2 = inlined_call_operand.vmem [shape: f32[1,128], index: 2, kind: input, shape index: {}]
  %s3 = inlined_call_operand.vmem [shape: bf16[128,64], index: 3, kind: input, shape index: {}]
  %s4 = inlined_call_operand.vmem [shape: f32[1,64], index: 4, kind: input, shape index: {}]
  %s5 = inlined_call_operand.vmem [shape: bf16[64,128], index: 5, kind: input, shape index: {}]
  %s6 = inlined_call_operand.vmem [shape: f32[1,128], index: 6, kind: input, shape index: {}]
  %s7 = inlined_call_operand.hbm [shape: f32[2,128], index: 7, kind: output, shape index: {}]
  %s8 = sld [smem:[#allocation0]]
  $region38: #{simple_cnn_forward.5} parent=0
    _
  %s10 = ssub.s32 1, %s8
  %s11 = scalar_select 0, %s10, %s8
  $region1: #{simple_cnn_forward.5} parent=0
    #allocation2 [shape = 'u8[1024]{0}', space=vmem, size = 0x400, scoped, tag = 'output window, operand 0, single buffered']
    #allocation3 [shape = 's32[1]{0}', space=sflag, size = 0x4, scoped, tag = 'scoped memory for simple_cnn_forward.5']
    %12 = vsyncpa [#allocation3], 0
    // Predicated region
    $region2: #{simple_cnn_forward.5} parent=1 // pred_check
      _
    $region3: #{simple_cnn_forward.5} parent=1 // pred_check_branch
      %14 = sbr.rel (0) target = $region5
    $region4: #{simple_cnn_forward.5} parent=1 // pred_region
      _
    $region5: #{simple_cnn_forward.5} parent=1 // pred_fallthru
      _
    // Predicated region
    $region6: #{simple_cnn_forward.5} parent=1 // pred_check
      _
    $region7: #{simple_cnn_forward.5} parent=1 // pred_check_branch
      %16 = sbr.rel (0) target = $region9
    $region8: #{simple_cnn_forward.5} parent=1 // pred_region
      _
    $region9: #{simple_cnn_forward.5} parent=1 // pred_fallthru
      _
    // Predicated region
    $region10: #{simple_cnn_forward.5} parent=1 // pred_check
      _
    $region11: #{simple_cnn_forward.5} parent=1 // pred_check_branch
      %18 = sbr.rel (0) target = $region13
    $region12: #{simple_cnn_forward.5} parent=1 // pred_region
      _
    $region13: #{simple_cnn_forward.5} parent=1 // pred_fallthru
      _
    // Predicated region
    $region14: #{simple_cnn_forward.5} parent=1 // pred_check
      _
    $region15: #{simple_cnn_forward.5} parent=1 // pred_check_branch
      %20 = sbr.rel (0) target = $region17
    $region16: #{simple_cnn_forward.5} parent=1 // pred_region
      _
    $region17: #{simple_cnn_forward.5} parent=1 // pred_fallthru
      _
    // Predicated region
    $region18: #{simple_cnn_forward.5} parent=1 // pred_check
      _
    $region19: #{simple_cnn_forward.5} parent=1 // pred_check_branch
      %22 = sbr.rel (0) target = $region21
    $region20: #{simple_cnn_forward.5} parent=1 // pred_region
      _
    $region21: #{simple_cnn_forward.5} parent=1 // pred_fallthru
      _
    // Predicated region
    $region22: #{simple_cnn_forward.5} parent=1 // pred_check
      _
    $region23: #{simple_cnn_forward.5} parent=1 // pred_check_branch
      %24 = sbr.rel (0) target = $region25
    $region24: #{simple_cnn_forward.5} parent=1 // pred_region
      _
    $region25: #{simple_cnn_forward.5} parent=1 // pred_fallthru
      _
    // Predicated region
    $region26: #{simple_cnn_forward.5} parent=1 // pred_check
      _
    $region27: #{simple_cnn_forward.5} parent=1 // pred_check_branch
      %26 = sbr.rel (0) target = $region29
    $region28: #{simple_cnn_forward.5} parent=1 // pred_region
      _
    $region29: #{simple_cnn_forward.5} parent=1 // pred_fallthru
      _
    %v28 = vld [vmem:[%s0] sm:$0x3]
    %v29 = vld [vmem:[%s1] sm:$0xf]
    %v30 = vld [vmem:[%s1 + $0x4] sm:$0xf]
    %v31 = vld [vmem:[%s1 + $0x8] sm:$0xf]
    %v32 = vld [vmem:[%s1 + $0xc] sm:$0xf]
    %v33 = vld [vmem:[%s1 + $0x10] sm:$0xf]
    %v34 = vld [vmem:[%s1 + $0x14] sm:$0xf]
    %v35 = vld [vmem:[%s1 + $0x18] sm:$0xf]
    %v36 = vld [vmem:[%s1 + $0x1c] sm:$0xf]
    %v37 = vld [vmem:[%s1 + $0x20] sm:$0xf]
    %v38 = vld [vmem:[%s1 + $0x24] sm:$0xf]
    %v39 = vld [vmem:[%s1 + $0x28] sm:$0xf]
    %v40 = vld [vmem:[%s1 + $0x2c] sm:$0xf]
    %v41 = vld [vmem:[%s1 + $0x30] sm:$0xf]
    %v42 = vld [vmem:[%s1 + $0x34] sm:$0xf]
    %v43 = vld [vmem:[%s1 + $0x38] sm:$0xf]
    %v44 = vld [vmem:[%s1 + $0x3c] sm:$0xf]
    %v45 = vld [vmem:[%s1 + $0x40] sm:$0xf]
    %v46 = vld [vmem:[%s1 + $0x44] sm:$0xf]
    %v47 = vld [vmem:[%s1 + $0x48] sm:$0xf]
    %v48 = vld [vmem:[%s1 + $0x4c] sm:$0xf]
    %v49 = vld [vmem:[%s1 + $0x50] sm:$0xf]
    %v50 = vld [vmem:[%s1 + $0x54] sm:$0xf]
    %v51 = vld [vmem:[%s1 + $0x58] sm:$0xf]
    %v52 = vld [vmem:[%s1 + $0x5c] sm:$0xf]
    %v53 = vld [vmem:[%s1 + $0x60] sm:$0xf]
    %v54 = vld [vmem:[%s1 + $0x64] sm:$0xf]
    %v55 = vld [vmem:[%s1 + $0x68] sm:$0xf]
    %v56 = vld [vmem:[%s1 + $0x6c] sm:$0xf]
    %v57 = vld [vmem:[%s1 + $0x70] sm:$0xf]
    %v58 = vld [vmem:[%s1 + $0x74] sm:$0xf]
    %v59 = vld [vmem:[%s1 + $0x78] sm:$0xf]
    %v60 = vld [vmem:[%s1 + $0x7c] sm:$0xf]
    %v61 = vld [vmem:[%s2] sm:$0x1]
    %v63 = vlaneseq
    %v64 = vshrl.u32 %v63, 7
    %v65 = vsub.s32 0, %v64
    %v66 = vrot.slane %v61, %v65
    %v70 = vunpack.c.l.s4 1966171168
    %v71 = vunpack.c.0.s8 %v70
    %v72 = vlaneseq
    %v73 = vshrl.u32 %v72, 7
    %v74 = vsub.s32 %v71, %v73
    %v75 = vrot.slane %v28, %v74
    %v76 = vcombine.high %v75, %v75
    %v78 = vunpack.c.l.s4 1966171168
    %v79 = vunpack.c.0.s8 %v78
    %v80 = vlaneseq
    %v81 = vshrl.u32 %v80, 7
    %v82 = vsub.s32 %v79, %v81
    %v83 = vrot.slane %v75, %v82
    %v85 = vunpack.c.l.s4 1966171168
    %v86 = vunpack.c.0.s8 %v85
    %v87 = vlaneseq
    %v88 = vshrl.u32 %v87, 7
    %v89 = vsub.s32 %v86, %v88
    %v90 = vrot.slane %v76, %v89
    %v125 = vunpack.c.l.b16 %v29
    %v126 = vunpack.c.l.b16 %v30
    %v127 = vunpack.c.l.b16 %v31
    %v128 = vunpack.c.l.b16 %v32
    %v129 = vunpack.c.l.b16 %v33
    %v130 = vunpack.c.l.b16 %v34
    %v131 = vunpack.c.l.b16 %v35
    %v132 = vunpack.c.l.b16 %v36
    %v133 = vunpack.c.l.b16 %v37
    %v134 = vunpack.c.l.b16 %v38
    %v135 = vunpack.c.l.b16 %v39
    %v136 = vunpack.c.l.b16 %v40
    %v137 = vunpack.c.l.b16 %v41
    %v138 = vunpack.c.l.b16 %v42
    %v139 = vunpack.c.l.b16 %v43
    %v140 = vunpack.c.l.b16 %v44
    %v141 = vunpack.c.l.b16 %v45
    %v142 = vunpack.c.l.b16 %v46
    %v143 = vunpack.c.l.b16 %v47
    %v144 = vunpack.c.l.b16 %v48
    %v145 = vunpack.c.l.b16 %v49
    %v146 = vunpack.c.l.b16 %v50
    %v147 = vunpack.c.l.b16 %v51
    %v148 = vunpack.c.l.b16 %v52
    %v149 = vunpack.c.l.b16 %v53
    %v150 = vunpack.c.l.b16 %v54
    %v151 = vunpack.c.l.b16 %v55
    %v152 = vunpack.c.l.b16 %v56
    %v153 = vunpack.c.l.b16 %v57
    %v154 = vunpack.c.l.b16 %v58
    %v155 = vunpack.c.l.b16 %v59
    %v156 = vunpack.c.l.b16 %v60
    %v157 = vpack.c.b16 %v126, %v125
    %v158 = vpack.c.b16 %v128, %v127
    %v159 = vpack.c.b16 %v130, %v129
    %v160 = vpack.c.b16 %v132, %v131
    %v161 = vpack.c.b16 %v134, %v133
    %v162 = vpack.c.b16 %v136, %v135
    %v163 = vpack.c.b16 %v138, %v137
    %v164 = vpack.c.b16 %v140, %v139
    %v165 = vpack.c.b16 %v142, %v141
    %v166 = vpack.c.b16 %v144, %v143
    %v167 = vpack.c.b16 %v146, %v145
    %v168 = vpack.c.b16 %v148, %v147
    %v169 = vpack.c.b16 %v150, %v149
    %v170 = vpack.c.b16 %v152, %v151
    %v171 = vpack.c.b16 %v154, %v153
    %v172 = vpack.c.b16 %v156, %v155
    %189 = vmatprep.subr.bf16.mxu0 0
    %190 = vmatpush1.bf16.msra.mxu0 %v164
    %191 = vmatprep.subr.bf16.mxu0 0
    %192 = vmatpush1.bf16.msra.mxu0 %v163
    %193 = vmatprep.subr.bf16.mxu0 0
    %194 = vmatpush1.bf16.msra.mxu0 %v162
    %195 = vmatprep.subr.bf16.mxu0 0
    %196 = vmatpush1.bf16.msra.mxu0 %v161
    %197 = vmatprep.subr.bf16.mxu0 0
    %198 = vmatpush1.bf16.msra.mxu0 %v160
    %199 = vmatprep.subr.bf16.mxu0 0
    %200 = vmatpush1.bf16.msra.mxu0 %v159
    %201 = vmatprep.subr.bf16.mxu0 0
    %202 = vmatpush1.bf16.msra.mxu0 %v158
    %203 = vmatprep.subr.bf16.mxu0 0
    %204 = vmatpush1.bf16.msra.mxu0 %v157
    %205 = vmatprep.subr.bf16.mxu0 0
    %206 = vmatpush2.bf16.msra.mxu0 %v172
    %207 = vmatprep.subr.bf16.mxu0 0
    %208 = vmatpush2.bf16.msra.mxu0 %v171
    %209 = vmatprep.subr.bf16.mxu0 0
    %210 = vmatpush2.bf16.msra.mxu0 %v170
    %211 = vmatprep.subr.bf16.mxu0 0
    %212 = vmatpush2.bf16.msra.mxu0 %v169
    %213 = vmatprep.subr.bf16.mxu0 0
    %214 = vmatpush2.bf16.msra.mxu0 %v168
    %215 = vmatprep.subr.bf16.mxu0 0
    %216 = vmatpush2.bf16.msra.mxu0 %v167
    %217 = vmatprep.subr.bf16.mxu0 0
    %218 = vmatpush2.bf16.msra.mxu0 %v166
    %219 = vmatprep.subr.bf16.mxu0 0
    %220 = vmatpush2.bf16.msra.mxu0 %v165
    %221 = vmatprep.mubr.bf16.mxu0 %v90
    %222 = vmatmul.mubr.bf16.gmra.mxu0 %v83
    %v223 = vpop.f32.mrf.mxu0
    %v224 = vadd.f32 %v66, %v223
    %v225 = vpop.f32.mrf.mxu0
    %v226 = vpop.f32.mrf.mxu0
    %v227 = vpop.f32.mrf.mxu0
    %228 = vdwg.mxu0
    %v229 = vmax.f32 %v224, 0.0
    %v230 = vpack.c.bf16 %v229, %v229
    %v231 = vld [vmem:[%s3] sm:$0xf]
    %v232 = vld [vmem:[%s3 + $0x4] sm:$0xf]
    %v233 = vld [vmem:[%s3 + $0x8] sm:$0xf]
    %v234 = vld [vmem:[%s3 + $0xc] sm:$0xf]
    %v235 = vld [vmem:[%s3 + $0x10] sm:$0xf]
    %v236 = vld [vmem:[%s3 + $0x14] sm:$0xf]
    %v237 = vld [vmem:[%s3 + $0x18] sm:$0xf]
    %v238 = vld [vmem:[%s3 + $0x1c] sm:$0xf]
    %v239 = vld [vmem:[%s3 + $0x20] sm:$0xf]
    %v240 = vld [vmem:[%s3 + $0x24] sm:$0xf]
    %v241 = vld [vmem:[%s3 + $0x28] sm:$0xf]
    %v242 = vld [vmem:[%s3 + $0x2c] sm:$0xf]
    %v243 = vld [vmem:[%s3 + $0x30] sm:$0xf]
    %v244 = vld [vmem:[%s3 + $0x34] sm:$0xf]
    %v245 = vld [vmem:[%s3 + $0x38] sm:$0xf]
    %v246 = vld [vmem:[%s3 + $0x3c] sm:$0xf]
    %v247 = vld [vmem:[%s4] sm:$0x1]
    %v249 = vlaneseq
    %v250 = vshrl.u32 %v249, 7
    %v251 = vsub.s32 0, %v250
    %v252 = vrot.slane %v247, %v251
    %v270 = vunpack.c.l.b16 %v231
    %v271 = vunpack.c.l.b16 %v232
    %v272 = vunpack.c.l.b16 %v233
    %v273 = vunpack.c.l.b16 %v234
    %v274 = vunpack.c.l.b16 %v235
    %v275 = vunpack.c.l.b16 %v236
    %v276 = vunpack.c.l.b16 %v237
    %v277 = vunpack.c.l.b16 %v238
    %v278 = vunpack.c.l.b16 %v239
    %v279 = vunpack.c.l.b16 %v240
    %v280 = vunpack.c.l.b16 %v241
    %v281 = vunpack.c.l.b16 %v242
    %v282 = vunpack.c.l.b16 %v243
    %v283 = vunpack.c.l.b16 %v244
    %v284 = vunpack.c.l.b16 %v245
    %v285 = vunpack.c.l.b16 %v246
    %v286 = vpack.c.b16 %v271, %v270
    %v287 = vpack.c.b16 %v273, %v272
    %v288 = vpack.c.b16 %v275, %v274
    %v289 = vpack.c.b16 %v277, %v276
    %v290 = vpack.c.b16 %v279, %v278
    %v291 = vpack.c.b16 %v281, %v280
    %v292 = vpack.c.b16 %v283, %v282
    %v293 = vpack.c.b16 %v285, %v284
    %302 = vmatprep.subr.bf16.mxu0 0
    %303 = vmatpush1.bf16.msra.mxu0 %v293
    %304 = vmatprep.subr.bf16.mxu0 0
    %305 = vmatpush1.bf16.msra.mxu0 %v292
    %306 = vmatprep.subr.bf16.mxu0 0
    %307 = vmatpush1.bf16.msra.mxu0 %v291
    %308 = vmatprep.subr.bf16.mxu0 0
    %309 = vmatpush1.bf16.msra.mxu0 %v290
    %310 = vmatprep.subr.bf16.mxu0 0
    %311 = vmatpush1.bf16.msra.mxu0 %v289
    %312 = vmatprep.subr.bf16.mxu0 0
    %313 = vmatpush1.bf16.msra.mxu0 %v288
    %314 = vmatprep.subr.bf16.mxu0 0
    %315 = vmatpush1.bf16.msra.mxu0 %v287
    %316 = vmatprep.subr.bf16.mxu0 0
    %317 = vmatpush1.bf16.msra.mxu0 %v286
    %318 = vmatprep.subr.bf16.mxu0 0
    %319 = vmatpush2.bf16.msra.mxu0 0
    %320 = vmatprep.subr.bf16.mxu0 0
    %321 = vmatpush2.bf16.msra.mxu0 0
    %322 = vmatprep.subr.bf16.mxu0 0
    %323 = vmatpush2.bf16.msra.mxu0 0
    %324 = vmatprep.subr.bf16.mxu0 0
    %325 = vmatpush2.bf16.msra.mxu0 0
    %326 = vmatprep.subr.bf16.mxu0 0
    %327 = vmatpush2.bf16.msra.mxu0 0
    %328 = vmatprep.subr.bf16.mxu0 0
    %329 = vmatpush2.bf16.msra.mxu0 0
    %330 = vmatprep.subr.bf16.mxu0 0
    %331 = vmatpush2.bf16.msra.mxu0 0
    %332 = vmatprep.subr.bf16.mxu0 0
    %333 = vmatpush2.bf16.msra.mxu0 0
    %334 = vmatprep.mubr.bf16.mxu0 0
    %335 = vmatmul.mubr.bf16.gmra.mxu0 %v230
    %v336 = vpop.f32.mrf.mxu0
    %v337 = vadd.f32 %v252, %v336
    %v338 = vpop.f32.mrf.mxu0
    %v339 = vpop.f32.mrf.mxu0
    %v340 = vpop.f32.mrf.mxu0
    %341 = vdwg.mxu0
    %v342 = vmax.f32 %v337, 0.0
    %v343 = vpack.c.bf16 %v342, %v342
    %v344 = vld [vmem:[%s5] sm:$0xf]
    %v345 = vld [vmem:[%s5 + $0x4] sm:$0xf]
    %v346 = vld [vmem:[%s5 + $0x8] sm:$0xf]
    %v347 = vld [vmem:[%s5 + $0xc] sm:$0xf]
    %v348 = vld [vmem:[%s5 + $0x10] sm:$0xf]
    %v349 = vld [vmem:[%s5 + $0x14] sm:$0xf]
    %v350 = vld [vmem:[%s5 + $0x18] sm:$0xf]
    %v351 = vld [vmem:[%s5 + $0x1c] sm:$0xf]
    %v352 = vld [vmem:[%s6] sm:$0x1]
    %v354 = vlaneseq
    %v355 = vshrl.u32 %v354, 7
    %v356 = vsub.s32 0, %v355
    %v357 = vrot.slane %v352, %v356
    %v367 = vunpack.c.l.b16 %v344
    %v368 = vunpack.c.l.b16 %v345
    %v369 = vunpack.c.l.b16 %v346
    %v370 = vunpack.c.l.b16 %v347
    %v371 = vunpack.c.l.b16 %v348
    %v372 = vunpack.c.l.b16 %v349
    %v373 = vunpack.c.l.b16 %v350
    %v374 = vunpack.c.l.b16 %v351
    %v375 = vpack.c.b16 %v368, %v367
    %v376 = vpack.c.b16 %v370, %v369
    %v377 = vpack.c.b16 %v372, %v371
    %v378 = vpack.c.b16 %v374, %v373
    %vm383 = vcmask 523264
    %v385 = vsel %vm383, %v343, 0
    %387 = vmatprep.subr.bf16.mxu0 0
    %388 = vmatpush1.bf16.msra.mxu0 0
    %389 = vmatprep.subr.bf16.mxu0 0
    %390 = vmatpush1.bf16.msra.mxu0 0
    %391 = vmatprep.subr.bf16.mxu0 0
    %392 = vmatpush1.bf16.msra.mxu0 0
    %393 = vmatprep.subr.bf16.mxu0 0
    %394 = vmatpush1.bf16.msra.mxu0 0
    %395 = vmatprep.subr.bf16.mxu0 0
    %396 = vmatpush1.bf16.msra.mxu0 %v378
    %397 = vmatprep.subr.bf16.mxu0 0
    %398 = vmatpush1.bf16.msra.mxu0 %v377
    %399 = vmatprep.subr.bf16.mxu0 0
    %400 = vmatpush1.bf16.msra.mxu0 %v376
    %401 = vmatprep.subr.bf16.mxu0 0
    %402 = vmatpush1.bf16.msra.mxu0 %v375
    %403 = vmatprep.subr.bf16.mxu0 0
    %404 = vmatpush2.bf16.msra.mxu0 0
    %405 = vmatprep.subr.bf16.mxu0 0
    %406 = vmatpush2.bf16.msra.mxu0 0
    %407 = vmatprep.subr.bf16.mxu0 0
    %408 = vmatpush2.bf16.msra.mxu0 0
    %409 = vmatprep.subr.bf16.mxu0 0
    %410 = vmatpush2.bf16.msra.mxu0 0
    %411 = vmatprep.subr.bf16.mxu0 0
    %412 = vmatpush2.bf16.msra.mxu0 0
    %413 = vmatprep.subr.bf16.mxu0 0
    %414 = vmatpush2.bf16.msra.mxu0 0
    %415 = vmatprep.subr.bf16.mxu0 0
    %416 = vmatpush2.bf16.msra.mxu0 0
    %417 = vmatprep.subr.bf16.mxu0 0
    %418 = vmatpush2.bf16.msra.mxu0 0
    %419 = vmatprep.mubr.bf16.mxu0 0
    %420 = vmatmul.mubr.bf16.gmra.mxu0 %v385
    %v421 = vpop.f32.mrf.mxu0
    %v422 = vadd.f32 %v357, %v421
    %v423 = vpop.f32.mrf.mxu0
    %v424 = vpop.f32.mrf.mxu0
    %v425 = vpop.f32.mrf.mxu0
    %426 = vdwg.mxu0
    %427 = vst [vmem:[#allocation2] sm:$0x3] %v422
    // Predicated region
    $region30: #{simple_cnn_forward.5} parent=1 // pred_check
      _
    $region31: #{simple_cnn_forward.5} parent=1 // pred_check_branch
      %429 = sbr.rel (0) target = $region33
    $region32: #{simple_cnn_forward.5} parent=1 // pred_region
      %s431 = ssub.s32 32, 32
      %432 = vsyncadd [#allocation3], %s431
      %s434 = sshll.u32 [#allocation2], 4
      %s435 = int_to_ptr.vmem [resolvable:$true] %s434
      %437 = dma.vmem_to_hbm [thread:$0]  %s435, 32, %s7, [#allocation3]
    $region33: #{simple_cnn_forward.5} parent=1 // pred_fallthru
      _
    // Predicated region
    $region34: #{simple_cnn_forward.5} parent=1 // pred_check
      _
    $region35: #{simple_cnn_forward.5} parent=1 // pred_check_branch
      %439 = sbr.rel (0) target = $region37
    $region36: #{simple_cnn_forward.5} parent=1 // pred_region
      %440 = dma.done [#allocation3], 32
    $region37: #{simple_cnn_forward.5} parent=1 // pred_fallthru
      _
    %441 = vsyncpa [#allocation3], 1

// kernel: simple_cnn_forward.3
$region0: #{simple_cnn_forward.3}
  #allocation0 [shape = 'u32[]', space=smem, size = 0x4, offset = 0x4, fixed_abs, tag = 'smem constant byte address 0x4 - core index']
  #allocation1 [shape = 'u32[144,128]{1,0:T(1,128)}', space=vmem, size = 0x12000, scoped, tag = 'internal scratch']
  %s0 = inlined_call_operand.vmem [shape: bf16[2,28,28], index: 0, kind: input, shape index: {}]
  %s1 = inlined_call_operand.vmem [shape: bf16[5,28,96], index: 1, kind: input, shape index: {}]
  %s2 = inlined_call_operand.hbm [shape: bf16[5,28,96], index: 2, kind: input, shape index: {}]
  %s3 = inlined_call_operand.vmem [shape: f32[1,96], index: 3, kind: input, shape index: {}]
  %s4 = inlined_call_operand.vmem [shape: bf16[12,23], index: 4, kind: input, shape index: {}]
  %s5 = inlined_call_operand.vmem [shape: bf16[2,12,96], index: 5, kind: output, shape index: {}]
  %s6 = sld [smem:[#allocation0]]
  $region34: #{simple_cnn_forward.3} parent=0
    _
  %s8 = ssub.s32 1, %s6
  %s9 = scalar_select 0, %s8, %s6
  $region1: #{simple_cnn_forward.3} parent=0
    #allocation2 [shape = 'u8[40960]{0}', space=vmem, size = 0xa000, scoped, tag = 'input window, operand 2, single buffered']
    #allocation3 [shape = 's32[1]{0}', space=sflag, size = 0x4, scoped, tag = 'scoped memory for simple_cnn_forward.3']
    %10 = vsyncpa [#allocation3], 0
    // Predicated region
    $region2: #{simple_cnn_forward.3} parent=1 // pred_check
      _
    $region3: #{simple_cnn_forward.3} parent=1 // pred_check_branch
      %12 = sbr.rel (0) target = $region5
    $region4: #{simple_cnn_forward.3} parent=1 // pred_region
      _
    $region5: #{simple_cnn_forward.3} parent=1 // pred_fallthru
      _
    // Predicated region
    $region6: #{simple_cnn_forward.3} parent=1 // pred_check
      _
    $region7: #{simple_cnn_forward.3} parent=1 // pred_check_branch
      %14 = sbr.rel (0) target = $region9
    $region8: #{simple_cnn_forward.3} parent=1 // pred_region
      _
    $region9: #{simple_cnn_forward.3} parent=1 // pred_fallthru
      _
    // Predicated region
    $region10: #{simple_cnn_forward.3} parent=1 // pred_check
      _
    $region11: #{simple_cnn_forward.3} parent=1 // pred_check_branch
      %16 = sbr.rel (0) target = $region13
    $region12: #{simple_cnn_forward.3} parent=1 // pred_region
      %s18 = ssub.s32 1280, 1280
      %19 = vsyncadd [#allocation3], %s18
      %s20 = sshll.u32 [#allocation2], 4
      %s21 = int_to_ptr.vmem [resolvable:$true] %s20
      %26 = dma.hbm_to_vmem [thread:$0]  %s2, 1280, %s21, [#allocation3], 64, 64, 4
    $region13: #{simple_cnn_forward.3} parent=1 // pred_fallthru
      _
    // Predicated region
    $region14: #{simple_cnn_forward.3} parent=1 // pred_check
      _
    $region15: #{simple_cnn_forward.3} parent=1 // pred_check_branch
      %28 = sbr.rel (0) target = $region17
    $region16: #{simple_cnn_forward.3} parent=1 // pred_region
      _
    $region17: #{simple_cnn_forward.3} parent=1 // pred_fallthru
      _
    // Predicated region
    $region18: #{simple_cnn_forward.3} parent=1 // pred_check
      _
    $region19: #{simple_cnn_forward.3} parent=1 // pred_check_branch
      %30 = sbr.rel (0) target = $region21
    $region20: #{simple_cnn_forward.3} parent=1 // pred_region
      _
    $region21: #{simple_cnn_forward.3} parent=1 // pred_fallthru
      _
    // Predicated region
    $region22: #{simple_cnn_forward.3} parent=1 // pred_check
      _
    $region23: #{simple_cnn_forward.3} parent=1 // pred_check_branch
      %32 = sbr.rel (0) target = $region25
    $region24: #{simple_cnn_forward.3} parent=1 // pred_region
      %33 = dma.done [#allocation3], 1280
    $region25: #{simple_cnn_forward.3} parent=1 // pred_fallthru
      _
    %v35 = vld [vmem:[%s3] sm:$0x1]
    %v36 = vld [vmem:[%s4] sm:$0xf]
    %v37 = vld [vmem:[%s4 + $0x4] sm:$0x3]
    %v38 = vld [vmem:[%s1] sm:$0xf]
    %v39 = vld [vmem:[%s1 + $0x4] sm:$0xf]
    %v40 = vld [vmem:[%s1 + $0x8] sm:$0xf]
    %v41 = vld [vmem:[%s1 + $0xc] sm:$0x3]
    %s42 = scalar_lea.vmem %s1, 16
    %v43 = vld [vmem:[%s42] sm:$0xf]
    %v44 = vld [vmem:[%s42 + $0x4] sm:$0xf]
    %v45 = vld [vmem:[%s42 + $0x8] sm:$0xf]
    %v46 = vld [vmem:[%s42 + $0xc] sm:$0x3]
    %s47 = scalar_lea.vmem %s1, 32
    %v48 = vld [vmem:[%s47] sm:$0xf]
    %v49 = vld [vmem:[%s47 + $0x4] sm:$0xf]
    %v50 = vld [vmem:[%s47 + $0x8] sm:$0xf]
    %v51 = vld [vmem:[%s47 + $0xc] sm:$0x3]
    %s52 = scalar_lea.vmem %s1, 48
    %v53 = vld [vmem:[%s52] sm:$0xf]
    %v54 = vld [vmem:[%s52 + $0x4] sm:$0xf]
    %v55 = vld [vmem:[%s52 + $0x8] sm:$0xf]
    %v56 = vld [vmem:[%s52 + $0xc] sm:$0x3]
    %s57 = scalar_lea.vmem %s1, 64
    %v58 = vld [vmem:[%s57] sm:$0xf]
    %v59 = vld [vmem:[%s57 + $0x4] sm:$0xf]
    %v60 = vld [vmem:[%s57 + $0x8] sm:$0xf]
    %v61 = vld [vmem:[%s57 + $0xc] sm:$0x3]
    %v62 = vld [vmem:[#allocation2] sm:$0xf]
    %v63 = vld [vmem:[#allocation2 + $0x4] sm:$0xf]
    %v64 = vld [vmem:[#allocation2 + $0x8] sm:$0xf]
    %v65 = vld [vmem:[#allocation2 + $0xc] sm:$0x3]
    %s66 = scalar_lea.vmem [#allocation2], 16
    %v67 = vld [vmem:[%s66] sm:$0xf]
    %v68 = vld [vmem:[%s66 + $0x4] sm:$0xf]
    %v69 = vld [vmem:[%s66 + $0x8] sm:$0xf]
    %v70 = vld [vmem:[%s66 + $0xc] sm:$0x3]
    %s71 = scalar_lea.vmem [#allocation2], 32
    %v72 = vld [vmem:[%s71] sm:$0xf]
    %v73 = vld [vmem:[%s71 + $0x4] sm:$0xf]
    %v74 = vld [vmem:[%s71 + $0x8] sm:$0xf]
    %v75 = vld [vmem:[%s71 + $0xc] sm:$0x3]
    %s76 = scalar_lea.vmem [#allocation2], 48
    %v77 = vld [vmem:[%s76] sm:$0xf]
    %v78 = vld [vmem:[%s76 + $0x4] sm:$0xf]
    %v79 = vld [vmem:[%s76 + $0x8] sm:$0xf]
    %v80 = vld [vmem:[%s76 + $0xc] sm:$0x3]
    %s81 = scalar_lea.vmem [#allocation2], 64
    %v82 = vld [vmem:[%s81] sm:$0xf]
    %v83 = vld [vmem:[%s81 + $0x4] sm:$0xf]
    %v84 = vld [vmem:[%s81 + $0x8] sm:$0xf]
    %v85 = vld [vmem:[%s81 + $0xc] sm:$0x3]
    %v86 = vld [vmem:[%s0] sm:$0xf]
    %v87 = vld [vmem:[%s0 + $0x4] sm:$0xf]
    %v88 = vld [vmem:[%s0 + $0x8] sm:$0xf]
    %v89 = vld [vmem:[%s0 + $0xc] sm:$0x3]
    %v94 = vunpack.c.l.b16 %v86
    %v95 = vunpack.c.l.b16 %v87
    %v96 = vunpack.c.l.b16 %v88
    %v97 = vunpack.c.l.b16 %v89
    %v98 = vpack.c.b16 %v95, %v94
    %v99 = vpack.c.b16 %v97, %v96
    %vm100 = vsmask.f32 7424
    %v102 = vshrl.u32 %v98, 16
    %v104 = vshll.u32 %v98, 16
    %v106 = vrot.slane %v104, 1
    %v107 = vor.u32 %v102, %v106
    %v109 = vshll.u32 %v99, 16
    %v111 = vrot.slane %v109, 1
    %v112 = vsel %vm100, %v107, %v111
    %v113 = vshrl.u32 %v99, 16
    %v115 = vor.u32 %v113, %v111
    %v120 = vunpack.c.l.b16 %v43
    %v121 = vunpack.c.l.b16 %v44
    %v122 = vunpack.c.l.b16 %v45
    %v123 = vunpack.c.l.b16 %v46
    %v124 = vpack.c.b16 %v121, %v120
    %v125 = vpack.c.b16 %v123, %v122
    %vm127 = vcmask 228352
    %v129 = vsel %vm127, %v112, 0
    %v132 = vsel %vm127, %v115, 0
    %vm134 = vcmask 1045504
    %v136 = vsel %vm134, %v125, 0
    %138 = vmatprep.subr.bf16.mxu0 0
    %139 = vmatpush1.bf16.msra.mxu0 0
    %140 = vmatprep.subr.bf16.mxu0 0
    %141 = vmatpush1.bf16.msra.mxu0 0
    %142 = vmatprep.subr.bf16.mxu0 0
    %143 = vmatpush1.bf16.msra.mxu0 0
    %144 = vmatprep.subr.bf16.mxu0 0
    %145 = vmatpush1.bf16.msra.mxu0 0
    %146 = vmatprep.subr.bf16.mxu0 0
    %147 = vmatpush1.bf16.msra.mxu0 0
    %148 = vmatprep.subr.bf16.mxu0 0
    %149 = vmatpush1.bf16.msra.mxu0 0
    %150 = vmatprep.subr.bf16.mxu0 0
    %151 = vmatpush1.bf16.msra.mxu0 %v136
    %152 = vmatprep.subr.bf16.mxu0 0
    %153 = vmatpush1.bf16.msra.mxu0 %v124
    %154 = vmatprep.subr.bf16.mxu0 0
    %155 = vmatpush2.bf16.msra.mxu0 0
    %156 = vmatprep.subr.bf16.mxu0 0
    %157 = vmatpush2.bf16.msra.mxu0 0
    %158 = vmatprep.subr.bf16.mxu0 0
    %159 = vmatpush2.bf16.msra.mxu0 0
    %160 = vmatprep.subr.bf16.mxu0 0
    %161 = vmatpush2.bf16.msra.mxu0 0
    %162 = vmatprep.subr.bf16.mxu0 0
    %163 = vmatpush2.bf16.msra.mxu0 0
    %164 = vmatprep.subr.bf16.mxu0 0
    %165 = vmatpush2.bf16.msra.mxu0 0
    %166 = vmatprep.subr.bf16.mxu0 0
    %167 = vmatpush2.bf16.msra.mxu0 0
    %168 = vmatprep.subr.bf16.mxu0 0
    %169 = vmatpush2.bf16.msra.mxu0 0
    %170 = vmatprep.mubr.bf16.mxu0 0
    %171 = vmatmul.mubr.bf16.gmra.mxu0 %v129
    %v172 = vpop.f32.mrf.mxu0
    %v173 = vadd.f32 0.0, %v172
    %v174 = vpop.f32.mrf.mxu0
    %v175 = vpop.f32.mrf.mxu0
    %v176 = vadd.f32 0.0, %v175
    %v177 = vpop.f32.mrf.mxu0
    %178 = vmatprep.mubr.bf16.mxu0 0
    %179 = vmatmul.mubr.bf16.gmra.mxu0 %v132
    %v180 = vpop.f32.mrf.mxu0
    %v181 = vadd.f32 0.0, %v180
    %v182 = vpop.f32.mrf.mxu0
    %v183 = vpop.f32.mrf.mxu0
    %v184 = vpop.f32.mrf.mxu0
    %185 = vdwg.mxu0
    %v186 = vpack.c.b16 %v96, %v96
    %v191 = vunpack.c.l.b16 %v38
    %v192 = vunpack.c.l.b16 %v39
    %v193 = vunpack.c.l.b16 %v40
    %v194 = vunpack.c.l.b16 %v41
    %v195 = vpack.c.b16 %v192, %v191
    %v196 = vpack.c.b16 %v194, %v193
    %v198 = vsel %vm127, %v98, 0
    %v201 = vsel %vm127, %v186, 0
    %v204 = vsel %vm134, %v196, 0
    %206 = vmatprep.subr.bf16.mxu0 0
    %207 = vmatpush1.bf16.msra.mxu0 0
    %208 = vmatprep.subr.bf16.mxu0 0
    %209 = vmatpush1.bf16.msra.mxu0 0
    %210 = vmatprep.subr.bf16.mxu0 0
    %211 = vmatpush1.bf16.msra.mxu0 0
    %212 = vmatprep.subr.bf16.mxu0 0
    %213 = vmatpush1.bf16.msra.mxu0 0
    %214 = vmatprep.subr.bf16.mxu0 0
    %215 = vmatpush1.bf16.msra.mxu0 0
    %216 = vmatprep.subr.bf16.mxu0 0
    %217 = vmatpush1.bf16.msra.mxu0 0
    %218 = vmatprep.subr.bf16.mxu0 0
    %219 = vmatpush1.bf16.msra.mxu0 %v204
    %220 = vmatprep.subr.bf16.mxu0 0
    %221 = vmatpush1.bf16.msra.mxu0 %v195
    %222 = vmatprep.subr.bf16.mxu0 0
    %223 = vmatpush2.bf16.msra.mxu0 0
    %224 = vmatprep.subr.bf16.mxu0 0
    %225 = vmatpush2.bf16.msra.mxu0 0
    %226 = vmatprep.subr.bf16.mxu0 0
    %227 = vmatpush2.bf16.msra.mxu0 0
    %228 = vmatprep.subr.bf16.mxu0 0
    %229 = vmatpush2.bf16.msra.mxu0 0
    %230 = vmatprep.subr.bf16.mxu0 0
    %231 = vmatpush2.bf16.msra.mxu0 0
    %232 = vmatprep.subr.bf16.mxu0 0
    %233 = vmatpush2.bf16.msra.mxu0 0
    %234 = vmatprep.subr.bf16.mxu0 0
    %235 = vmatpush2.bf16.msra.mxu0 0
    %236 = vmatprep.subr.bf16.mxu0 0
    %237 = vmatpush2.bf16.msra.mxu0 0
    %238 = vmatprep.mubr.bf16.mxu0 0
    %239 = vmatmul.mubr.bf16.gmra.mxu0 %v198
    %v240 = vpop.f32.mrf.mxu0
    %v241 = vadd.f32 %v173, %v240
    %v242 = vpop.f32.mrf.mxu0
    %v243 = vpop.f32.mrf.mxu0
    %v244 = vadd.f32 %v176, %v243
    %v245 = vpop.f32.mrf.mxu0
    %246 = vmatprep.mubr.bf16.mxu0 0
    %247 = vmatmul.mubr.bf16.gmra.mxu0 %v201
    %v248 = vpop.f32.mrf.mxu0
    %v249 = vadd.f32 %v181, %v248
    %v250 = vpop.f32.mrf.mxu0
    %v251 = vpop.f32.mrf.mxu0
    %v252 = vpop.f32.mrf.mxu0
    %253 = vdwg.mxu0
    %v258 = vunpack.c.l.b16 %v67
    %v259 = vunpack.c.l.b16 %v68
    %v260 = vunpack.c.l.b16 %v69
    %v261 = vunpack.c.l.b16 %v70
    %v262 = vpack.c.b16 %v259, %v258
    %v263 = vpack.c.b16 %v261, %v260
    %v266 = vsel %vm134, %v263, 0
    %268 = vmatprep.subr.bf16.mxu0 0
    %269 = vmatpush1.bf16.msra.mxu0 0
    %270 = vmatprep.subr.bf16.mxu0 0
    %271 = vmatpush1.bf16.msra.mxu0 0
    %272 = vmatprep.subr.bf16.mxu0 0
    %273 = vmatpush1.bf16.msra.mxu0 0
    %274 = vmatprep.subr.bf16.mxu0 0
    %275 = vmatpush1.bf16.msra.mxu0 0
    %276 = vmatprep.subr.bf16.mxu0 0
    %277 = vmatpush1.bf16.msra.mxu0 0
    %278 = vmatprep.subr.bf16.mxu0 0
    %279 = vmatpush1.bf16.msra.mxu0 0
    %280 = vmatprep.subr.bf16.mxu0 0
    %281 = vmatpush1.bf16.msra.mxu0 %v266
    %282 = vmatprep.subr.bf16.mxu0 0
    %283 = vmatpush1.bf16.msra.mxu0 %v262
    %284 = vmatprep.subr.bf16.mxu0 0
    %285 = vmatpush2.bf16.msra.mxu0 0
    %286 = vmatprep.subr.bf16.mxu0 0
    %287 = vmatpush2.bf16.msra.mxu0 0
    %288 = vmatprep.subr.bf16.mxu0 0
    %289 = vmatpush2.bf16.msra.mxu0 0
    %290 = vmatprep.subr.bf16.mxu0 0
    %291 = vmatpush2.bf16.msra.mxu0 0
    %292 = vmatprep.subr.bf16.mxu0 0
    %293 = vmatpush2.bf16.msra.mxu0 0
    %294 = vmatprep.subr.bf16.mxu0 0
    %295 = vmatpush2.bf16.msra.mxu0 0
    %296 = vmatprep.subr.bf16.mxu0 0
    %297 = vmatpush2.bf16.msra.mxu0 0
    %298 = vmatprep.subr.bf16.mxu0 0
    %299 = vmatpush2.bf16.msra.mxu0 0
    %300 = vmatprep.mubr.bf16.mxu0 0
    %301 = vmatmul.mubr.bf16.gmra.mxu0 %v129
    %v302 = vpop.f32.mrf.mxu0
    %v303 = vadd.f32 0.0, %v302
    %v304 = vpop.f32.mrf.mxu0
    %v305 = vpop.f32.mrf.mxu0
    %v306 = vadd.f32 0.0, %v305
    %v307 = vpop.f32.mrf.mxu0
    %308 = vmatprep.mubr.bf16.mxu0 0
    %309 = vmatmul.mubr.bf16.gmra.mxu0 %v132
    %v310 = vpop.f32.mrf.mxu0
    %v311 = vadd.f32 0.0, %v310
    %v312 = vpop.f32.mrf.mxu0
    %v313 = vpop.f32.mrf.mxu0
    %v314 = vpop.f32.mrf.mxu0
    %315 = vdwg.mxu0
    %v320 = vunpack.c.l.b16 %v62
    %v321 = vunpack.c.l.b16 %v63
    %v322 = vunpack.c.l.b16 %v64
    %v323 = vunpack.c.l.b16 %v65
    %v324 = vpack.c.b16 %v321, %v320
    %v325 = vpack.c.b16 %v323, %v322
    %v328 = vsel %vm134, %v325, 0
    %330 = vmatprep.subr.bf16.mxu0 0
    %331 = vmatpush1.bf16.msra.mxu0 0
    %332 = vmatprep.subr.bf16.mxu0 0
    %333 = vmatpush1.bf16.msra.mxu0 0
    %334 = vmatprep.subr.bf16.mxu0 0
    %335 = vmatpush1.bf16.msra.mxu0 0
    %336 = vmatprep.subr.bf16.mxu0 0
    %337 = vmatpush1.bf16.msra.mxu0 0
    %338 = vmatprep.subr.bf16.mxu0 0
    %339 = vmatpush1.bf16.msra.mxu0 0
    %340 = vmatprep.subr.bf16.mxu0 0
    %341 = vmatpush1.bf16.msra.mxu0 0
    %342 = vmatprep.subr.bf16.mxu0 0
    %343 = vmatpush1.bf16.msra.mxu0 %v328
    %344 = vmatprep.subr.bf16.mxu0 0
    %345 = vmatpush1.bf16.msra.mxu0 %v324
    %346 = vmatprep.subr.bf16.mxu0 0
    %347 = vmatpush2.bf16.msra.mxu0 0
    %348 = vmatprep.subr.bf16.mxu0 0
    %349 = vmatpush2.bf16.msra.mxu0 0
    %350 = vmatprep.subr.bf16.mxu0 0
    %351 = vmatpush2.bf16.msra.mxu0 0
    %352 = vmatprep.subr.bf16.mxu0 0
    %353 = vmatpush2.bf16.msra.mxu0 0
    %354 = vmatprep.subr.bf16.mxu0 0
    %355 = vmatpush2.bf16.msra.mxu0 0
    %356 = vmatprep.subr.bf16.mxu0 0
    %357 = vmatpush2.bf16.msra.mxu0 0
    %358 = vmatprep.subr.bf16.mxu0 0
    %359 = vmatpush2.bf16.msra.mxu0 0
    %360 = vmatprep.subr.bf16.mxu0 0
    %361 = vmatpush2.bf16.msra.mxu0 0
    %362 = vmatprep.mubr.bf16.mxu0 0
    %363 = vmatmul.mubr.bf16.gmra.mxu0 %v198
    %v364 = vpop.f32.mrf.mxu0
    %v365 = vadd.f32 %v303, %v364
    %v366 = vpop.f32.mrf.mxu0
    %v367 = vpop.f32.mrf.mxu0
    %v368 = vadd.f32 %v306, %v367
    %v369 = vpop.f32.mrf.mxu0
    %370 = vmatprep.mubr.bf16.mxu0 0
    %371 = vmatmul.mubr.bf16.gmra.mxu0 %v201
    %v372 = vpop.f32.mrf.mxu0
    %v373 = vadd.f32 %v311, %v372
    %v374 = vpop.f32.mrf.mxu0
    %v375 = vpop.f32.mrf.mxu0
    %v376 = vpop.f32.mrf.mxu0
    %377 = vdwg.mxu0
    %vm378 = vcmask 1046528
    %v379 = vrot.slane %v98, 1
    %v380 = vrot.slane %v99, 1
    %v381 = vsel %vm378, %v379, %v380
    %v386 = vunpack.c.l.b16 %v48
    %v387 = vunpack.c.l.b16 %v49
    %v388 = vunpack.c.l.b16 %v50
    %v389 = vunpack.c.l.b16 %v51
    %v390 = vpack.c.b16 %v387, %v386
    %v391 = vpack.c.b16 %v389, %v388
    %v394 = vsel %vm127, %v381, 0
    %v397 = vsel %vm127, %v380, 0
    %v400 = vsel %vm134, %v391, 0
    %402 = vmatprep.subr.bf16.mxu0 0
    %403 = vmatpush1.bf16.msra.mxu0 0
    %404 = vmatprep.subr.bf16.mxu0 0
    %405 = vmatpush1.bf16.msra.mxu0 0
    %406 = vmatprep.subr.bf16.mxu0 0
    %407 = vmatpush1.bf16.msra.mxu0 0
    %408 = vmatprep.subr.bf16.mxu0 0
    %409 = vmatpush1.bf16.msra.mxu0 0
    %410 = vmatprep.subr.bf16.mxu0 0
    %411 = vmatpush1.bf16.msra.mxu0 0
    %412 = vmatprep.subr.bf16.mxu0 0
    %413 = vmatpush1.bf16.msra.mxu0 0
    %414 = vmatprep.subr.bf16.mxu0 0
    %415 = vmatpush1.bf16.msra.mxu0 %v400
    %416 = vmatprep.subr.bf16.mxu0 0
    %417 = vmatpush1.bf16.msra.mxu0 %v390
    %418 = vmatprep.subr.bf16.mxu0 0
    %419 = vmatpush2.bf16.msra.mxu0 0
    %420 = vmatprep.subr.bf16.mxu0 0
    %421 = vmatpush2.bf16.msra.mxu0 0
    %422 = vmatprep.subr.bf16.mxu0 0
    %423 = vmatpush2.bf16.msra.mxu0 0
    %424 = vmatprep.subr.bf16.mxu0 0
    %425 = vmatpush2.bf16.msra.mxu0 0
    %426 = vmatprep.subr.bf16.mxu0 0
    %427 = vmatpush2.bf16.msra.mxu0 0
    %428 = vmatprep.subr.bf16.mxu0 0
    %429 = vmatpush2.bf16.msra.mxu0 0
    %430 = vmatprep.subr.bf16.mxu0 0
    %431 = vmatpush2.bf16.msra.mxu0 0
    %432 = vmatprep.subr.bf16.mxu0 0
    %433 = vmatpush2.bf16.msra.mxu0 0
    %434 = vmatprep.mubr.bf16.mxu0 0
    %435 = vmatmul.mubr.bf16.gmra.mxu0 %v394
    %v436 = vpop.f32.mrf.mxu0
    %v437 = vadd.f32 0.0, %v436
    %v438 = vpop.f32.mrf.mxu0
    %v439 = vpop.f32.mrf.mxu0
    %v440 = vadd.f32 0.0, %v439
    %v441 = vpop.f32.mrf.mxu0
    %442 = vmatprep.mubr.bf16.mxu0 0
    %443 = vmatmul.mubr.bf16.gmra.mxu0 %v397
    %v444 = vpop.f32.mrf.mxu0
    %v445 = vadd.f32 0.0, %v444
    %v446 = vpop.f32.mrf.mxu0
    %v447 = vpop.f32.mrf.mxu0
    %v448 = vpop.f32.mrf.mxu0
    %449 = vdwg.mxu0
    %v450 = vadd.f32 %v241, %v437
    %v451 = vadd.f32 %v244, %v440
    %v452 = vadd.f32 %v249, %v445
    %v457 = vunpack.c.l.b16 %v72
    %v458 = vunpack.c.l.b16 %v73
    %v459 = vunpack.c.l.b16 %v74
    %v460 = vunpack.c.l.b16 %v75
    %v461 = vpack.c.b16 %v458, %v457
    %v462 = vpack.c.b16 %v460, %v459
    %v465 = vsel %vm134, %v462, 0
    %467 = vmatprep.subr.bf16.mxu0 0
    %468 = vmatpush1.bf16.msra.mxu0 0
    %469 = vmatprep.subr.bf16.mxu0 0
    %470 = vmatpush1.bf16.msra.mxu0 0
    %471 = vmatprep.subr.bf16.mxu0 0
    %472 = vmatpush1.bf16.msra.mxu0 0
    %473 = vmatprep.subr.bf16.mxu0 0
    %474 = vmatpush1.bf16.msra.mxu0 0
    %475 = vmatprep.subr.bf16.mxu0 0
    %476 = vmatpush1.bf16.msra.mxu0 0
    %477 = vmatprep.subr.bf16.mxu0 0
    %478 = vmatpush1.bf16.msra.mxu0 0
    %479 = vmatprep.subr.bf16.mxu0 0
    %480 = vmatpush1.bf16.msra.mxu0 %v465
    %481 = vmatprep.subr.bf16.mxu0 0
    %482 = vmatpush1.bf16.msra.mxu0 %v461
    %483 = vmatprep.subr.bf16.mxu0 0
    %484 = vmatpush2.bf16.msra.mxu0 0
    %485 = vmatprep.subr.bf16.mxu0 0
    %486 = vmatpush2.bf16.msra.mxu0 0
    %487 = vmatprep.subr.bf16.mxu0 0
    %488 = vmatpush2.bf16.msra.mxu0 0
    %489 = vmatprep.subr.bf16.mxu0 0
    %490 = vmatpush2.bf16.msra.mxu0 0
    %491 = vmatprep.subr.bf16.mxu0 0
    %492 = vmatpush2.bf16.msra.mxu0 0
    %493 = vmatprep.subr.bf16.mxu0 0
    %494 = vmatpush2.bf16.msra.mxu0 0
    %495 = vmatprep.subr.bf16.mxu0 0
    %496 = vmatpush2.bf16.msra.mxu0 0
    %497 = vmatprep.subr.bf16.mxu0 0
    %498 = vmatpush2.bf16.msra.mxu0 0
    %499 = vmatprep.mubr.bf16.mxu0 0
    %500 = vmatmul.mubr.bf16.gmra.mxu0 %v394
    %v501 = vpop.f32.mrf.mxu0
    %v502 = vadd.f32 0.0, %v501
    %v503 = vpop.f32.mrf.mxu0
    %v504 = vpop.f32.mrf.mxu0
    %v505 = vadd.f32 0.0, %v504
    %v506 = vpop.f32.mrf.mxu0
    %507 = vmatprep.mubr.bf16.mxu0 0
    %508 = vmatmul.mubr.bf16.gmra.mxu0 %v397
    %v509 = vpop.f32.mrf.mxu0
    %v510 = vadd.f32 0.0, %v509
    %v511 = vpop.f32.mrf.mxu0
    %v512 = vpop.f32.mrf.mxu0
    %v513 = vpop.f32.mrf.mxu0
    %514 = vdwg.mxu0
    %v515 = vadd.f32 %v365, %v502
    %v516 = vadd.f32 %v368, %v505
    %v517 = vadd.f32 %v373, %v510
    %vm518 = vsmask.f32 6400
    %v519 = vrot.slane %v102, 1
    %v520 = vrot.slane %v104, 2
    %v521 = vor.u32 %v519, %v520
    %v522 = vrot.slane %v113, 1
    %v523 = vrot.slane %v109, 2
    %v524 = vor.u32 %v522, %v523
    %v525 = vsel %vm518, %v521, %v524
    %v530 = vunpack.c.l.b16 %v53
    %v531 = vunpack.c.l.b16 %v54
    %v532 = vunpack.c.l.b16 %v55
    %v533 = vunpack.c.l.b16 %v56
    %v534 = vpack.c.b16 %v531, %v530
    %v535 = vpack.c.b16 %v533, %v532
    %v538 = vsel %vm127, %v525, 0
    %v541 = vsel %vm127, %v524, 0
    %v544 = vsel %vm134, %v535, 0
    %546 = vmatprep.subr.bf16.mxu0 0
    %547 = vmatpush1.bf16.msra.mxu0 0
    %548 = vmatprep.subr.bf16.mxu0 0
    %549 = vmatpush1.bf16.msra.mxu0 0
    %550 = vmatprep.subr.bf16.mxu0 0
    %551 = vmatpush1.bf16.msra.mxu0 0
    %552 = vmatprep.subr.bf16.mxu0 0
    %553 = vmatpush1.bf16.msra.mxu0 0
    %554 = vmatprep.subr.bf16.mxu0 0
    %555 = vmatpush1.bf16.msra.mxu0 0
    %556 = vmatprep.subr.bf16.mxu0 0
    %557 = vmatpush1.bf16.msra.mxu0 0
    %558 = vmatprep.subr.bf16.mxu0 0
    %559 = vmatpush1.bf16.msra.mxu0 %v544
    %560 = vmatprep.subr.bf16.mxu0 0
    %561 = vmatpush1.bf16.msra.mxu0 %v534
    %562 = vmatprep.subr.bf16.mxu0 0
    %563 = vmatpush2.bf16.msra.mxu0 0
    %564 = vmatprep.subr.bf16.mxu0 0
    %565 = vmatpush2.bf16.msra.mxu0 0
    %566 = vmatprep.subr.bf16.mxu0 0
    %567 = vmatpush2.bf16.msra.mxu0 0
    %568 = vmatprep.subr.bf16.mxu0 0
    %569 = vmatpush2.bf16.msra.mxu0 0
    %570 = vmatprep.subr.bf16.mxu0 0
    %571 = vmatpush2.bf16.msra.mxu0 0
    %572 = vmatprep.subr.bf16.mxu0 0
    %573 = vmatpush2.bf16.msra.mxu0 0
    %574 = vmatprep.subr.bf16.mxu0 0
    %575 = vmatpush2.bf16.msra.mxu0 0
    %576 = vmatprep.subr.bf16.mxu0 0
    %577 = vmatpush2.bf16.msra.mxu0 0
    %578 = vmatprep.mubr.bf16.mxu0 0
    %579 = vmatmul.mubr.bf16.gmra.mxu0 %v538
    %v580 = vpop.f32.mrf.mxu0
    %v581 = vadd.f32 0.0, %v580
    %v582 = vpop.f32.mrf.mxu0
    %v583 = vpop.f32.mrf.mxu0
    %v584 = vadd.f32 0.0, %v583
    %v585 = vpop.f32.mrf.mxu0
    %586 = vmatprep.mubr.bf16.mxu0 0
    %587 = vmatmul.mubr.bf16.gmra.mxu0 %v541
    %v588 = vpop.f32.mrf.mxu0
    %v589 = vadd.f32 0.0, %v588
    %v590 = vpop.f32.mrf.mxu0
    %v591 = vpop.f32.mrf.mxu0
    %v592 = vpop.f32.mrf.mxu0
    %593 = vdwg.mxu0
    %v594 = vadd.f32 %v450, %v581
    %v595 = vadd.f32 %v451, %v584
    %v596 = vadd.f32 %v452, %v589
    %v601 = vunpack.c.l.b16 %v77
    %v602 = vunpack.c.l.b16 %v78
    %v603 = vunpack.c.l.b16 %v79
    %v604 = vunpack.c.l.b16 %v80
    %v605 = vpack.c.b16 %v602, %v601
    %v606 = vpack.c.b16 %v604, %v603
    %v609 = vsel %vm134, %v606, 0
    %611 = vmatprep.subr.bf16.mxu0 0
    %612 = vmatpush1.bf16.msra.mxu0 0
    %613 = vmatprep.subr.bf16.mxu0 0
    %614 = vmatpush1.bf16.msra.mxu0 0
    %615 = vmatprep.subr.bf16.mxu0 0
    %616 = vmatpush1.bf16.msra.mxu0 0
    %617 = vmatprep.subr.bf16.mxu0 0
    %618 = vmatpush1.bf16.msra.mxu0 0
    %619 = vmatprep.subr.bf16.mxu0 0
    %620 = vmatpush1.bf16.msra.mxu0 0
    %621 = vmatprep.subr.bf16.mxu0 0
    %622 = vmatpush1.bf16.msra.mxu0 0
    %623 = vmatprep.subr.bf16.mxu0 0
    %624 = vmatpush1.bf16.msra.mxu0 %v609
    %625 = vmatprep.subr.bf16.mxu0 0
    %626 = vmatpush1.bf16.msra.mxu0 %v605
    %627 = vmatprep.subr.bf16.mxu0 0
    %628 = vmatpush2.bf16.msra.mxu0 0
    %629 = vmatprep.subr.bf16.mxu0 0
    %630 = vmatpush2.bf16.msra.mxu0 0
    %631 = vmatprep.subr.bf16.mxu0 0
    %632 = vmatpush2.bf16.msra.mxu0 0
    %633 = vmatprep.subr.bf16.mxu0 0
    %634 = vmatpush2.bf16.msra.mxu0 0
    %635 = vmatprep.subr.bf16.mxu0 0
    %636 = vmatpush2.bf16.msra.mxu0 0
    %637 = vmatprep.subr.bf16.mxu0 0
    %638 = vmatpush2.bf16.msra.mxu0 0
    %639 = vmatprep.subr.bf16.mxu0 0
    %640 = vmatpush2.bf16.msra.mxu0 0
    %641 = vmatprep.subr.bf16.mxu0 0
    %642 = vmatpush2.bf16.msra.mxu0 0
    %643 = vmatprep.mubr.bf16.mxu0 0
    %644 = vmatmul.mubr.bf16.gmra.mxu0 %v538
    %v645 = vpop.f32.mrf.mxu0
    %v646 = vadd.f32 0.0, %v645
    %v647 = vpop.f32.mrf.mxu0
    %v648 = vpop.f32.mrf.mxu0
    %v649 = vadd.f32 0.0, %v648
    %v650 = vpop.f32.mrf.mxu0
    %651 = vmatprep.mubr.bf16.mxu0 0
    %652 = vmatmul.mubr.bf16.gmra.mxu0 %v541
    %v653 = vpop.f32.mrf.mxu0
    %v654 = vadd.f32 0.0, %v653
    %v655 = vpop.f32.mrf.mxu0
    %v656 = vpop.f32.mrf.mxu0
    %v657 = vpop.f32.mrf.mxu0
    %658 = vdwg.mxu0
    %v659 = vadd.f32 %v515, %v646
    %v660 = vadd.f32 %v516, %v649
    %v661 = vadd.f32 %v517, %v654
    %vm662 = vcmask 1045504
    %v663 = vrot.slane %v98, 2
    %v664 = vrot.slane %v99, 2
    %v665 = vsel %vm662, %v663, %v664
    %v670 = vunpack.c.l.b16 %v58
    %v671 = vunpack.c.l.b16 %v59
    %v672 = vunpack.c.l.b16 %v60
    %v673 = vunpack.c.l.b16 %v61
    %v674 = vpack.c.b16 %v671, %v670
    %v675 = vpack.c.b16 %v673, %v672
    %v678 = vsel %vm127, %v665, 0
    %v681 = vsel %vm127, %v664, 0
    %v684 = vsel %vm134, %v675, 0
    %686 = vmatprep.subr.bf16.mxu0 0
    %687 = vmatpush1.bf16.msra.mxu0 0
    %688 = vmatprep.subr.bf16.mxu0 0
    %689 = vmatpush1.bf16.msra.mxu0 0
    %690 = vmatprep.subr.bf16.mxu0 0
    %691 = vmatpush1.bf16.msra.mxu0 0
    %692 = vmatprep.subr.bf16.mxu0 0
    %693 = vmatpush1.bf16.msra.mxu0 0
    %694 = vmatprep.subr.bf16.mxu0 0
    %695 = vmatpush1.bf16.msra.mxu0 0
    %696 = vmatprep.subr.bf16.mxu0 0
    %697 = vmatpush1.bf16.msra.mxu0 0
    %698 = vmatprep.subr.bf16.mxu0 0
    %699 = vmatpush1.bf16.msra.mxu0 %v684
    %700 = vmatprep.subr.bf16.mxu0 0
    %701 = vmatpush1.bf16.msra.mxu0 %v674
    %702 = vmatprep.subr.bf16.mxu0 0
    %703 = vmatpush2.bf16.msra.mxu0 0
    %704 = vmatprep.subr.bf16.mxu0 0
    %705 = vmatpush2.bf16.msra.mxu0 0
    %706 = vmatprep.subr.bf16.mxu0 0
    %707 = vmatpush2.bf16.msra.mxu0 0
    %708 = vmatprep.subr.bf16.mxu0 0
    %709 = vmatpush2.bf16.msra.mxu0 0
    %710 = vmatprep.subr.bf16.mxu0 0
    %711 = vmatpush2.bf16.msra.mxu0 0
    %712 = vmatprep.subr.bf16.mxu0 0
    %713 = vmatpush2.bf16.msra.mxu0 0
    %714 = vmatprep.subr.bf16.mxu0 0
    %715 = vmatpush2.bf16.msra.mxu0 0
    %716 = vmatprep.subr.bf16.mxu0 0
    %717 = vmatpush2.bf16.msra.mxu0 0
    %718 = vmatprep.mubr.bf16.mxu0 0
    %719 = vmatmul.mubr.bf16.gmra.mxu0 %v678
    %v720 = vpop.f32.mrf.mxu0
    %v721 = vadd.f32 0.0, %v720
    %v722 = vpop.f32.mrf.mxu0
    %v723 = vpop.f32.mrf.mxu0
    %v724 = vadd.f32 0.0, %v723
    %v725 = vpop.f32.mrf.mxu0
    %726 = vmatprep.mubr.bf16.mxu0 0
    %727 = vmatmul.mubr.bf16.gmra.mxu0 %v681
    %v728 = vpop.f32.mrf.mxu0
    %v729 = vadd.f32 0.0, %v728
    %v730 = vpop.f32.mrf.mxu0
    %v731 = vpop.f32.mrf.mxu0
    %v732 = vpop.f32.mrf.mxu0
    %733 = vdwg.mxu0
    %v734 = vadd.f32 %v594, %v721
    %v735 = vadd.f32 %v595, %v724
    %v736 = vadd.f32 %v596, %v729
    %v741 = vunpack.c.l.b16 %v82
    %v742 = vunpack.c.l.b16 %v83
    %v743 = vunpack.c.l.b16 %v84
    %v744 = vunpack.c.l.b16 %v85
    %v745 = vpack.c.b16 %v742, %v741
    %v746 = vpack.c.b16 %v744, %v743
    %v749 = vsel %vm134, %v746, 0
    %751 = vmatprep.subr.bf16.mxu0 0
    %752 = vmatpush1.bf16.msra.mxu0 0
    %753 = vmatprep.subr.bf16.mxu0 0
    %754 = vmatpush1.bf16.msra.mxu0 0
    %755 = vmatprep.subr.bf16.mxu0 0
    %756 = vmatpush1.bf16.msra.mxu0 0
    %757 = vmatprep.subr.bf16.mxu0 0
    %758 = vmatpush1.bf16.msra.mxu0 0
    %759 = vmatprep.subr.bf16.mxu0 0
    %760 = vmatpush1.bf16.msra.mxu0 0
    %761 = vmatprep.subr.bf16.mxu0 0
    %762 = vmatpush1.bf16.msra.mxu0 0
    %763 = vmatprep.subr.bf16.mxu0 0
    %764 = vmatpush1.bf16.msra.mxu0 %v749
    %765 = vmatprep.subr.bf16.mxu0 0
    %766 = vmatpush1.bf16.msra.mxu0 %v745
    %767 = vmatprep.subr.bf16.mxu0 0
    %768 = vmatpush2.bf16.msra.mxu0 0
    %769 = vmatprep.subr.bf16.mxu0 0
    %770 = vmatpush2.bf16.msra.mxu0 0
    %771 = vmatprep.subr.bf16.mxu0 0
    %772 = vmatpush2.bf16.msra.mxu0 0
    %773 = vmatprep.subr.bf16.mxu0 0
    %774 = vmatpush2.bf16.msra.mxu0 0
    %775 = vmatprep.subr.bf16.mxu0 0
    %776 = vmatpush2.bf16.msra.mxu0 0
    %777 = vmatprep.subr.bf16.mxu0 0
    %778 = vmatpush2.bf16.msra.mxu0 0
    %779 = vmatprep.subr.bf16.mxu0 0
    %780 = vmatpush2.bf16.msra.mxu0 0
    %781 = vmatprep.subr.bf16.mxu0 0
    %782 = vmatpush2.bf16.msra.mxu0 0
    %783 = vmatprep.mubr.bf16.mxu0 0
    %784 = vmatmul.mubr.bf16.gmra.mxu0 %v678
    %v785 = vpop.f32.mrf.mxu0
    %v786 = vadd.f32 0.0, %v785
    %v787 = vpop.f32.mrf.mxu0
    %v788 = vpop.f32.mrf.mxu0
    %v789 = vadd.f32 0.0, %v788
    %v790 = vpop.f32.mrf.mxu0
    %791 = vmatprep.mubr.bf16.mxu0 0
    %792 = vmatmul.mubr.bf16.gmra.mxu0 %v681
    %v793 = vpop.f32.mrf.mxu0
    %v794 = vadd.f32 0.0, %v793
    %v795 = vpop.f32.mrf.mxu0
    %v796 = vpop.f32.mrf.mxu0
    %v797 = vpop.f32.mrf.mxu0
    %798 = vdwg.mxu0
    %v799 = vadd.f32 %v659, %v786
    %v800 = vadd.f32 %v660, %v789
    %v801 = vadd.f32 %v661, %v794
    %v803 = vlaneseq
    %v804 = vshrl.u32 %v803, 7
    %v805 = vsub.s32 0, %v804
    %v806 = vrot.slane %v35, %v805
    %v808 = vadd.f32 %v734, %v806
    %v809 = vadd.f32 %v735, %v806
    %v810 = vadd.f32 %v736, %v806
    %v811 = vmax.f32 %v808, 0.0
    %v812 = vmax.f32 %v809, 0.0
    %v813 = vmax.f32 %v810, 0.0
    %v814 = vadd.f32 %v799, %v806
    %v815 = vadd.f32 %v800, %v806
    %v816 = vadd.f32 %v801, %v806
    %v817 = vmax.f32 %v814, 0.0
    %v818 = vmax.f32 %v815, 0.0
    %v819 = vmax.f32 %v816, 0.0
    %v820 = vmax.f32 %v811, %v817
    %v821 = vmax.f32 %v812, %v818
    %v822 = vmax.f32 %v813, %v819
    %vm826 = vcmask 1046528
    %v827 = vrot.slane %v820, 1
    %v828 = vrot.slane %v821, 1
    %v829 = vsel %vm826, %v827, %v828
    %v830 = vrot.slane %v822, 1
    %v831 = vsel %vm826, %v828, %v830
    %v835 = vmax.f32 %v820, %v829
    %v836 = vmax.f32 %v821, %v831
    %v837 = vmax.f32 %v822, %v830
    %v838 = vpack.c.bf16 %v836, %v835
    %v839 = vpack.c.bf16 %v837, %v837
    %v842 = vunpack.c.l.b16 %v36
    %v843 = vunpack.c.l.b16 %v37
    %v844 = vpack.c.b16 %v843, %v842
    %vm845 = vcmask 187392
    %v847 = vsel %vm845, %v844, 0
    %vm849 = vcmask 1042432
    %vm850 = vcmask 1043456
    %v851 = vsel %vm849, 4294967295, 65535
    %v852 = vsel %vm850, %v851, 0
    %v854 = vand.u32 %v839, %v852
    %856 = vmatprep.subr.bf16.mxu0 0
    %857 = vmatpush1.bf16.msra.mxu0 0
    %858 = vmatprep.subr.bf16.mxu0 0
    %859 = vmatpush1.bf16.msra.mxu0 0
    %860 = vmatprep.subr.bf16.mxu0 0
    %861 = vmatpush1.bf16.msra.mxu0 0
    %862 = vmatprep.subr.bf16.mxu0 0
    %863 = vmatpush1.bf16.msra.mxu0 0
    %864 = vmatprep.subr.bf16.mxu0 0
    %865 = vmatpush1.bf16.msra.mxu0 0
    %866 = vmatprep.subr.bf16.mxu0 0
    %867 = vmatpush1.bf16.msra.mxu0 0
    %868 = vmatprep.subr.bf16.mxu0 0
    %869 = vmatpush1.bf16.msra.mxu0 %v854
    %870 = vmatprep.subr.bf16.mxu0 0
    %871 = vmatpush1.bf16.msra.mxu0 %v838
    %872 = vmatprep.subr.bf16.mxu0 0
    %873 = vmatpush2.bf16.msra.mxu0 0
    %874 = vmatprep.subr.bf16.mxu0 0
    %875 = vmatpush2.bf16.msra.mxu0 0
    %876 = vmatprep.subr.bf16.mxu0 0
    %877 = vmatpush2.bf16.msra.mxu0 0
    %878 = vmatprep.subr.bf16.mxu0 0
    %879 = vmatpush2.bf16.msra.mxu0 0
    %880 = vmatprep.subr.bf16.mxu0 0
    %881 = vmatpush2.bf16.msra.mxu0 0
    %882 = vmatprep.subr.bf16.mxu0 0
    %883 = vmatpush2.bf16.msra.mxu0 0
    %884 = vmatprep.subr.bf16.mxu0 0
    %885 = vmatpush2.bf16.msra.mxu0 0
    %886 = vmatprep.subr.bf16.mxu0 0
    %887 = vmatpush2.bf16.msra.mxu0 0
    %888 = vmatprep.mubr.bf16.mxu0 0
    %889 = vmatmul.mubr.bf16.gmra.mxu0 %v847
    %v890 = vpop.f32.mrf.mxu0
    %v891 = vadd.f32 0.0, %v890
    %v892 = vpop.f32.mrf.mxu0
    %v893 = vpop.f32.mrf.mxu0
    %v894 = vadd.f32 0.0, %v893
    %v895 = vpop.f32.mrf.mxu0
    %896 = vdwg.mxu0
    %v897 = vpack.c.bf16 %v894, %v891
    %v899 = vunpack.c.l.b16 %v897
    %v900 = vunpack.c.h.b16 %v897
    %v901 = vpack.c.b16 %v899, %v899
    %v902 = vpack.c.b16 %v900, %v900
    %vm905 = vcmask 781312
    %906 = vst.msk [vmem:[%s5] sm:$0xf] %vm905, %v901
    %vm907 = vcmask 779264
    %908 = vst.msk [vmem:[%s5 + $0x4] sm:$0x3] %vm907, %v902
    %s909 = scalar_lea.vmem %s0, 16
    %v910 = vld [vmem:[%s909] sm:$0xf]
    %v911 = vld [vmem:[%s909 + $0x4] sm:$0xf]
    %v912 = vld [vmem:[%s909 + $0x8] sm:$0xf]
    %v913 = vld [vmem:[%s909 + $0xc] sm:$0x3]
    %v918 = vunpack.c.l.b16 %v910
    %v919 = vunpack.c.l.b16 %v911
    %v920 = vunpack.c.l.b16 %v912
    %v921 = vunpack.c.l.b16 %v913
    %v922 = vpack.c.b16 %v919, %v918
    %v923 = vpack.c.b16 %v921, %v920
    %v925 = vshrl.u32 %v922, 16
    %v927 = vshll.u32 %v922, 16
    %v929 = vrot.slane %v927, 1
    %v930 = vor.u32 %v925, %v929
    %v932 = vshll.u32 %v923, 16
    %v934 = vrot.slane %v932, 1
    %v935 = vsel %vm100, %v930, %v934
    %v936 = vshrl.u32 %v923, 16
    %v938 = vor.u32 %v936, %v934
    %v940 = vsel %vm127, %v935, 0
    %v943 = vsel %vm127, %v938, 0
    %945 = vmatprep.subr.bf16.mxu0 0
    %946 = vmatpush1.bf16.msra.mxu0 0
    %947 = vmatprep.subr.bf16.mxu0 0
    %948 = vmatpush1.bf16.msra.mxu0 0
    %949 = vmatprep.subr.bf16.mxu0 0
    %950 = vmatpush1.bf16.msra.mxu0 0
    %951 = vmatprep.subr.bf16.mxu0 0
    %952 = vmatpush1.bf16.msra.mxu0 0
    %953 = vmatprep.subr.bf16.mxu0 0
    %954 = vmatpush1.bf16.msra.mxu0 0
    %955 = vmatprep.subr.bf16.mxu0 0
    %956 = vmatpush1.bf16.msra.mxu0 0
    %957 = vmatprep.subr.bf16.mxu0 0
    %958 = vmatpush1.bf16.msra.mxu0 %v136
    %959 = vmatprep.subr.bf16.mxu0 0
    %960 = vmatpush1.bf16.msra.mxu0 %v124
    %961 = vmatprep.subr.bf16.mxu0 0
    %962 = vmatpush2.bf16.msra.mxu0 0
    %963 = vmatprep.subr.bf16.mxu0 0
    %964 = vmatpush2.bf16.msra.mxu0 0
    %965 = vmatprep.subr.bf16.mxu0 0
    %966 = vmatpush2.bf16.msra.mxu0 0
    %967 = vmatprep.subr.bf16.mxu0 0
    %968 = vmatpush2.bf16.msra.mxu0 0
    %969 = vmatprep.subr.bf16.mxu0 0
    %970 = vmatpush2.bf16.msra.mxu0 0
    %971 = vmatprep.subr.bf16.mxu0 0
    %972 = vmatpush2.bf16.msra.mxu0 0
    %973 = vmatprep.subr.bf16.mxu0 0
    %974 = vmatpush2.bf16.msra.mxu0 0
    %975 = vmatprep.subr.bf16.mxu0 0
    %976 = vmatpush2.bf16.msra.mxu0 0
    %977 = vmatprep.mubr.bf16.mxu0 0
    %978 = vmatmul.mubr.bf16.gmra.mxu0 %v940
    %v979 = vpop.f32.mrf.mxu0
    %v980 = vadd.f32 0.0, %v979
    %v981 = vpop.f32.mrf.mxu0
    %v982 = vpop.f32.mrf.mxu0
    %v983 = vadd.f32 0.0, %v982
    %v984 = vpop.f32.mrf.mxu0
    %985 = vmatprep.mubr.bf16.mxu0 0
    %986 = vmatmul.mubr.bf16.gmra.mxu0 %v943
    %v987 = vpop.f32.mrf.mxu0
    %v988 = vadd.f32 0.0, %v987
    %v989 = vpop.f32.mrf.mxu0
    %v990 = vpop.f32.mrf.mxu0
    %v991 = vpop.f32.mrf.mxu0
    %992 = vdwg.mxu0
    %v993 = vpack.c.b16 %v920, %v920
    %v994 = vsel %vm127, %v922, 0
    %v997 = vsel %vm127, %v993, 0
    %999 = vmatprep.subr.bf16.mxu0 0
    %1000 = vmatpush1.bf16.msra.mxu0 0
    %1001 = vmatprep.subr.bf16.mxu0 0
    %1002 = vmatpush1.bf16.msra.mxu0 0
    %1003 = vmatprep.subr.bf16.mxu0 0
    %1004 = vmatpush1.bf16.msra.mxu0 0
    %1005 = vmatprep.subr.bf16.mxu0 0
    %1006 = vmatpush1.bf16.msra.mxu0 0
    %1007 = vmatprep.subr.bf16.mxu0 0
    %1008 = vmatpush1.bf16.msra.mxu0 0
    %1009 = vmatprep.subr.bf16.mxu0 0
    %1010 = vmatpush1.bf16.msra.mxu0 0
    %1011 = vmatprep.subr.bf16.mxu0 0
    %1012 = vmatpush1.bf16.msra.mxu0 %v204
    %1013 = vmatprep.subr.bf16.mxu0 0
    %1014 = vmatpush1.bf16.msra.mxu0 %v195
    %1015 = vmatprep.subr.bf16.mxu0 0
    %1016 = vmatpush2.bf16.msra.mxu0 0
    %1017 = vmatprep.subr.bf16.mxu0 0
    %1018 = vmatpush2.bf16.msra.mxu0 0
    %1019 = vmatprep.subr.bf16.mxu0 0
    %1020 = vmatpush2.bf16.msra.mxu0 0
    %1021 = vmatprep.subr.bf16.mxu0 0
    %1022 = vmatpush2.bf16.msra.mxu0 0
    %1023 = vmatprep.subr.bf16.mxu0 0
    %1024 = vmatpush2.bf16.msra.mxu0 0
    %1025 = vmatprep.subr.bf16.mxu0 0
    %1026 = vmatpush2.bf16.msra.mxu0 0
    %1027 = vmatprep.subr.bf16.mxu0 0
    %1028 = vmatpush2.bf16.msra.mxu0 0
    %1029 = vmatprep.subr.bf16.mxu0 0
    %1030 = vmatpush2.bf16.msra.mxu0 0
    %1031 = vmatprep.mubr.bf16.mxu0 0
    %1032 = vmatmul.mubr.bf16.gmra.mxu0 %v994
    %v1033 = vpop.f32.mrf.mxu0
    %v1034 = vadd.f32 %v980, %v1033
    %v1035 = vpop.f32.mrf.mxu0
    %v1036 = vpop.f32.mrf.mxu0
    %v1037 = vadd.f32 %v983, %v1036
    %v1038 = vpop.f32.mrf.mxu0
    %1039 = vmatprep.mubr.bf16.mxu0 0
    %1040 = vmatmul.mubr.bf16.gmra.mxu0 %v997
    %v1041 = vpop.f32.mrf.mxu0
    %v1042 = vadd.f32 %v988, %v1041
    %v1043 = vpop.f32.mrf.mxu0
    %v1044 = vpop.f32.mrf.mxu0
    %v1045 = vpop.f32.mrf.mxu0
    %1046 = vdwg.mxu0
    %1047 = vmatprep.subr.bf16.mxu0 0
    %1048 = vmatpush1.bf16.msra.mxu0 0
    %1049 = vmatprep.subr.bf16.mxu0 0
    %1050 = vmatpush1.bf16.msra.mxu0 0
    %1051 = vmatprep.subr.bf16.mxu0 0
    %1052 = vmatpush1.bf16.msra.mxu0 0
    %1053 = vmatprep.subr.bf16.mxu0 0
    %1054 = vmatpush1.bf16.msra.mxu0 0
    %1055 = vmatprep.subr.bf16.mxu0 0
    %1056 = vmatpush1.bf16.msra.mxu0 0
    %1057 = vmatprep.subr.bf16.mxu0 0
    %1058 = vmatpush1.bf16.msra.mxu0 0
    %1059 = vmatprep.subr.bf16.mxu0 0
    %1060 = vmatpush1.bf16.msra.mxu0 %v266
    %1061 = vmatprep.subr.bf16.mxu0 0
    %1062 = vmatpush1.bf16.msra.mxu0 %v262
    %1063 = vmatprep.subr.bf16.mxu0 0
    %1064 = vmatpush2.bf16.msra.mxu0 0
    %1065 = vmatprep.subr.bf16.mxu0 0
    %1066 = vmatpush2.bf16.msra.mxu0 0
    %1067 = vmatprep.subr.bf16.mxu0 0
    %1068 = vmatpush2.bf16.msra.mxu0 0
    %1069 = vmatprep.subr.bf16.mxu0 0
    %1070 = vmatpush2.bf16.msra.mxu0 0
    %1071 = vmatprep.subr.bf16.mxu0 0
    %1072 = vmatpush2.bf16.msra.mxu0 0
    %1073 = vmatprep.subr.bf16.mxu0 0
    %1074 = vmatpush2.bf16.msra.mxu0 0
    %1075 = vmatprep.subr.bf16.mxu0 0
    %1076 = vmatpush2.bf16.msra.mxu0 0
    %1077 = vmatprep.subr.bf16.mxu0 0
    %1078 = vmatpush2.bf16.msra.mxu0 0
    %1079 = vmatprep.mubr.bf16.mxu0 0
    %1080 = vmatmul.mubr.bf16.gmra.mxu0 %v940
    %v1081 = vpop.f32.mrf.mxu0
    %v1082 = vadd.f32 0.0, %v1081
    %v1083 = vpop.f32.mrf.mxu0
    %v1084 = vpop.f32.mrf.mxu0
    %v1085 = vadd.f32 0.0, %v1084
    %v1086 = vpop.f32.mrf.mxu0
    %1087 = vmatprep.mubr.bf16.mxu0 0
    %1088 = vmatmul.mubr.bf16.gmra.mxu0 %v943
    %v1089 = vpop.f32.mrf.mxu0
    %v1090 = vadd.f32 0.0, %v1089
    %v1091 = vpop.f32.mrf.mxu0
    %v1092 = vpop.f32.mrf.mxu0
    %v1093 = vpop.f32.mrf.mxu0
    %1094 = vdwg.mxu0
    %1095 = vmatprep.subr.bf16.mxu0 0
    %1096 = vmatpush1.bf16.msra.mxu0 0
    %1097 = vmatprep.subr.bf16.mxu0 0
    %1098 = vmatpush1.bf16.msra.mxu0 0
    %1099 = vmatprep.subr.bf16.mxu0 0
    %1100 = vmatpush1.bf16.msra.mxu0 0
    %1101 = vmatprep.subr.bf16.mxu0 0
    %1102 = vmatpush1.bf16.msra.mxu0 0
    %1103 = vmatprep.subr.bf16.mxu0 0
    %1104 = vmatpush1.bf16.msra.mxu0 0
    %1105 = vmatprep.subr.bf16.mxu0 0
    %1106 = vmatpush1.bf16.msra.mxu0 0
    %1107 = vmatprep.subr.bf16.mxu0 0
    %1108 = vmatpush1.bf16.msra.mxu0 %v328
    %1109 = vmatprep.subr.bf16.mxu0 0
    %1110 = vmatpush1.bf16.msra.mxu0 %v324
    %1111 = vmatprep.subr.bf16.mxu0 0
    %1112 = vmatpush2.bf16.msra.mxu0 0
    %1113 = vmatprep.subr.bf16.mxu0 0
    %1114 = vmatpush2.bf16.msra.mxu0 0
    %1115 = vmatprep.subr.bf16.mxu0 0
    %1116 = vmatpush2.bf16.msra.mxu0 0
    %1117 = vmatprep.subr.bf16.mxu0 0
    %1118 = vmatpush2.bf16.msra.mxu0 0
    %1119 = vmatprep.subr.bf16.mxu0 0
    %1120 = vmatpush2.bf16.msra.mxu0 0
    %1121 = vmatprep.subr.bf16.mxu0 0
    %1122 = vmatpush2.bf16.msra.mxu0 0
    %1123 = vmatprep.subr.bf16.mxu0 0
    %1124 = vmatpush2.bf16.msra.mxu0 0
    %1125 = vmatprep.subr.bf16.mxu0 0
    %1126 = vmatpush2.bf16.msra.mxu0 0
    %1127 = vmatprep.mubr.bf16.mxu0 0
    %1128 = vmatmul.mubr.bf16.gmra.mxu0 %v994
    %v1129 = vpop.f32.mrf.mxu0
    %v1130 = vadd.f32 %v1082, %v1129
    %v1131 = vpop.f32.mrf.mxu0
    %v1132 = vpop.f32.mrf.mxu0
    %v1133 = vadd.f32 %v1085, %v1132
    %v1134 = vpop.f32.mrf.mxu0
    %1135 = vmatprep.mubr.bf16.mxu0 0
    %1136 = vmatmul.mubr.bf16.gmra.mxu0 %v997
    %v1137 = vpop.f32.mrf.mxu0
    %v1138 = vadd.f32 %v1090, %v1137
    %v1139 = vpop.f32.mrf.mxu0
    %v1140 = vpop.f32.mrf.mxu0
    %v1141 = vpop.f32.mrf.mxu0
    %1142 = vdwg.mxu0
    %v1143 = vrot.slane %v922, 1
    %v1144 = vrot.slane %v923, 1
    %v1145 = vsel %vm378, %v1143, %v1144
    %v1147 = vsel %vm127, %v1145, 0
    %v1150 = vsel %vm127, %v1144, 0
    %1152 = vmatprep.subr.bf16.mxu0 0
    %1153 = vmatpush1.bf16.msra.mxu0 0
    %1154 = vmatprep.subr.bf16.mxu0 0
    %1155 = vmatpush1.bf16.msra.mxu0 0
    %1156 = vmatprep.subr.bf16.mxu0 0
    %1157 = vmatpush1.bf16.msra.mxu0 0
    %1158 = vmatprep.subr.bf16.mxu0 0
    %1159 = vmatpush1.bf16.msra.mxu0 0
    %1160 = vmatprep.subr.bf16.mxu0 0
    %1161 = vmatpush1.bf16.msra.mxu0 0
    %1162 = vmatprep.subr.bf16.mxu0 0
    %1163 = vmatpush1.bf16.msra.mxu0 0
    %1164 = vmatprep.subr.bf16.mxu0 0
    %1165 = vmatpush1.bf16.msra.mxu0 %v400
    %1166 = vmatprep.subr.bf16.mxu0 0
    %1167 = vmatpush1.bf16.msra.mxu0 %v390
    %1168 = vmatprep.subr.bf16.mxu0 0
    %1169 = vmatpush2.bf16.msra.mxu0 0
    %1170 = vmatprep.subr.bf16.mxu0 0
    %1171 = vmatpush2.bf16.msra.mxu0 0
    %1172 = vmatprep.subr.bf16.mxu0 0
    %1173 = vmatpush2.bf16.msra.mxu0 0
    %1174 = vmatprep.subr.bf16.mxu0 0
    %1175 = vmatpush2.bf16.msra.mxu0 0
    %1176 = vmatprep.subr.bf16.mxu0 0
    %1177 = vmatpush2.bf16.msra.mxu0 0
    %1178 = vmatprep.subr.bf16.mxu0 0
    %1179 = vmatpush2.bf16.msra.mxu0 0
    %1180 = vmatprep.subr.bf16.mxu0 0
    %1181 = vmatpush2.bf16.msra.mxu0 0
    %1182 = vmatprep.subr.bf16.mxu0 0
    %1183 = vmatpush2.bf16.msra.mxu0 0
    %1184 = vmatprep.mubr.bf16.mxu0 0
    %1185 = vmatmul.mubr.bf16.gmra.mxu0 %v1147
    %v1186 = vpop.f32.mrf.mxu0
    %v1187 = vadd.f32 0.0, %v1186
    %v1188 = vpop.f32.mrf.mxu0
    %v1189 = vpop.f32.mrf.mxu0
    %v1190 = vadd.f32 0.0, %v1189
    %v1191 = vpop.f32.mrf.mxu0
    %1192 = vmatprep.mubr.bf16.mxu0 0
    %1193 = vmatmul.mubr.bf16.gmra.mxu0 %v1150
    %v1194 = vpop.f32.mrf.mxu0
    %v1195 = vadd.f32 0.0, %v1194
    %v1196 = vpop.f32.mrf.mxu0
    %v1197 = vpop.f32.mrf.mxu0
    %v1198 = vpop.f32.mrf.mxu0
    %1199 = vdwg.mxu0
    %v1200 = vadd.f32 %v1034, %v1187
    %v1201 = vadd.f32 %v1037, %v1190
    %v1202 = vadd.f32 %v1042, %v1195
    %1203 = vmatprep.subr.bf16.mxu0 0
    %1204 = vmatpush1.bf16.msra.mxu0 0
    %1205 = vmatprep.subr.bf16.mxu0 0
    %1206 = vmatpush1.bf16.msra.mxu0 0
    %1207 = vmatprep.subr.bf16.mxu0 0
    %1208 = vmatpush1.bf16.msra.mxu0 0
    %1209 = vmatprep.subr.bf16.mxu0 0
    %1210 = vmatpush1.bf16.msra.mxu0 0
    %1211 = vmatprep.subr.bf16.mxu0 0
    %1212 = vmatpush1.bf16.msra.mxu0 0
    %1213 = vmatprep.subr.bf16.mxu0 0
    %1214 = vmatpush1.bf16.msra.mxu0 0
    %1215 = vmatprep.subr.bf16.mxu0 0
    %1216 = vmatpush1.bf16.msra.mxu0 %v465
    %1217 = vmatprep.subr.bf16.mxu0 0
    %1218 = vmatpush1.bf16.msra.mxu0 %v461
    %1219 = vmatprep.subr.bf16.mxu0 0
    %1220 = vmatpush2.bf16.msra.mxu0 0
    %1221 = vmatprep.subr.bf16.mxu0 0
    %1222 = vmatpush2.bf16.msra.mxu0 0
    %1223 = vmatprep.subr.bf16.mxu0 0
    %1224 = vmatpush2.bf16.msra.mxu0 0
    %1225 = vmatprep.subr.bf16.mxu0 0
    %1226 = vmatpush2.bf16.msra.mxu0 0
    %1227 = vmatprep.subr.bf16.mxu0 0
    %1228 = vmatpush2.bf16.msra.mxu0 0
    %1229 = vmatprep.subr.bf16.mxu0 0
    %1230 = vmatpush2.bf16.msra.mxu0 0
    %1231 = vmatprep.subr.bf16.mxu0 0
    %1232 = vmatpush2.bf16.msra.mxu0 0
    %1233 = vmatprep.subr.bf16.mxu0 0
    %1234 = vmatpush2.bf16.msra.mxu0 0
    %1235 = vmatprep.mubr.bf16.mxu0 0
    %1236 = vmatmul.mubr.bf16.gmra.mxu0 %v1147
    %v1237 = vpop.f32.mrf.mxu0
    %v1238 = vadd.f32 0.0, %v1237
    %v1239 = vpop.f32.mrf.mxu0
    %v1240 = vpop.f32.mrf.mxu0
    %v1241 = vadd.f32 0.0, %v1240
    %v1242 = vpop.f32.mrf.mxu0
    %1243 = vmatprep.mubr.bf16.mxu0 0
    %1244 = vmatmul.mubr.bf16.gmra.mxu0 %v1150
    %v1245 = vpop.f32.mrf.mxu0
    %v1246 = vadd.f32 0.0, %v1245
    %v1247 = vpop.f32.mrf.mxu0
    %v1248 = vpop.f32.mrf.mxu0
    %v1249 = vpop.f32.mrf.mxu0
    %1250 = vdwg.mxu0
    %v1251 = vadd.f32 %v1130, %v1238
    %v1252 = vadd.f32 %v1133, %v1241
    %v1253 = vadd.f32 %v1138, %v1246
    %v1254 = vrot.slane %v925, 1
    %v1255 = vrot.slane %v927, 2
    %v1256 = vor.u32 %v1254, %v1255
    %v1257 = vrot.slane %v936, 1
    %v1258 = vrot.slane %v932, 2
    %v1259 = vor.u32 %v1257, %v1258
    %v1260 = vsel %vm518, %v1256, %v1259
    %v1262 = vsel %vm127, %v1260, 0
    %v1265 = vsel %vm127, %v1259, 0
    %1267 = vmatprep.subr.bf16.mxu0 0
    %1268 = vmatpush1.bf16.msra.mxu0 0
    %1269 = vmatprep.subr.bf16.mxu0 0
    %1270 = vmatpush1.bf16.msra.mxu0 0
    %1271 = vmatprep.subr.bf16.mxu0 0
    %1272 = vmatpush1.bf16.msra.mxu0 0
    %1273 = vmatprep.subr.bf16.mxu0 0
    %1274 = vmatpush1.bf16.msra.mxu0 0
    %1275 = vmatprep.subr.bf16.mxu0 0
    %1276 = vmatpush1.bf16.msra.mxu0 0
    %1277 = vmatprep.subr.bf16.mxu0 0
    %1278 = vmatpush1.bf16.msra.mxu0 0
    %1279 = vmatprep.subr.bf16.mxu0 0
    %1280 = vmatpush1.bf16.msra.mxu0 %v544
    %1281 = vmatprep.subr.bf16.mxu0 0
    %1282 = vmatpush1.bf16.msra.mxu0 %v534
    %1283 = vmatprep.subr.bf16.mxu0 0
    %1284 = vmatpush2.bf16.msra.mxu0 0
    %1285 = vmatprep.subr.bf16.mxu0 0
    %1286 = vmatpush2.bf16.msra.mxu0 0
    %1287 = vmatprep.subr.bf16.mxu0 0
    %1288 = vmatpush2.bf16.msra.mxu0 0
    %1289 = vmatprep.subr.bf16.mxu0 0
    %1290 = vmatpush2.bf16.msra.mxu0 0
    %1291 = vmatprep.subr.bf16.mxu0 0
    %1292 = vmatpush2.bf16.msra.mxu0 0
    %1293 = vmatprep.subr.bf16.mxu0 0
    %1294 = vmatpush2.bf16.msra.mxu0 0
    %1295 = vmatprep.subr.bf16.mxu0 0
    %1296 = vmatpush2.bf16.msra.mxu0 0
    %1297 = vmatprep.subr.bf16.mxu0 0
    %1298 = vmatpush2.bf16.msra.mxu0 0
    %1299 = vmatprep.mubr.bf16.mxu0 0
    %1300 = vmatmul.mubr.bf16.gmra.mxu0 %v1262
    %v1301 = vpop.f32.mrf.mxu0
    %v1302 = vadd.f32 0.0, %v1301
    %v1303 = vpop.f32.mrf.mxu0
    %v1304 = vpop.f32.mrf.mxu0
    %v1305 = vadd.f32 0.0, %v1304
    %v1306 = vpop.f32.mrf.mxu0
    %1307 = vmatprep.mubr.bf16.mxu0 0
    %1308 = vmatmul.mubr.bf16.gmra.mxu0 %v1265
    %v1309 = vpop.f32.mrf.mxu0
    %v1310 = vadd.f32 0.0, %v1309
    %v1311 = vpop.f32.mrf.mxu0
    %v1312 = vpop.f32.mrf.mxu0
    %v1313 = vpop.f32.mrf.mxu0
    %1314 = vdwg.mxu0
    %v1315 = vadd.f32 %v1200, %v1302
    %v1316 = vadd.f32 %v1201, %v1305
    %v1317 = vadd.f32 %v1202, %v1310
    %1318 = vmatprep.subr.bf16.mxu0 0
    %1319 = vmatpush1.bf16.msra.mxu0 0
    %1320 = vmatprep.subr.bf16.mxu0 0
    %1321 = vmatpush1.bf16.msra.mxu0 0
    %1322 = vmatprep.subr.bf16.mxu0 0
    %1323 = vmatpush1.bf16.msra.mxu0 0
    %1324 = vmatprep.subr.bf16.mxu0 0
    %1325 = vmatpush1.bf16.msra.mxu0 0
    %1326 = vmatprep.subr.bf16.mxu0 0
    %1327 = vmatpush1.bf16.msra.mxu0 0
    %1328 = vmatprep.subr.bf16.mxu0 0
    %1329 = vmatpush1.bf16.msra.mxu0 0
    %1330 = vmatprep.subr.bf16.mxu0 0
    %1331 = vmatpush1.bf16.msra.mxu0 %v609
    %1332 = vmatprep.subr.bf16.mxu0 0
    %1333 = vmatpush1.bf16.msra.mxu0 %v605
    %1334 = vmatprep.subr.bf16.mxu0 0
    %1335 = vmatpush2.bf16.msra.mxu0 0
    %1336 = vmatprep.subr.bf16.mxu0 0
    %1337 = vmatpush2.bf16.msra.mxu0 0
    %1338 = vmatprep.subr.bf16.mxu0 0
    %1339 = vmatpush2.bf16.msra.mxu0 0
    %1340 = vmatprep.subr.bf16.mxu0 0
    %1341 = vmatpush2.bf16.msra.mxu0 0
    %1342 = vmatprep.subr.bf16.mxu0 0
    %1343 = vmatpush2.bf16.msra.mxu0 0
    %1344 = vmatprep.subr.bf16.mxu0 0
    %1345 = vmatpush2.bf16.msra.mxu0 0
    %1346 = vmatprep.subr.bf16.mxu0 0
    %1347 = vmatpush2.bf16.msra.mxu0 0
    %1348 = vmatprep.subr.bf16.mxu0 0
    %1349 = vmatpush2.bf16.msra.mxu0 0
    %1350 = vmatprep.mubr.bf16.mxu0 0
    %1351 = vmatmul.mubr.bf16.gmra.mxu0 %v1262
    %v1352 = vpop.f32.mrf.mxu0
    %v1353 = vadd.f32 0.0, %v1352
    %v1354 = vpop.f32.mrf.mxu0
    %v1355 = vpop.f32.mrf.mxu0
    %v1356 = vadd.f32 0.0, %v1355
    %v1357 = vpop.f32.mrf.mxu0
    %1358 = vmatprep.mubr.bf16.mxu0 0
    %1359 = vmatmul.mubr.bf16.gmra.mxu0 %v1265
    %v1360 = vpop.f32.mrf.mxu0
    %v1361 = vadd.f32 0.0, %v1360
    %v1362 = vpop.f32.mrf.mxu0
    %v1363 = vpop.f32.mrf.mxu0
    %v1364 = vpop.f32.mrf.mxu0
    %1365 = vdwg.mxu0
    %v1366 = vadd.f32 %v1251, %v1353
    %v1367 = vadd.f32 %v1252, %v1356
    %v1368 = vadd.f32 %v1253, %v1361
    %v1369 = vrot.slane %v922, 2
    %v1370 = vrot.slane %v923, 2
    %v1371 = vsel %vm662, %v1369, %v1370
    %v1373 = vsel %vm127, %v1371, 0
    %v1376 = vsel %vm127, %v1370, 0
    %1378 = vmatprep.subr.bf16.mxu0 0
    %1379 = vmatpush1.bf16.msra.mxu0 0
    %1380 = vmatprep.subr.bf16.mxu0 0
    %1381 = vmatpush1.bf16.msra.mxu0 0
    %1382 = vmatprep.subr.bf16.mxu0 0
    %1383 = vmatpush1.bf16.msra.mxu0 0
    %1384 = vmatprep.subr.bf16.mxu0 0
    %1385 = vmatpush1.bf16.msra.mxu0 0
    %1386 = vmatprep.subr.bf16.mxu0 0
    %1387 = vmatpush1.bf16.msra.mxu0 0
    %1388 = vmatprep.subr.bf16.mxu0 0
    %1389 = vmatpush1.bf16.msra.mxu0 0
    %1390 = vmatprep.subr.bf16.mxu0 0
    %1391 = vmatpush1.bf16.msra.mxu0 %v684
    %1392 = vmatprep.subr.bf16.mxu0 0
    %1393 = vmatpush1.bf16.msra.mxu0 %v674
    %1394 = vmatprep.subr.bf16.mxu0 0
    %1395 = vmatpush2.bf16.msra.mxu0 0
    %1396 = vmatprep.subr.bf16.mxu0 0
    %1397 = vmatpush2.bf16.msra.mxu0 0
    %1398 = vmatprep.subr.bf16.mxu0 0
    %1399 = vmatpush2.bf16.msra.mxu0 0
    %1400 = vmatprep.subr.bf16.mxu0 0
    %1401 = vmatpush2.bf16.msra.mxu0 0
    %1402 = vmatprep.subr.bf16.mxu0 0
    %1403 = vmatpush2.bf16.msra.mxu0 0
    %1404 = vmatprep.subr.bf16.mxu0 0
    %1405 = vmatpush2.bf16.msra.mxu0 0
    %1406 = vmatprep.subr.bf16.mxu0 0
    %1407 = vmatpush2.bf16.msra.mxu0 0
    %1408 = vmatprep.subr.bf16.mxu0 0
    %1409 = vmatpush2.bf16.msra.mxu0 0
    %1410 = vmatprep.mubr.bf16.mxu0 0
    %1411 = vmatmul.mubr.bf16.gmra.mxu0 %v1373
    %v1412 = vpop.f32.mrf.mxu0
    %v1413 = vadd.f32 0.0, %v1412
    %v1414 = vpop.f32.mrf.mxu0
    %v1415 = vpop.f32.mrf.mxu0
    %v1416 = vadd.f32 0.0, %v1415
    %v1417 = vpop.f32.mrf.mxu0
    %1418 = vmatprep.mubr.bf16.mxu0 0
    %1419 = vmatmul.mubr.bf16.gmra.mxu0 %v1376
    %v1420 = vpop.f32.mrf.mxu0
    %v1421 = vadd.f32 0.0, %v1420
    %v1422 = vpop.f32.mrf.mxu0
    %v1423 = vpop.f32.mrf.mxu0
    %v1424 = vpop.f32.mrf.mxu0
    %1425 = vdwg.mxu0
    %v1426 = vadd.f32 %v1315, %v1413
    %v1427 = vadd.f32 %v1316, %v1416
    %v1428 = vadd.f32 %v1317, %v1421
    %1429 = vmatprep.subr.bf16.mxu0 0
    %1430 = vmatpush1.bf16.msra.mxu0 0
    %1431 = vmatprep.subr.bf16.mxu0 0
    %1432 = vmatpush1.bf16.msra.mxu0 0
    %1433 = vmatprep.subr.bf16.mxu0 0
    %1434 = vmatpush1.bf16.msra.mxu0 0
    %1435 = vmatprep.subr.bf16.mxu0 0
    %1436 = vmatpush1.bf16.msra.mxu0 0
    %1437 = vmatprep.subr.bf16.mxu0 0
    %1438 = vmatpush1.bf16.msra.mxu0 0
    %1439 = vmatprep.subr.bf16.mxu0 0
    %1440 = vmatpush1.bf16.msra.mxu0 0
    %1441 = vmatprep.subr.bf16.mxu0 0
    %1442 = vmatpush1.bf16.msra.mxu0 %v749
    %1443 = vmatprep.subr.bf16.mxu0 0
    %1444 = vmatpush1.bf16.msra.mxu0 %v745
    %1445 = vmatprep.subr.bf16.mxu0 0
    %1446 = vmatpush2.bf16.msra.mxu0 0
    %1447 = vmatprep.subr.bf16.mxu0 0
    %1448 = vmatpush2.bf16.msra.mxu0 0
    %1449 = vmatprep.subr.bf16.mxu0 0
    %1450 = vmatpush2.bf16.msra.mxu0 0
    %1451 = vmatprep.subr.bf16.mxu0 0
    %1452 = vmatpush2.bf16.msra.mxu0 0
    %1453 = vmatprep.subr.bf16.mxu0 0
    %1454 = vmatpush2.bf16.msra.mxu0 0
    %1455 = vmatprep.subr.bf16.mxu0 0
    %1456 = vmatpush2.bf16.msra.mxu0 0
    %1457 = vmatprep.subr.bf16.mxu0 0
    %1458 = vmatpush2.bf16.msra.mxu0 0
    %1459 = vmatprep.subr.bf16.mxu0 0
    %1460 = vmatpush2.bf16.msra.mxu0 0
    %1461 = vmatprep.mubr.bf16.mxu0 0
    %1462 = vmatmul.mubr.bf16.gmra.mxu0 %v1373
    %v1463 = vpop.f32.mrf.mxu0
    %v1464 = vadd.f32 0.0, %v1463
    %v1465 = vpop.f32.mrf.mxu0
    %v1466 = vpop.f32.mrf.mxu0
    %v1467 = vadd.f32 0.0, %v1466
    %v1468 = vpop.f32.mrf.mxu0
    %1469 = vmatprep.mubr.bf16.mxu0 0
    %1470 = vmatmul.mubr.bf16.gmra.mxu0 %v1376
    %v1471 = vpop.f32.mrf.mxu0
    %v1472 = vadd.f32 0.0, %v1471
    %v1473 = vpop.f32.mrf.mxu0
    %v1474 = vpop.f32.mrf.mxu0
    %v1475 = vpop.f32.mrf.mxu0
    %1476 = vdwg.mxu0
    %v1477 = vadd.f32 %v1366, %v1464
    %v1478 = vadd.f32 %v1367, %v1467
    %v1479 = vadd.f32 %v1368, %v1472
    %v1480 = vadd.f32 %v1426, %v806
    %v1481 = vadd.f32 %v1427, %v806
    %v1482 = vadd.f32 %v1428, %v806
    %v1483 = vmax.f32 %v1480, 0.0
    %v1484 = vmax.f32 %v1481, 0.0
    %v1485 = vmax.f32 %v1482, 0.0
    %v1486 = vadd.f32 %v1477, %v806
    %v1487 = vadd.f32 %v1478, %v806
    %v1488 = vadd.f32 %v1479, %v806
    %v1489 = vmax.f32 %v1486, 0.0
    %v1490 = vmax.f32 %v1487, 0.0
    %v1491 = vmax.f32 %v1488, 0.0
    %v1492 = vmax.f32 %v1483, %v1489
    %v1493 = vmax.f32 %v1484, %v1490
    %v1494 = vmax.f32 %v1485, %v1491
    %v1498 = vrot.slane %v1492, 1
    %v1499 = vrot.slane %v1493, 1
    %v1500 = vsel %vm826, %v1498, %v1499
    %v1501 = vrot.slane %v1494, 1
    %v1502 = vsel %vm826, %v1499, %v1501
    %v1506 = vmax.f32 %v1492, %v1500
    %v1507 = vmax.f32 %v1493, %v1502
    %v1508 = vmax.f32 %v1494, %v1501
    %v1509 = vpack.c.bf16 %v1507, %v1506
    %v1510 = vpack.c.bf16 %v1508, %v1508
    %v1512 = vand.u32 %v1510, %v852
    %1514 = vmatprep.subr.bf16.mxu0 0
    %1515 = vmatpush1.bf16.msra.mxu0 0
    %1516 = vmatprep.subr.bf16.mxu0 0
    %1517 = vmatpush1.bf16.msra.mxu0 0
    %1518 = vmatprep.subr.bf16.mxu0 0
    %1519 = vmatpush1.bf16.msra.mxu0 0
    %1520 = vmatprep.subr.bf16.mxu0 0
    %1521 = vmatpush1.bf16.msra.mxu0 0
    %1522 = vmatprep.subr.bf16.mxu0 0
    %1523 = vmatpush1.bf16.msra.mxu0 0
    %1524 = vmatprep.subr.bf16.mxu0 0
    %1525 = vmatpush1.bf16.msra.mxu0 0
    %1526 = vmatprep.subr.bf16.mxu0 0
    %1527 = vmatpush1.bf16.msra.mxu0 %v1512
    %1528 = vmatprep.subr.bf16.mxu0 0
    %1529 = vmatpush1.bf16.msra.mxu0 %v1509
    %1530 = vmatprep.subr.bf16.mxu0 0
    %1531 = vmatpush2.bf16.msra.mxu0 0
    %1532 = vmatprep.subr.bf16.mxu0 0
    %1533 = vmatpush2.bf16.msra.mxu0 0
    %1534 = vmatprep.subr.bf16.mxu0 0
    %1535 = vmatpush2.bf16.msra.mxu0 0
    %1536 = vmatprep.subr.bf16.mxu0 0
    %1537 = vmatpush2.bf16.msra.mxu0 0
    %1538 = vmatprep.subr.bf16.mxu0 0
    %1539 = vmatpush2.bf16.msra.mxu0 0
    %1540 = vmatprep.subr.bf16.mxu0 0
    %1541 = vmatpush2.bf16.msra.mxu0 0
    %1542 = vmatprep.subr.bf16.mxu0 0
    %1543 = vmatpush2.bf16.msra.mxu0 0
    %1544 = vmatprep.subr.bf16.mxu0 0
    %1545 = vmatpush2.bf16.msra.mxu0 0
    %1546 = vmatprep.mubr.bf16.mxu0 0
    %1547 = vmatmul.mubr.bf16.gmra.mxu0 %v847
    %v1548 = vpop.f32.mrf.mxu0
    %v1549 = vadd.f32 0.0, %v1548
    %v1550 = vpop.f32.mrf.mxu0
    %v1551 = vpop.f32.mrf.mxu0
    %v1552 = vadd.f32 0.0, %v1551
    %v1553 = vpop.f32.mrf.mxu0
    %1554 = vdwg.mxu0
    %v1555 = vpack.c.bf16 %v1552, %v1549
    %v1557 = vunpack.c.l.b16 %v1555
    %v1558 = vunpack.c.h.b16 %v1555
    %v1559 = vpack.c.b16 %v1557, %v1557
    %v1560 = vpack.c.b16 %v1558, %v1558
    %s1563 = scalar_lea.vmem %s5, 8
    %1564 = vst.msk [vmem:[%s1563] sm:$0xf] %vm905, %v1559
    %1565 = vst.msk [vmem:[%s1563 + $0x4] sm:$0x3] %vm907, %v1560
    // Predicated region
    $region26: #{simple_cnn_forward.3} parent=1 // pred_check
      _
    $region27: #{simple_cnn_forward.3} parent=1 // pred_check_branch
      %1567 = sbr.rel (0) target = $region29
    $region28: #{simple_cnn_forward.3} parent=1 // pred_region
      _
    $region29: #{simple_cnn_forward.3} parent=1 // pred_fallthru
      _
    // Predicated region
    $region30: #{simple_cnn_forward.3} parent=1 // pred_check
      _
    $region31: #{simple_cnn_forward.3} parent=1 // pred_check_branch
      %1569 = sbr.rel (0) target = $region33
    $region32: #{simple_cnn_forward.3} parent=1 // pred_region
      _
    $region33: #{simple_cnn_forward.3} parent=1 // pred_fallthru
      _
    %1570 = vsyncpa [#allocation3], 1

// kernel: simple_cnn_forward.4
$region0: #{simple_cnn_forward.4}
  #allocation0 [shape = 'u32[]', space=smem, size = 0x4, offset = 0x4, fixed_abs, tag = 'smem constant byte address 0x4 - core index']
  #allocation1 [shape = 'u32[144,128]{1,0:T(1,128)}', space=vmem, size = 0x12000, scoped, tag = 'internal scratch']
  %s0 = inlined_call_operand.vmem [shape: bf16[2,12,96], index: 0, kind: input, shape index: {}]
  %s1 = inlined_call_operand.vmem [shape: bf16[5,96,64], index: 1, kind: input, shape index: {}]
  %s2 = inlined_call_operand.vmem [shape: bf16[5,96,64], index: 2, kind: input, shape index: {}]
  %s3 = inlined_call_operand.vmem [shape: f32[1,64], index: 3, kind: input, shape index: {}]
  %s4 = inlined_call_operand.vmem [shape: bf16[4,7], index: 4, kind: input, shape index: {}]
  %s5 = inlined_call_operand.vmem [shape: bf16[2,4,64], index: 5, kind: output, shape index: {}]
  %s6 = sld [smem:[#allocation0]]
  $region30: #{simple_cnn_forward.4} parent=0
    _
  %s8 = ssub.s32 1, %s6
  %s9 = scalar_select 0, %s8, %s6
  // Predicated region
  $region2: #{simple_cnn_forward.4} parent=0 // pred_check
    _
  $region3: #{simple_cnn_forward.4} parent=0 // pred_check_branch
    %11 = sbr.rel (0) target = $region5
  $region4: #{simple_cnn_forward.4} parent=0 // pred_region
    _
  $region5: #{simple_cnn_forward.4} parent=0 // pred_fallthru
    _
  // Predicated region
  $region6: #{simple_cnn_forward.4} parent=0 // pred_check
    _
  $region7: #{simple_cnn_forward.4} parent=0 // pred_check_branch
    %13 = sbr.rel (0) target = $region9
  $region8: #{simple_cnn_forward.4} parent=0 // pred_region
    _
  $region9: #{simple_cnn_forward.4} parent=0 // pred_fallthru
    _
  // Predicated region
  $region10: #{simple_cnn_forward.4} parent=0 // pred_check
    _
  $region11: #{simple_cnn_forward.4} parent=0 // pred_check_branch
    %15 = sbr.rel (0) target = $region13
  $region12: #{simple_cnn_forward.4} parent=0 // pred_region
    _
  $region13: #{simple_cnn_forward.4} parent=0 // pred_fallthru
    _
  // Predicated region
  $region14: #{simple_cnn_forward.4} parent=0 // pred_check
    _
  $region15: #{simple_cnn_forward.4} parent=0 // pred_check_branch
    %17 = sbr.rel (0) target = $region17
  $region16: #{simple_cnn_forward.4} parent=0 // pred_region
    _
  $region17: #{simple_cnn_forward.4} parent=0 // pred_fallthru
    _
  // Predicated region
  $region18: #{simple_cnn_forward.4} parent=0 // pred_check
    _
  $region19: #{simple_cnn_forward.4} parent=0 // pred_check_branch
    %19 = sbr.rel (0) target = $region21
  $region20: #{simple_cnn_forward.4} parent=0 // pred_region
    _
  $region21: #{simple_cnn_forward.4} parent=0 // pred_fallthru
    _
  %v21 = vld [vmem:[%s3] sm:$0x1]
  %v22 = vld [vmem:[%s4] sm:$0x3]
  %v23 = vld [vmem:[%s1] sm:$0xf]
  %v24 = vld [vmem:[%s1 + $0x4] sm:$0xf]
  %v25 = vld [vmem:[%s1 + $0x8] sm:$0xf]
  %v26 = vld [vmem:[%s1 + $0xc] sm:$0xf]
  %v27 = vld [vmem:[%s1 + $0x10] sm:$0xf]
  %v28 = vld [vmem:[%s1 + $0x14] sm:$0xf]
  %v29 = vld [vmem:[%s1 + $0x18] sm:$0xf]
  %v30 = vld [vmem:[%s1 + $0x1c] sm:$0xf]
  %v31 = vld [vmem:[%s1 + $0x20] sm:$0xf]
  %v32 = vld [vmem:[%s1 + $0x24] sm:$0xf]
  %v33 = vld [vmem:[%s1 + $0x28] sm:$0xf]
  %v34 = vld [vmem:[%s1 + $0x2c] sm:$0xf]
  %s35 = scalar_lea.vmem %s1, 48
  %v36 = vld [vmem:[%s35] sm:$0xf]
  %v37 = vld [vmem:[%s35 + $0x4] sm:$0xf]
  %v38 = vld [vmem:[%s35 + $0x8] sm:$0xf]
  %v39 = vld [vmem:[%s35 + $0xc] sm:$0xf]
  %v40 = vld [vmem:[%s35 + $0x10] sm:$0xf]
  %v41 = vld [vmem:[%s35 + $0x14] sm:$0xf]
  %v42 = vld [vmem:[%s35 + $0x18] sm:$0xf]
  %v43 = vld [vmem:[%s35 + $0x1c] sm:$0xf]
  %v44 = vld [vmem:[%s35 + $0x20] sm:$0xf]
  %v45 = vld [vmem:[%s35 + $0x24] sm:$0xf]
  %v46 = vld [vmem:[%s35 + $0x28] sm:$0xf]
  %v47 = vld [vmem:[%s35 + $0x2c] sm:$0xf]
  %s48 = scalar_lea.vmem %s1, 96
  %v49 = vld [vmem:[%s48] sm:$0xf]
  %v50 = vld [vmem:[%s48 + $0x4] sm:$0xf]
  %v51 = vld [vmem:[%s48 + $0x8] sm:$0xf]
  %v52 = vld [vmem:[%s48 + $0xc] sm:$0xf]
  %v53 = vld [vmem:[%s48 + $0x10] sm:$0xf]
  %v54 = vld [vmem:[%s48 + $0x14] sm:$0xf]
  %v55 = vld [vmem:[%s48 + $0x18] sm:$0xf]
  %v56 = vld [vmem:[%s48 + $0x1c] sm:$0xf]
  %v57 = vld [vmem:[%s48 + $0x20] sm:$0xf]
  %v58 = vld [vmem:[%s48 + $0x24] sm:$0xf]
  %v59 = vld [vmem:[%s48 + $0x28] sm:$0xf]
  %v60 = vld [vmem:[%s48 + $0x2c] sm:$0xf]
  %s61 = scalar_lea.vmem %s1, 144
  %v62 = vld [vmem:[%s61] sm:$0xf]
  %v63 = vld [vmem:[%s61 + $0x4] sm:$0xf]
  %v64 = vld [vmem:[%s61 + $0x8] sm:$0xf]
  %v65 = vld [vmem:[%s61 + $0xc] sm:$0xf]
  %v66 = vld [vmem:[%s61 + $0x10] sm:$0xf]
  %v67 = vld [vmem:[%s61 + $0x14] sm:$0xf]
  %v68 = vld [vmem:[%s61 + $0x18] sm:$0xf]
  %v69 = vld [vmem:[%s61 + $0x1c] sm:$0xf]
  %v70 = vld [vmem:[%s61 + $0x20] sm:$0xf]
  %v71 = vld [vmem:[%s61 + $0x24] sm:$0xf]
  %v72 = vld [vmem:[%s61 + $0x28] sm:$0xf]
  %v73 = vld [vmem:[%s61 + $0x2c] sm:$0xf]
  %s74 = scalar_lea.vmem %s1, 192
  %v75 = vld [vmem:[%s74] sm:$0xf]
  %v76 = vld [vmem:[%s74 + $0x4] sm:$0xf]
  %v77 = vld [vmem:[%s74 + $0x8] sm:$0xf]
  %v78 = vld [vmem:[%s74 + $0xc] sm:$0xf]
  %v79 = vld [vmem:[%s74 + $0x10] sm:$0xf]
  %v80 = vld [vmem:[%s74 + $0x14] sm:$0xf]
  %v81 = vld [vmem:[%s74 + $0x18] sm:$0xf]
  %v82 = vld [vmem:[%s74 + $0x1c] sm:$0xf]
  %v83 = vld [vmem:[%s74 + $0x20] sm:$0xf]
  %v84 = vld [vmem:[%s74 + $0x24] sm:$0xf]
  %v85 = vld [vmem:[%s74 + $0x28] sm:$0xf]
  %v86 = vld [vmem:[%s74 + $0x2c] sm:$0xf]
  %v87 = vld [vmem:[%s2] sm:$0xf]
  %v88 = vld [vmem:[%s2 + $0x4] sm:$0xf]
  %v89 = vld [vmem:[%s2 + $0x8] sm:$0xf]
  %v90 = vld [vmem:[%s2 + $0xc] sm:$0xf]
  %v91 = vld [vmem:[%s2 + $0x10] sm:$0xf]
  %v92 = vld [vmem:[%s2 + $0x14] sm:$0xf]
  %v93 = vld [vmem:[%s2 + $0x18] sm:$0xf]
  %v94 = vld [vmem:[%s2 + $0x1c] sm:$0xf]
  %v95 = vld [vmem:[%s2 + $0x20] sm:$0xf]
  %v96 = vld [vmem:[%s2 + $0x24] sm:$0xf]
  %v97 = vld [vmem:[%s2 + $0x28] sm:$0xf]
  %v98 = vld [vmem:[%s2 + $0x2c] sm:$0xf]
  %s99 = scalar_lea.vmem %s2, 48
  %v100 = vld [vmem:[%s99] sm:$0xf]
  %v101 = vld [vmem:[%s99 + $0x4] sm:$0xf]
  %v102 = vld [vmem:[%s99 + $0x8] sm:$0xf]
  %v103 = vld [vmem:[%s99 + $0xc] sm:$0xf]
  %v104 = vld [vmem:[%s99 + $0x10] sm:$0xf]
  %v105 = vld [vmem:[%s99 + $0x14] sm:$0xf]
  %v106 = vld [vmem:[%s99 + $0x18] sm:$0xf]
  %v107 = vld [vmem:[%s99 + $0x1c] sm:$0xf]
  %v108 = vld [vmem:[%s99 + $0x20] sm:$0xf]
  %v109 = vld [vmem:[%s99 + $0x24] sm:$0xf]
  %v110 = vld [vmem:[%s99 + $0x28] sm:$0xf]
  %v111 = vld [vmem:[%s99 + $0x2c] sm:$0xf]
  %s112 = scalar_lea.vmem %s2, 96
  %v113 = vld [vmem:[%s112] sm:$0xf]
  %v114 = vld [vmem:[%s112 + $0x4] sm:$0xf]
  %v115 = vld [vmem:[%s112 + $0x8] sm:$0xf]
  %v116 = vld [vmem:[%s112 + $0xc] sm:$0xf]
  %v117 = vld [vmem:[%s112 + $0x10] sm:$0xf]
  %v118 = vld [vmem:[%s112 + $0x14] sm:$0xf]
  %v119 = vld [vmem:[%s112 + $0x18] sm:$0xf]
  %v120 = vld [vmem:[%s112 + $0x1c] sm:$0xf]
  %v121 = vld [vmem:[%s112 + $0x20] sm:$0xf]
  %v122 = vld [vmem:[%s112 + $0x24] sm:$0xf]
  %v123 = vld [vmem:[%s112 + $0x28] sm:$0xf]
  %v124 = vld [vmem:[%s112 + $0x2c] sm:$0xf]
  %s125 = scalar_lea.vmem %s2, 144
  %v126 = vld [vmem:[%s125] sm:$0xf]
  %v127 = vld [vmem:[%s125 + $0x4] sm:$0xf]
  %v128 = vld [vmem:[%s125 + $0x8] sm:$0xf]
  %v129 = vld [vmem:[%s125 + $0xc] sm:$0xf]
  %v130 = vld [vmem:[%s125 + $0x10] sm:$0xf]
  %v131 = vld [vmem:[%s125 + $0x14] sm:$0xf]
  %v132 = vld [vmem:[%s125 + $0x18] sm:$0xf]
  %v133 = vld [vmem:[%s125 + $0x1c] sm:$0xf]
  %v134 = vld [vmem:[%s125 + $0x20] sm:$0xf]
  %v135 = vld [vmem:[%s125 + $0x24] sm:$0xf]
  %v136 = vld [vmem:[%s125 + $0x28] sm:$0xf]
  %v137 = vld [vmem:[%s125 + $0x2c] sm:$0xf]
  %s138 = scalar_lea.vmem %s2, 192
  %v139 = vld [vmem:[%s138] sm:$0xf]
  %v140 = vld [vmem:[%s138 + $0x4] sm:$0xf]
  %v141 = vld [vmem:[%s138 + $0x8] sm:$0xf]
  %v142 = vld [vmem:[%s138 + $0xc] sm:$0xf]
  %v143 = vld [vmem:[%s138 + $0x10] sm:$0xf]
  %v144 = vld [vmem:[%s138 + $0x14] sm:$0xf]
  %v145 = vld [vmem:[%s138 + $0x18] sm:$0xf]
  %v146 = vld [vmem:[%s138 + $0x1c] sm:$0xf]
  %v147 = vld [vmem:[%s138 + $0x20] sm:$0xf]
  %v148 = vld [vmem:[%s138 + $0x24] sm:$0xf]
  %v149 = vld [vmem:[%s138 + $0x28] sm:$0xf]
  %v150 = vld [vmem:[%s138 + $0x2c] sm:$0xf]
  %v151 = vld [vmem:[%s0] sm:$0xf]
  %v152 = vld [vmem:[%s0 + $0x4] sm:$0x3]
  %v155 = vunpack.c.l.b16 %v151
  %v156 = vunpack.c.l.b16 %v152
  %v157 = vpack.c.b16 %v156, %v155
  %v159 = vshrl.u32 %v157, 16
  %v161 = vshll.u32 %v157, 16
  %v163 = vrot.slane %v161, 1
  %v164 = vor.u32 %v159, %v163
  %v177 = vunpack.c.l.b16 %v36
  %v178 = vunpack.c.l.b16 %v37
  %v179 = vunpack.c.l.b16 %v38
  %v180 = vunpack.c.l.b16 %v39
  %v181 = vunpack.c.l.b16 %v40
  %v182 = vunpack.c.l.b16 %v41
  %v183 = vunpack.c.l.b16 %v42
  %v184 = vunpack.c.l.b16 %v43
  %v185 = vunpack.c.l.b16 %v44
  %v186 = vunpack.c.l.b16 %v45
  %v187 = vunpack.c.l.b16 %v46
  %v188 = vunpack.c.l.b16 %v47
  %v189 = vpack.c.b16 %v178, %v177
  %v190 = vpack.c.b16 %v180, %v179
  %v191 = vpack.c.b16 %v182, %v181
  %v192 = vpack.c.b16 %v184, %v183
  %v193 = vpack.c.b16 %v186, %v185
  %v194 = vpack.c.b16 %v188, %v187
  %vm201 = vcmask 785408
  %v203 = vsel %vm201, %v164, 0
  %205 = vmatprep.subr.bf16.mxu0 0
  %206 = vmatpush1.bf16.msra.mxu0 0
  %207 = vmatprep.subr.bf16.mxu0 0
  %208 = vmatpush1.bf16.msra.mxu0 0
  %209 = vmatprep.subr.bf16.mxu0 0
  %210 = vmatpush1.bf16.msra.mxu0 %v194
  %211 = vmatprep.subr.bf16.mxu0 0
  %212 = vmatpush1.bf16.msra.mxu0 %v193
  %213 = vmatprep.subr.bf16.mxu0 0
  %214 = vmatpush1.bf16.msra.mxu0 %v192
  %215 = vmatprep.subr.bf16.mxu0 0
  %216 = vmatpush1.bf16.msra.mxu0 %v191
  %217 = vmatprep.subr.bf16.mxu0 0
  %218 = vmatpush1.bf16.msra.mxu0 %v190
  %219 = vmatprep.subr.bf16.mxu0 0
  %220 = vmatpush1.bf16.msra.mxu0 %v189
  %221 = vmatprep.subr.bf16.mxu0 0
  %222 = vmatpush2.bf16.msra.mxu0 0
  %223 = vmatprep.subr.bf16.mxu0 0
  %224 = vmatpush2.bf16.msra.mxu0 0
  %225 = vmatprep.subr.bf16.mxu0 0
  %226 = vmatpush2.bf16.msra.mxu0 0
  %227 = vmatprep.subr.bf16.mxu0 0
  %228 = vmatpush2.bf16.msra.mxu0 0
  %229 = vmatprep.subr.bf16.mxu0 0
  %230 = vmatpush2.bf16.msra.mxu0 0
  %231 = vmatprep.subr.bf16.mxu0 0
  %232 = vmatpush2.bf16.msra.mxu0 0
  %233 = vmatprep.subr.bf16.mxu0 0
  %234 = vmatpush2.bf16.msra.mxu0 0
  %235 = vmatprep.subr.bf16.mxu0 0
  %236 = vmatpush2.bf16.msra.mxu0 0
  %237 = vmatprep.mubr.bf16.mxu0 0
  %238 = vmatmul.mubr.bf16.gmra.mxu0 %v203
  %v239 = vpop.f32.mrf.mxu0
  %v240 = vadd.f32 0.0, %v239
  %v241 = vpop.f32.mrf.mxu0
  %v242 = vpop.f32.mrf.mxu0
  %v243 = vpop.f32.mrf.mxu0
  %244 = vdwg.mxu0
  %v257 = vunpack.c.l.b16 %v23
  %v258 = vunpack.c.l.b16 %v24
  %v259 = vunpack.c.l.b16 %v25
  %v260 = vunpack.c.l.b16 %v26
  %v261 = vunpack.c.l.b16 %v27
  %v262 = vunpack.c.l.b16 %v28
  %v263 = vunpack.c.l.b16 %v29
  %v264 = vunpack.c.l.b16 %v30
  %v265 = vunpack.c.l.b16 %v31
  %v266 = vunpack.c.l.b16 %v32
  %v267 = vunpack.c.l.b16 %v33
  %v268 = vunpack.c.l.b16 %v34
  %v269 = vpack.c.b16 %v258, %v257
  %v270 = vpack.c.b16 %v260, %v259
  %v271 = vpack.c.b16 %v262, %v261
  %v272 = vpack.c.b16 %v264, %v263
  %v273 = vpack.c.b16 %v266, %v265
  %v274 = vpack.c.b16 %v268, %v267
  %v282 = vsel %vm201, %v151, 0
  %284 = vmatprep.subr.bf16.mxu0 0
  %285 = vmatpush1.bf16.msra.mxu0 0
  %286 = vmatprep.subr.bf16.mxu0 0
  %287 = vmatpush1.bf16.msra.mxu0 0
  %288 = vmatprep.subr.bf16.mxu0 0
  %289 = vmatpush1.bf16.msra.mxu0 %v274
  %290 = vmatprep.subr.bf16.mxu0 0
  %291 = vmatpush1.bf16.msra.mxu0 %v273
  %292 = vmatprep.subr.bf16.mxu0 0
  %293 = vmatpush1.bf16.msra.mxu0 %v272
  %294 = vmatprep.subr.bf16.mxu0 0
  %295 = vmatpush1.bf16.msra.mxu0 %v271
  %296 = vmatprep.subr.bf16.mxu0 0
  %297 = vmatpush1.bf16.msra.mxu0 %v270
  %298 = vmatprep.subr.bf16.mxu0 0
  %299 = vmatpush1.bf16.msra.mxu0 %v269
  %300 = vmatprep.subr.bf16.mxu0 0
  %301 = vmatpush2.bf16.msra.mxu0 0
  %302 = vmatprep.subr.bf16.mxu0 0
  %303 = vmatpush2.bf16.msra.mxu0 0
  %304 = vmatprep.subr.bf16.mxu0 0
  %305 = vmatpush2.bf16.msra.mxu0 0
  %306 = vmatprep.subr.bf16.mxu0 0
  %307 = vmatpush2.bf16.msra.mxu0 0
  %308 = vmatprep.subr.bf16.mxu0 0
  %309 = vmatpush2.bf16.msra.mxu0 0
  %310 = vmatprep.subr.bf16.mxu0 0
  %311 = vmatpush2.bf16.msra.mxu0 0
  %312 = vmatprep.subr.bf16.mxu0 0
  %313 = vmatpush2.bf16.msra.mxu0 0
  %314 = vmatprep.subr.bf16.mxu0 0
  %315 = vmatpush2.bf16.msra.mxu0 0
  %316 = vmatprep.mubr.bf16.mxu0 0
  %317 = vmatmul.mubr.bf16.gmra.mxu0 %v282
  %v318 = vpop.f32.mrf.mxu0
  %v319 = vadd.f32 %v240, %v318
  %v320 = vpop.f32.mrf.mxu0
  %v321 = vpop.f32.mrf.mxu0
  %v322 = vpop.f32.mrf.mxu0
  %323 = vdwg.mxu0
  %v336 = vunpack.c.l.b16 %v100
  %v337 = vunpack.c.l.b16 %v101
  %v338 = vunpack.c.l.b16 %v102
  %v339 = vunpack.c.l.b16 %v103
  %v340 = vunpack.c.l.b16 %v104
  %v341 = vunpack.c.l.b16 %v105
  %v342 = vunpack.c.l.b16 %v106
  %v343 = vunpack.c.l.b16 %v107
  %v344 = vunpack.c.l.b16 %v108
  %v345 = vunpack.c.l.b16 %v109
  %v346 = vunpack.c.l.b16 %v110
  %v347 = vunpack.c.l.b16 %v111
  %v348 = vpack.c.b16 %v337, %v336
  %v349 = vpack.c.b16 %v339, %v338
  %v350 = vpack.c.b16 %v341, %v340
  %v351 = vpack.c.b16 %v343, %v342
  %v352 = vpack.c.b16 %v345, %v344
  %v353 = vpack.c.b16 %v347, %v346
  %360 = vmatprep.subr.bf16.mxu0 0
  %361 = vmatpush1.bf16.msra.mxu0 0
  %362 = vmatprep.subr.bf16.mxu0 0
  %363 = vmatpush1.bf16.msra.mxu0 0
  %364 = vmatprep.subr.bf16.mxu0 0
  %365 = vmatpush1.bf16.msra.mxu0 %v353
  %366 = vmatprep.subr.bf16.mxu0 0
  %367 = vmatpush1.bf16.msra.mxu0 %v352
  %368 = vmatprep.subr.bf16.mxu0 0
  %369 = vmatpush1.bf16.msra.mxu0 %v351
  %370 = vmatprep.subr.bf16.mxu0 0
  %371 = vmatpush1.bf16.msra.mxu0 %v350
  %372 = vmatprep.subr.bf16.mxu0 0
  %373 = vmatpush1.bf16.msra.mxu0 %v349
  %374 = vmatprep.subr.bf16.mxu0 0
  %375 = vmatpush1.bf16.msra.mxu0 %v348
  %376 = vmatprep.subr.bf16.mxu0 0
  %377 = vmatpush2.bf16.msra.mxu0 0
  %378 = vmatprep.subr.bf16.mxu0 0
  %379 = vmatpush2.bf16.msra.mxu0 0
  %380 = vmatprep.subr.bf16.mxu0 0
  %381 = vmatpush2.bf16.msra.mxu0 0
  %382 = vmatprep.subr.bf16.mxu0 0
  %383 = vmatpush2.bf16.msra.mxu0 0
  %384 = vmatprep.subr.bf16.mxu0 0
  %385 = vmatpush2.bf16.msra.mxu0 0
  %386 = vmatprep.subr.bf16.mxu0 0
  %387 = vmatpush2.bf16.msra.mxu0 0
  %388 = vmatprep.subr.bf16.mxu0 0
  %389 = vmatpush2.bf16.msra.mxu0 0
  %390 = vmatprep.subr.bf16.mxu0 0
  %391 = vmatpush2.bf16.msra.mxu0 0
  %392 = vmatprep.mubr.bf16.mxu0 0
  %393 = vmatmul.mubr.bf16.gmra.mxu0 %v203
  %v394 = vpop.f32.mrf.mxu0
  %v395 = vadd.f32 0.0, %v394
  %v396 = vpop.f32.mrf.mxu0
  %v397 = vpop.f32.mrf.mxu0
  %v398 = vpop.f32.mrf.mxu0
  %399 = vdwg.mxu0
  %v412 = vunpack.c.l.b16 %v87
  %v413 = vunpack.c.l.b16 %v88
  %v414 = vunpack.c.l.b16 %v89
  %v415 = vunpack.c.l.b16 %v90
  %v416 = vunpack.c.l.b16 %v91
  %v417 = vunpack.c.l.b16 %v92
  %v418 = vunpack.c.l.b16 %v93
  %v419 = vunpack.c.l.b16 %v94
  %v420 = vunpack.c.l.b16 %v95
  %v421 = vunpack.c.l.b16 %v96
  %v422 = vunpack.c.l.b16 %v97
  %v423 = vunpack.c.l.b16 %v98
  %v424 = vpack.c.b16 %v413, %v412
  %v425 = vpack.c.b16 %v415, %v414
  %v426 = vpack.c.b16 %v417, %v416
  %v427 = vpack.c.b16 %v419, %v418
  %v428 = vpack.c.b16 %v421, %v420
  %v429 = vpack.c.b16 %v423, %v422
  %436 = vmatprep.subr.bf16.mxu0 0
  %437 = vmatpush1.bf16.msra.mxu0 0
  %438 = vmatprep.subr.bf16.mxu0 0
  %439 = vmatpush1.bf16.msra.mxu0 0
  %440 = vmatprep.subr.bf16.mxu0 0
  %441 = vmatpush1.bf16.msra.mxu0 %v429
  %442 = vmatprep.subr.bf16.mxu0 0
  %443 = vmatpush1.bf16.msra.mxu0 %v428
  %444 = vmatprep.subr.bf16.mxu0 0
  %445 = vmatpush1.bf16.msra.mxu0 %v427
  %446 = vmatprep.subr.bf16.mxu0 0
  %447 = vmatpush1.bf16.msra.mxu0 %v426
  %448 = vmatprep.subr.bf16.mxu0 0
  %449 = vmatpush1.bf16.msra.mxu0 %v425
  %450 = vmatprep.subr.bf16.mxu0 0
  %451 = vmatpush1.bf16.msra.mxu0 %v424
  %452 = vmatprep.subr.bf16.mxu0 0
  %453 = vmatpush2.bf16.msra.mxu0 0
  %454 = vmatprep.subr.bf16.mxu0 0
  %455 = vmatpush2.bf16.msra.mxu0 0
  %456 = vmatprep.subr.bf16.mxu0 0
  %457 = vmatpush2.bf16.msra.mxu0 0
  %458 = vmatprep.subr.bf16.mxu0 0
  %459 = vmatpush2.bf16.msra.mxu0 0
  %460 = vmatprep.subr.bf16.mxu0 0
  %461 = vmatpush2.bf16.msra.mxu0 0
  %462 = vmatprep.subr.bf16.mxu0 0
  %463 = vmatpush2.bf16.msra.mxu0 0
  %464 = vmatprep.subr.bf16.mxu0 0
  %465 = vmatpush2.bf16.msra.mxu0 0
  %466 = vmatprep.subr.bf16.mxu0 0
  %467 = vmatpush2.bf16.msra.mxu0 0
  %468 = vmatprep.mubr.bf16.mxu0 0
  %469 = vmatmul.mubr.bf16.gmra.mxu0 %v282
  %v470 = vpop.f32.mrf.mxu0
  %v471 = vadd.f32 %v395, %v470
  %v472 = vpop.f32.mrf.mxu0
  %v473 = vpop.f32.mrf.mxu0
  %v474 = vpop.f32.mrf.mxu0
  %475 = vdwg.mxu0
  %v476 = vrot.slane %v157, 1
  %v489 = vunpack.c.l.b16 %v49
  %v490 = vunpack.c.l.b16 %v50
  %v491 = vunpack.c.l.b16 %v51
  %v492 = vunpack.c.l.b16 %v52
  %v493 = vunpack.c.l.b16 %v53
  %v494 = vunpack.c.l.b16 %v54
  %v495 = vunpack.c.l.b16 %v55
  %v496 = vunpack.c.l.b16 %v56
  %v497 = vunpack.c.l.b16 %v57
  %v498 = vunpack.c.l.b16 %v58
  %v499 = vunpack.c.l.b16 %v59
  %v500 = vunpack.c.l.b16 %v60
  %v501 = vpack.c.b16 %v490, %v489
  %v502 = vpack.c.b16 %v492, %v491
  %v503 = vpack.c.b16 %v494, %v493
  %v504 = vpack.c.b16 %v496, %v495
  %v505 = vpack.c.b16 %v498, %v497
  %v506 = vpack.c.b16 %v500, %v499
  %v514 = vsel %vm201, %v476, 0
  %516 = vmatprep.subr.bf16.mxu0 0
  %517 = vmatpush1.bf16.msra.mxu0 0
  %518 = vmatprep.subr.bf16.mxu0 0
  %519 = vmatpush1.bf16.msra.mxu0 0
  %520 = vmatprep.subr.bf16.mxu0 0
  %521 = vmatpush1.bf16.msra.mxu0 %v506
  %522 = vmatprep.subr.bf16.mxu0 0
  %523 = vmatpush1.bf16.msra.mxu0 %v505
  %524 = vmatprep.subr.bf16.mxu0 0
  %525 = vmatpush1.bf16.msra.mxu0 %v504
  %526 = vmatprep.subr.bf16.mxu0 0
  %527 = vmatpush1.bf16.msra.mxu0 %v503
  %528 = vmatprep.subr.bf16.mxu0 0
  %529 = vmatpush1.bf16.msra.mxu0 %v502
  %530 = vmatprep.subr.bf16.mxu0 0
  %531 = vmatpush1.bf16.msra.mxu0 %v501
  %532 = vmatprep.subr.bf16.mxu0 0
  %533 = vmatpush2.bf16.msra.mxu0 0
  %534 = vmatprep.subr.bf16.mxu0 0
  %535 = vmatpush2.bf16.msra.mxu0 0
  %536 = vmatprep.subr.bf16.mxu0 0
  %537 = vmatpush2.bf16.msra.mxu0 0
  %538 = vmatprep.subr.bf16.mxu0 0
  %539 = vmatpush2.bf16.msra.mxu0 0
  %540 = vmatprep.subr.bf16.mxu0 0
  %541 = vmatpush2.bf16.msra.mxu0 0
  %542 = vmatprep.subr.bf16.mxu0 0
  %543 = vmatpush2.bf16.msra.mxu0 0
  %544 = vmatprep.subr.bf16.mxu0 0
  %545 = vmatpush2.bf16.msra.mxu0 0
  %546 = vmatprep.subr.bf16.mxu0 0
  %547 = vmatpush2.bf16.msra.mxu0 0
  %548 = vmatprep.mubr.bf16.mxu0 0
  %549 = vmatmul.mubr.bf16.gmra.mxu0 %v514
  %v550 = vpop.f32.mrf.mxu0
  %v551 = vadd.f32 0.0, %v550
  %v552 = vpop.f32.mrf.mxu0
  %v553 = vpop.f32.mrf.mxu0
  %v554 = vpop.f32.mrf.mxu0
  %555 = vdwg.mxu0
  %v556 = vadd.f32 %v319, %v551
  %v569 = vunpack.c.l.b16 %v113
  %v570 = vunpack.c.l.b16 %v114
  %v571 = vunpack.c.l.b16 %v115
  %v572 = vunpack.c.l.b16 %v116
  %v573 = vunpack.c.l.b16 %v117
  %v574 = vunpack.c.l.b16 %v118
  %v575 = vunpack.c.l.b16 %v119
  %v576 = vunpack.c.l.b16 %v120
  %v577 = vunpack.c.l.b16 %v121
  %v578 = vunpack.c.l.b16 %v122
  %v579 = vunpack.c.l.b16 %v123
  %v580 = vunpack.c.l.b16 %v124
  %v581 = vpack.c.b16 %v570, %v569
  %v582 = vpack.c.b16 %v572, %v571
  %v583 = vpack.c.b16 %v574, %v573
  %v584 = vpack.c.b16 %v576, %v575
  %v585 = vpack.c.b16 %v578, %v577
  %v586 = vpack.c.b16 %v580, %v579
  %593 = vmatprep.subr.bf16.mxu0 0
  %594 = vmatpush1.bf16.msra.mxu0 0
  %595 = vmatprep.subr.bf16.mxu0 0
  %596 = vmatpush1.bf16.msra.mxu0 0
  %597 = vmatprep.subr.bf16.mxu0 0
  %598 = vmatpush1.bf16.msra.mxu0 %v586
  %599 = vmatprep.subr.bf16.mxu0 0
  %600 = vmatpush1.bf16.msra.mxu0 %v585
  %601 = vmatprep.subr.bf16.mxu0 0
  %602 = vmatpush1.bf16.msra.mxu0 %v584
  %603 = vmatprep.subr.bf16.mxu0 0
  %604 = vmatpush1.bf16.msra.mxu0 %v583
  %605 = vmatprep.subr.bf16.mxu0 0
  %606 = vmatpush1.bf16.msra.mxu0 %v582
  %607 = vmatprep.subr.bf16.mxu0 0
  %608 = vmatpush1.bf16.msra.mxu0 %v581
  %609 = vmatprep.subr.bf16.mxu0 0
  %610 = vmatpush2.bf16.msra.mxu0 0
  %611 = vmatprep.subr.bf16.mxu0 0
  %612 = vmatpush2.bf16.msra.mxu0 0
  %613 = vmatprep.subr.bf16.mxu0 0
  %614 = vmatpush2.bf16.msra.mxu0 0
  %615 = vmatprep.subr.bf16.mxu0 0
  %616 = vmatpush2.bf16.msra.mxu0 0
  %617 = vmatprep.subr.bf16.mxu0 0
  %618 = vmatpush2.bf16.msra.mxu0 0
  %619 = vmatprep.subr.bf16.mxu0 0
  %620 = vmatpush2.bf16.msra.mxu0 0
  %621 = vmatprep.subr.bf16.mxu0 0
  %622 = vmatpush2.bf16.msra.mxu0 0
  %623 = vmatprep.subr.bf16.mxu0 0
  %624 = vmatpush2.bf16.msra.mxu0 0
  %625 = vmatprep.mubr.bf16.mxu0 0
  %626 = vmatmul.mubr.bf16.gmra.mxu0 %v514
  %v627 = vpop.f32.mrf.mxu0
  %v628 = vadd.f32 0.0, %v627
  %v629 = vpop.f32.mrf.mxu0
  %v630 = vpop.f32.mrf.mxu0
  %v631 = vpop.f32.mrf.mxu0
  %632 = vdwg.mxu0
  %v633 = vadd.f32 %v471, %v628
  %v634 = vrot.slane %v159, 1
  %v635 = vrot.slane %v161, 2
  %v636 = vor.u32 %v634, %v635
  %v649 = vunpack.c.l.b16 %v62
  %v650 = vunpack.c.l.b16 %v63
  %v651 = vunpack.c.l.b16 %v64
  %v652 = vunpack.c.l.b16 %v65
  %v653 = vunpack.c.l.b16 %v66
  %v654 = vunpack.c.l.b16 %v67
  %v655 = vunpack.c.l.b16 %v68
  %v656 = vunpack.c.l.b16 %v69
  %v657 = vunpack.c.l.b16 %v70
  %v658 = vunpack.c.l.b16 %v71
  %v659 = vunpack.c.l.b16 %v72
  %v660 = vunpack.c.l.b16 %v73
  %v661 = vpack.c.b16 %v650, %v649
  %v662 = vpack.c.b16 %v652, %v651
  %v663 = vpack.c.b16 %v654, %v653
  %v664 = vpack.c.b16 %v656, %v655
  %v665 = vpack.c.b16 %v658, %v657
  %v666 = vpack.c.b16 %v660, %v659
  %v674 = vsel %vm201, %v636, 0
  %676 = vmatprep.subr.bf16.mxu0 0
  %677 = vmatpush1.bf16.msra.mxu0 0
  %678 = vmatprep.subr.bf16.mxu0 0
  %679 = vmatpush1.bf16.msra.mxu0 0
  %680 = vmatprep.subr.bf16.mxu0 0
  %681 = vmatpush1.bf16.msra.mxu0 %v666
  %682 = vmatprep.subr.bf16.mxu0 0
  %683 = vmatpush1.bf16.msra.mxu0 %v665
  %684 = vmatprep.subr.bf16.mxu0 0
  %685 = vmatpush1.bf16.msra.mxu0 %v664
  %686 = vmatprep.subr.bf16.mxu0 0
  %687 = vmatpush1.bf16.msra.mxu0 %v663
  %688 = vmatprep.subr.bf16.mxu0 0
  %689 = vmatpush1.bf16.msra.mxu0 %v662
  %690 = vmatprep.subr.bf16.mxu0 0
  %691 = vmatpush1.bf16.msra.mxu0 %v661
  %692 = vmatprep.subr.bf16.mxu0 0
  %693 = vmatpush2.bf16.msra.mxu0 0
  %694 = vmatprep.subr.bf16.mxu0 0
  %695 = vmatpush2.bf16.msra.mxu0 0
  %696 = vmatprep.subr.bf16.mxu0 0
  %697 = vmatpush2.bf16.msra.mxu0 0
  %698 = vmatprep.subr.bf16.mxu0 0
  %699 = vmatpush2.bf16.msra.mxu0 0
  %700 = vmatprep.subr.bf16.mxu0 0
  %701 = vmatpush2.bf16.msra.mxu0 0
  %702 = vmatprep.subr.bf16.mxu0 0
  %703 = vmatpush2.bf16.msra.mxu0 0
  %704 = vmatprep.subr.bf16.mxu0 0
  %705 = vmatpush2.bf16.msra.mxu0 0
  %706 = vmatprep.subr.bf16.mxu0 0
  %707 = vmatpush2.bf16.msra.mxu0 0
  %708 = vmatprep.mubr.bf16.mxu0 0
  %709 = vmatmul.mubr.bf16.gmra.mxu0 %v674
  %v710 = vpop.f32.mrf.mxu0
  %v711 = vadd.f32 0.0, %v710
  %v712 = vpop.f32.mrf.mxu0
  %v713 = vpop.f32.mrf.mxu0
  %v714 = vpop.f32.mrf.mxu0
  %715 = vdwg.mxu0
  %v716 = vadd.f32 %v556, %v711
  %v729 = vunpack.c.l.b16 %v126
  %v730 = vunpack.c.l.b16 %v127
  %v731 = vunpack.c.l.b16 %v128
  %v732 = vunpack.c.l.b16 %v129
  %v733 = vunpack.c.l.b16 %v130
  %v734 = vunpack.c.l.b16 %v131
  %v735 = vunpack.c.l.b16 %v132
  %v736 = vunpack.c.l.b16 %v133
  %v737 = vunpack.c.l.b16 %v134
  %v738 = vunpack.c.l.b16 %v135
  %v739 = vunpack.c.l.b16 %v136
  %v740 = vunpack.c.l.b16 %v137
  %v741 = vpack.c.b16 %v730, %v729
  %v742 = vpack.c.b16 %v732, %v731
  %v743 = vpack.c.b16 %v734, %v733
  %v744 = vpack.c.b16 %v736, %v735
  %v745 = vpack.c.b16 %v738, %v737
  %v746 = vpack.c.b16 %v740, %v739
  %753 = vmatprep.subr.bf16.mxu0 0
  %754 = vmatpush1.bf16.msra.mxu0 0
  %755 = vmatprep.subr.bf16.mxu0 0
  %756 = vmatpush1.bf16.msra.mxu0 0
  %757 = vmatprep.subr.bf16.mxu0 0
  %758 = vmatpush1.bf16.msra.mxu0 %v746
  %759 = vmatprep.subr.bf16.mxu0 0
  %760 = vmatpush1.bf16.msra.mxu0 %v745
  %761 = vmatprep.subr.bf16.mxu0 0
  %762 = vmatpush1.bf16.msra.mxu0 %v744
  %763 = vmatprep.subr.bf16.mxu0 0
  %764 = vmatpush1.bf16.msra.mxu0 %v743
  %765 = vmatprep.subr.bf16.mxu0 0
  %766 = vmatpush1.bf16.msra.mxu0 %v742
  %767 = vmatprep.subr.bf16.mxu0 0
  %768 = vmatpush1.bf16.msra.mxu0 %v741
  %769 = vmatprep.subr.bf16.mxu0 0
  %770 = vmatpush2.bf16.msra.mxu0 0
  %771 = vmatprep.subr.bf16.mxu0 0
  %772 = vmatpush2.bf16.msra.mxu0 0
  %773 = vmatprep.subr.bf16.mxu0 0
  %774 = vmatpush2.bf16.msra.mxu0 0
  %775 = vmatprep.subr.bf16.mxu0 0
  %776 = vmatpush2.bf16.msra.mxu0 0
  %777 = vmatprep.subr.bf16.mxu0 0
  %778 = vmatpush2.bf16.msra.mxu0 0
  %779 = vmatprep.subr.bf16.mxu0 0
  %780 = vmatpush2.bf16.msra.mxu0 0
  %781 = vmatprep.subr.bf16.mxu0 0
  %782 = vmatpush2.bf16.msra.mxu0 0
  %783 = vmatprep.subr.bf16.mxu0 0
  %784 = vmatpush2.bf16.msra.mxu0 0
  %785 = vmatprep.mubr.bf16.mxu0 0
  %786 = vmatmul.mubr.bf16.gmra.mxu0 %v674
  %v787 = vpop.f32.mrf.mxu0
  %v788 = vadd.f32 0.0, %v787
  %v789 = vpop.f32.mrf.mxu0
  %v790 = vpop.f32.mrf.mxu0
  %v791 = vpop.f32.mrf.mxu0
  %792 = vdwg.mxu0
  %v793 = vadd.f32 %v633, %v788
  %v794 = vrot.slane %v157, 2
  %v807 = vunpack.c.l.b16 %v75
  %v808 = vunpack.c.l.b16 %v76
  %v809 = vunpack.c.l.b16 %v77
  %v810 = vunpack.c.l.b16 %v78
  %v811 = vunpack.c.l.b16 %v79
  %v812 = vunpack.c.l.b16 %v80
  %v813 = vunpack.c.l.b16 %v81
  %v814 = vunpack.c.l.b16 %v82
  %v815 = vunpack.c.l.b16 %v83
  %v816 = vunpack.c.l.b16 %v84
  %v817 = vunpack.c.l.b16 %v85
  %v818 = vunpack.c.l.b16 %v86
  %v819 = vpack.c.b16 %v808, %v807
  %v820 = vpack.c.b16 %v810, %v809
  %v821 = vpack.c.b16 %v812, %v811
  %v822 = vpack.c.b16 %v814, %v813
  %v823 = vpack.c.b16 %v816, %v815
  %v824 = vpack.c.b16 %v818, %v817
  %v832 = vsel %vm201, %v794, 0
  %834 = vmatprep.subr.bf16.mxu0 0
  %835 = vmatpush1.bf16.msra.mxu0 0
  %836 = vmatprep.subr.bf16.mxu0 0
  %837 = vmatpush1.bf16.msra.mxu0 0
  %838 = vmatprep.subr.bf16.mxu0 0
  %839 = vmatpush1.bf16.msra.mxu0 %v824
  %840 = vmatprep.subr.bf16.mxu0 0
  %841 = vmatpush1.bf16.msra.mxu0 %v823
  %842 = vmatprep.subr.bf16.mxu0 0
  %843 = vmatpush1.bf16.msra.mxu0 %v822
  %844 = vmatprep.subr.bf16.mxu0 0
  %845 = vmatpush1.bf16.msra.mxu0 %v821
  %846 = vmatprep.subr.bf16.mxu0 0
  %847 = vmatpush1.bf16.msra.mxu0 %v820
  %848 = vmatprep.subr.bf16.mxu0 0
  %849 = vmatpush1.bf16.msra.mxu0 %v819
  %850 = vmatprep.subr.bf16.mxu0 0
  %851 = vmatpush2.bf16.msra.mxu0 0
  %852 = vmatprep.subr.bf16.mxu0 0
  %853 = vmatpush2.bf16.msra.mxu0 0
  %854 = vmatprep.subr.bf16.mxu0 0
  %855 = vmatpush2.bf16.msra.mxu0 0
  %856 = vmatprep.subr.bf16.mxu0 0
  %857 = vmatpush2.bf16.msra.mxu0 0
  %858 = vmatprep.subr.bf16.mxu0 0
  %859 = vmatpush2.bf16.msra.mxu0 0
  %860 = vmatprep.subr.bf16.mxu0 0
  %861 = vmatpush2.bf16.msra.mxu0 0
  %862 = vmatprep.subr.bf16.mxu0 0
  %863 = vmatpush2.bf16.msra.mxu0 0
  %864 = vmatprep.subr.bf16.mxu0 0
  %865 = vmatpush2.bf16.msra.mxu0 0
  %866 = vmatprep.mubr.bf16.mxu0 0
  %867 = vmatmul.mubr.bf16.gmra.mxu0 %v832
  %v868 = vpop.f32.mrf.mxu0
  %v869 = vadd.f32 0.0, %v868
  %v870 = vpop.f32.mrf.mxu0
  %v871 = vpop.f32.mrf.mxu0
  %v872 = vpop.f32.mrf.mxu0
  %873 = vdwg.mxu0
  %v874 = vadd.f32 %v716, %v869
  %v887 = vunpack.c.l.b16 %v139
  %v888 = vunpack.c.l.b16 %v140
  %v889 = vunpack.c.l.b16 %v141
  %v890 = vunpack.c.l.b16 %v142
  %v891 = vunpack.c.l.b16 %v143
  %v892 = vunpack.c.l.b16 %v144
  %v893 = vunpack.c.l.b16 %v145
  %v894 = vunpack.c.l.b16 %v146
  %v895 = vunpack.c.l.b16 %v147
  %v896 = vunpack.c.l.b16 %v148
  %v897 = vunpack.c.l.b16 %v149
  %v898 = vunpack.c.l.b16 %v150
  %v899 = vpack.c.b16 %v888, %v887
  %v900 = vpack.c.b16 %v890, %v889
  %v901 = vpack.c.b16 %v892, %v891
  %v902 = vpack.c.b16 %v894, %v893
  %v903 = vpack.c.b16 %v896, %v895
  %v904 = vpack.c.b16 %v898, %v897
  %911 = vmatprep.subr.bf16.mxu0 0
  %912 = vmatpush1.bf16.msra.mxu0 0
  %913 = vmatprep.subr.bf16.mxu0 0
  %914 = vmatpush1.bf16.msra.mxu0 0
  %915 = vmatprep.subr.bf16.mxu0 0
  %916 = vmatpush1.bf16.msra.mxu0 %v904
  %917 = vmatprep.subr.bf16.mxu0 0
  %918 = vmatpush1.bf16.msra.mxu0 %v903
  %919 = vmatprep.subr.bf16.mxu0 0
  %920 = vmatpush1.bf16.msra.mxu0 %v902
  %921 = vmatprep.subr.bf16.mxu0 0
  %922 = vmatpush1.bf16.msra.mxu0 %v901
  %923 = vmatprep.subr.bf16.mxu0 0
  %924 = vmatpush1.bf16.msra.mxu0 %v900
  %925 = vmatprep.subr.bf16.mxu0 0
  %926 = vmatpush1.bf16.msra.mxu0 %v899
  %927 = vmatprep.subr.bf16.mxu0 0
  %928 = vmatpush2.bf16.msra.mxu0 0
  %929 = vmatprep.subr.bf16.mxu0 0
  %930 = vmatpush2.bf16.msra.mxu0 0
  %931 = vmatprep.subr.bf16.mxu0 0
  %932 = vmatpush2.bf16.msra.mxu0 0
  %933 = vmatprep.subr.bf16.mxu0 0
  %934 = vmatpush2.bf16.msra.mxu0 0
  %935 = vmatprep.subr.bf16.mxu0 0
  %936 = vmatpush2.bf16.msra.mxu0 0
  %937 = vmatprep.subr.bf16.mxu0 0
  %938 = vmatpush2.bf16.msra.mxu0 0
  %939 = vmatprep.subr.bf16.mxu0 0
  %940 = vmatpush2.bf16.msra.mxu0 0
  %941 = vmatprep.subr.bf16.mxu0 0
  %942 = vmatpush2.bf16.msra.mxu0 0
  %943 = vmatprep.mubr.bf16.mxu0 0
  %944 = vmatmul.mubr.bf16.gmra.mxu0 %v832
  %v945 = vpop.f32.mrf.mxu0
  %v946 = vadd.f32 0.0, %v945
  %v947 = vpop.f32.mrf.mxu0
  %v948 = vpop.f32.mrf.mxu0
  %v949 = vpop.f32.mrf.mxu0
  %950 = vdwg.mxu0
  %v951 = vadd.f32 %v793, %v946
  %v953 = vlaneseq
  %v954 = vshrl.u32 %v953, 7
  %v955 = vsub.s32 0, %v954
  %v956 = vrot.slane %v21, %v955
  %v958 = vadd.f32 %v874, %v956
  %v959 = vmax.f32 %v958, 0.0
  %v960 = vadd.f32 %v951, %v956
  %v961 = vmax.f32 %v960, 0.0
  %v962 = vmax.f32 %v959, %v961
  %v964 = vrot.slane %v962, 1
  %v966 = vmax.f32 %v962, %v964
  %v967 = vpack.c.bf16 %v966, %v966
  %vm968 = vcmask 56320
  %v970 = vsel %vm968, %v22, 0
  %vm972 = vcmask 1042432
  %vm973 = vcmask 1043456
  %v974 = vsel %vm972, 4294967295, 65535
  %v975 = vsel %vm973, %v974, 0
  %v977 = vand.u32 %v967, %v975
  %979 = vmatprep.subr.bf16.mxu0 0
  %980 = vmatpush1.bf16.msra.mxu0 0
  %981 = vmatprep.subr.bf16.mxu0 0
  %982 = vmatpush1.bf16.msra.mxu0 0
  %983 = vmatprep.subr.bf16.mxu0 0
  %984 = vmatpush1.bf16.msra.mxu0 0
  %985 = vmatprep.subr.bf16.mxu0 0
  %986 = vmatpush1.bf16.msra.mxu0 0
  %987 = vmatprep.subr.bf16.mxu0 0
  %988 = vmatpush1.bf16.msra.mxu0 0
  %989 = vmatprep.subr.bf16.mxu0 0
  %990 = vmatpush1.bf16.msra.mxu0 0
  %991 = vmatprep.subr.bf16.mxu0 0
  %992 = vmatpush1.bf16.msra.mxu0 0
  %993 = vmatprep.subr.bf16.mxu0 0
  %994 = vmatpush1.bf16.msra.mxu0 %v977
  %995 = vmatprep.subr.bf16.mxu0 0
  %996 = vmatpush2.bf16.msra.mxu0 0
  %997 = vmatprep.subr.bf16.mxu0 0
  %998 = vmatpush2.bf16.msra.mxu0 0
  %999 = vmatprep.subr.bf16.mxu0 0
  %1000 = vmatpush2.bf16.msra.mxu0 0
  %1001 = vmatprep.subr.bf16.mxu0 0
  %1002 = vmatpush2.bf16.msra.mxu0 0
  %1003 = vmatprep.subr.bf16.mxu0 0
  %1004 = vmatpush2.bf16.msra.mxu0 0
  %1005 = vmatprep.subr.bf16.mxu0 0
  %1006 = vmatpush2.bf16.msra.mxu0 0
  %1007 = vmatprep.subr.bf16.mxu0 0
  %1008 = vmatpush2.bf16.msra.mxu0 0
  %1009 = vmatprep.subr.bf16.mxu0 0
  %1010 = vmatpush2.bf16.msra.mxu0 0
  %1011 = vmatprep.mubr.bf16.mxu0 0
  %1012 = vmatmul.mubr.bf16.gmra.mxu0 %v970
  %v1013 = vpop.f32.mrf.mxu0
  %v1014 = vadd.f32 0.0, %v1013
  %v1015 = vpop.f32.mrf.mxu0
  %v1016 = vpop.f32.mrf.mxu0
  %v1017 = vpop.f32.mrf.mxu0
  %1018 = vdwg.mxu0
  %v1019 = vpack.c.bf16 %v1014, %v1014
  %vm1020 = vcmask 517120
  %1021 = vst.msk [vmem:[%s5] sm:$0x3] %vm1020, %v1019
  %s1022 = scalar_lea.vmem %s0, 8
  %v1023 = vld [vmem:[%s1022] sm:$0xf]
  %v1024 = vld [vmem:[%s1022 + $0x4] sm:$0x3]
  %v1027 = vunpack.c.l.b16 %v1023
  %v1028 = vunpack.c.l.b16 %v1024
  %v1029 = vpack.c.b16 %v1028, %v1027
  %v1031 = vshrl.u32 %v1029, 16
  %v1033 = vshll.u32 %v1029, 16
  %v1035 = vrot.slane %v1033, 1
  %v1036 = vor.u32 %v1031, %v1035
  %v1038 = vsel %vm201, %v1036, 0
  %1040 = vmatprep.subr.bf16.mxu0 0
  %1041 = vmatpush1.bf16.msra.mxu0 0
  %1042 = vmatprep.subr.bf16.mxu0 0
  %1043 = vmatpush1.bf16.msra.mxu0 0
  %1044 = vmatprep.subr.bf16.mxu0 0
  %1045 = vmatpush1.bf16.msra.mxu0 %v194
  %1046 = vmatprep.subr.bf16.mxu0 0
  %1047 = vmatpush1.bf16.msra.mxu0 %v193
  %1048 = vmatprep.subr.bf16.mxu0 0
  %1049 = vmatpush1.bf16.msra.mxu0 %v192
  %1050 = vmatprep.subr.bf16.mxu0 0
  %1051 = vmatpush1.bf16.msra.mxu0 %v191
  %1052 = vmatprep.subr.bf16.mxu0 0
  %1053 = vmatpush1.bf16.msra.mxu0 %v190
  %1054 = vmatprep.subr.bf16.mxu0 0
  %1055 = vmatpush1.bf16.msra.mxu0 %v189
  %1056 = vmatprep.subr.bf16.mxu0 0
  %1057 = vmatpush2.bf16.msra.mxu0 0
  %1058 = vmatprep.subr.bf16.mxu0 0
  %1059 = vmatpush2.bf16.msra.mxu0 0
  %1060 = vmatprep.subr.bf16.mxu0 0
  %1061 = vmatpush2.bf16.msra.mxu0 0
  %1062 = vmatprep.subr.bf16.mxu0 0
  %1063 = vmatpush2.bf16.msra.mxu0 0
  %1064 = vmatprep.subr.bf16.mxu0 0
  %1065 = vmatpush2.bf16.msra.mxu0 0
  %1066 = vmatprep.subr.bf16.mxu0 0
  %1067 = vmatpush2.bf16.msra.mxu0 0
  %1068 = vmatprep.subr.bf16.mxu0 0
  %1069 = vmatpush2.bf16.msra.mxu0 0
  %1070 = vmatprep.subr.bf16.mxu0 0
  %1071 = vmatpush2.bf16.msra.mxu0 0
  %1072 = vmatprep.mubr.bf16.mxu0 0
  %1073 = vmatmul.mubr.bf16.gmra.mxu0 %v1038
  %v1074 = vpop.f32.mrf.mxu0
  %v1075 = vadd.f32 0.0, %v1074
  %v1076 = vpop.f32.mrf.mxu0
  %v1077 = vpop.f32.mrf.mxu0
  %v1078 = vpop.f32.mrf.mxu0
  %1079 = vdwg.mxu0
  %v1081 = vsel %vm201, %v1023, 0
  %1083 = vmatprep.subr.bf16.mxu0 0
  %1084 = vmatpush1.bf16.msra.mxu0 0
  %1085 = vmatprep.subr.bf16.mxu0 0
  %1086 = vmatpush1.bf16.msra.mxu0 0
  %1087 = vmatprep.subr.bf16.mxu0 0
  %1088 = vmatpush1.bf16.msra.mxu0 %v274
  %1089 = vmatprep.subr.bf16.mxu0 0
  %1090 = vmatpush1.bf16.msra.mxu0 %v273
  %1091 = vmatprep.subr.bf16.mxu0 0
  %1092 = vmatpush1.bf16.msra.mxu0 %v272
  %1093 = vmatprep.subr.bf16.mxu0 0
  %1094 = vmatpush1.bf16.msra.mxu0 %v271
  %1095 = vmatprep.subr.bf16.mxu0 0
  %1096 = vmatpush1.bf16.msra.mxu0 %v270
  %1097 = vmatprep.subr.bf16.mxu0 0
  %1098 = vmatpush1.bf16.msra.mxu0 %v269
  %1099 = vmatprep.subr.bf16.mxu0 0
  %1100 = vmatpush2.bf16.msra.mxu0 0
  %1101 = vmatprep.subr.bf16.mxu0 0
  %1102 = vmatpush2.bf16.msra.mxu0 0
  %1103 = vmatprep.subr.bf16.mxu0 0
  %1104 = vmatpush2.bf16.msra.mxu0 0
  %1105 = vmatprep.subr.bf16.mxu0 0
  %1106 = vmatpush2.bf16.msra.mxu0 0
  %1107 = vmatprep.subr.bf16.mxu0 0
  %1108 = vmatpush2.bf16.msra.mxu0 0
  %1109 = vmatprep.subr.bf16.mxu0 0
  %1110 = vmatpush2.bf16.msra.mxu0 0
  %1111 = vmatprep.subr.bf16.mxu0 0
  %1112 = vmatpush2.bf16.msra.mxu0 0
  %1113 = vmatprep.subr.bf16.mxu0 0
  %1114 = vmatpush2.bf16.msra.mxu0 0
  %1115 = vmatprep.mubr.bf16.mxu0 0
  %1116 = vmatmul.mubr.bf16.gmra.mxu0 %v1081
  %v1117 = vpop.f32.mrf.mxu0
  %v1118 = vadd.f32 %v1075, %v1117
  %v1119 = vpop.f32.mrf.mxu0
  %v1120 = vpop.f32.mrf.mxu0
  %v1121 = vpop.f32.mrf.mxu0
  %1122 = vdwg.mxu0
  %1123 = vmatprep.subr.bf16.mxu0 0
  %1124 = vmatpush1.bf16.msra.mxu0 0
  %1125 = vmatprep.subr.bf16.mxu0 0
  %1126 = vmatpush1.bf16.msra.mxu0 0
  %1127 = vmatprep.subr.bf16.mxu0 0
  %1128 = vmatpush1.bf16.msra.mxu0 %v353
  %1129 = vmatprep.subr.bf16.mxu0 0
  %1130 = vmatpush1.bf16.msra.mxu0 %v352
  %1131 = vmatprep.subr.bf16.mxu0 0
  %1132 = vmatpush1.bf16.msra.mxu0 %v351
  %1133 = vmatprep.subr.bf16.mxu0 0
  %1134 = vmatpush1.bf16.msra.mxu0 %v350
  %1135 = vmatprep.subr.bf16.mxu0 0
  %1136 = vmatpush1.bf16.msra.mxu0 %v349
  %1137 = vmatprep.subr.bf16.mxu0 0
  %1138 = vmatpush1.bf16.msra.mxu0 %v348
  %1139 = vmatprep.subr.bf16.mxu0 0
  %1140 = vmatpush2.bf16.msra.mxu0 0
  %1141 = vmatprep.subr.bf16.mxu0 0
  %1142 = vmatpush2.bf16.msra.mxu0 0
  %1143 = vmatprep.subr.bf16.mxu0 0
  %1144 = vmatpush2.bf16.msra.mxu0 0
  %1145 = vmatprep.subr.bf16.mxu0 0
  %1146 = vmatpush2.bf16.msra.mxu0 0
  %1147 = vmatprep.subr.bf16.mxu0 0
  %1148 = vmatpush2.bf16.msra.mxu0 0
  %1149 = vmatprep.subr.bf16.mxu0 0
  %1150 = vmatpush2.bf16.msra.mxu0 0
  %1151 = vmatprep.subr.bf16.mxu0 0
  %1152 = vmatpush2.bf16.msra.mxu0 0
  %1153 = vmatprep.subr.bf16.mxu0 0
  %1154 = vmatpush2.bf16.msra.mxu0 0
  %1155 = vmatprep.mubr.bf16.mxu0 0
  %1156 = vmatmul.mubr.bf16.gmra.mxu0 %v1038
  %v1157 = vpop.f32.mrf.mxu0
  %v1158 = vadd.f32 0.0, %v1157
  %v1159 = vpop.f32.mrf.mxu0
  %v1160 = vpop.f32.mrf.mxu0
  %v1161 = vpop.f32.mrf.mxu0
  %1162 = vdwg.mxu0
  %1163 = vmatprep.subr.bf16.mxu0 0
  %1164 = vmatpush1.bf16.msra.mxu0 0
  %1165 = vmatprep.subr.bf16.mxu0 0
  %1166 = vmatpush1.bf16.msra.mxu0 0
  %1167 = vmatprep.subr.bf16.mxu0 0
  %1168 = vmatpush1.bf16.msra.mxu0 %v429
  %1169 = vmatprep.subr.bf16.mxu0 0
  %1170 = vmatpush1.bf16.msra.mxu0 %v428
  %1171 = vmatprep.subr.bf16.mxu0 0
  %1172 = vmatpush1.bf16.msra.mxu0 %v427
  %1173 = vmatprep.subr.bf16.mxu0 0
  %1174 = vmatpush1.bf16.msra.mxu0 %v426
  %1175 = vmatprep.subr.bf16.mxu0 0
  %1176 = vmatpush1.bf16.msra.mxu0 %v425
  %1177 = vmatprep.subr.bf16.mxu0 0
  %1178 = vmatpush1.bf16.msra.mxu0 %v424
  %1179 = vmatprep.subr.bf16.mxu0 0
  %1180 = vmatpush2.bf16.msra.mxu0 0
  %1181 = vmatprep.subr.bf16.mxu0 0
  %1182 = vmatpush2.bf16.msra.mxu0 0
  %1183 = vmatprep.subr.bf16.mxu0 0
  %1184 = vmatpush2.bf16.msra.mxu0 0
  %1185 = vmatprep.subr.bf16.mxu0 0
  %1186 = vmatpush2.bf16.msra.mxu0 0
  %1187 = vmatprep.subr.bf16.mxu0 0
  %1188 = vmatpush2.bf16.msra.mxu0 0
  %1189 = vmatprep.subr.bf16.mxu0 0
  %1190 = vmatpush2.bf16.msra.mxu0 0
  %1191 = vmatprep.subr.bf16.mxu0 0
  %1192 = vmatpush2.bf16.msra.mxu0 0
  %1193 = vmatprep.subr.bf16.mxu0 0
  %1194 = vmatpush2.bf16.msra.mxu0 0
  %1195 = vmatprep.mubr.bf16.mxu0 0
  %1196 = vmatmul.mubr.bf16.gmra.mxu0 %v1081
  %v1197 = vpop.f32.mrf.mxu0
  %v1198 = vadd.f32 %v1158, %v1197
  %v1199 = vpop.f32.mrf.mxu0
  %v1200 = vpop.f32.mrf.mxu0
  %v1201 = vpop.f32.mrf.mxu0
  %1202 = vdwg.mxu0
  %v1203 = vrot.slane %v1029, 1
  %v1205 = vsel %vm201, %v1203, 0
  %1207 = vmatprep.subr.bf16.mxu0 0
  %1208 = vmatpush1.bf16.msra.mxu0 0
  %1209 = vmatprep.subr.bf16.mxu0 0
  %1210 = vmatpush1.bf16.msra.mxu0 0
  %1211 = vmatprep.subr.bf16.mxu0 0
  %1212 = vmatpush1.bf16.msra.mxu0 %v506
  %1213 = vmatprep.subr.bf16.mxu0 0
  %1214 = vmatpush1.bf16.msra.mxu0 %v505
  %1215 = vmatprep.subr.bf16.mxu0 0
  %1216 = vmatpush1.bf16.msra.mxu0 %v504
  %1217 = vmatprep.subr.bf16.mxu0 0
  %1218 = vmatpush1.bf16.msra.mxu0 %v503
  %1219 = vmatprep.subr.bf16.mxu0 0
  %1220 = vmatpush1.bf16.msra.mxu0 %v502
  %1221 = vmatprep.subr.bf16.mxu0 0
  %1222 = vmatpush1.bf16.msra.mxu0 %v501
  %1223 = vmatprep.subr.bf16.mxu0 0
  %1224 = vmatpush2.bf16.msra.mxu0 0
  %1225 = vmatprep.subr.bf16.mxu0 0
  %1226 = vmatpush2.bf16.msra.mxu0 0
  %1227 = vmatprep.subr.bf16.mxu0 0
  %1228 = vmatpush2.bf16.msra.mxu0 0
  %1229 = vmatprep.subr.bf16.mxu0 0
  %1230 = vmatpush2.bf16.msra.mxu0 0
  %1231 = vmatprep.subr.bf16.mxu0 0
  %1232 = vmatpush2.bf16.msra.mxu0 0
  %1233 = vmatprep.subr.bf16.mxu0 0
  %1234 = vmatpush2.bf16.msra.mxu0 0
  %1235 = vmatprep.subr.bf16.mxu0 0
  %1236 = vmatpush2.bf16.msra.mxu0 0
  %1237 = vmatprep.subr.bf16.mxu0 0
  %1238 = vmatpush2.bf16.msra.mxu0 0
  %1239 = vmatprep.mubr.bf16.mxu0 0
  %1240 = vmatmul.mubr.bf16.gmra.mxu0 %v1205
  %v1241 = vpop.f32.mrf.mxu0
  %v1242 = vadd.f32 0.0, %v1241
  %v1243 = vpop.f32.mrf.mxu0
  %v1244 = vpop.f32.mrf.mxu0
  %v1245 = vpop.f32.mrf.mxu0
  %1246 = vdwg.mxu0
  %v1247 = vadd.f32 %v1118, %v1242
  %1248 = vmatprep.subr.bf16.mxu0 0
  %1249 = vmatpush1.bf16.msra.mxu0 0
  %1250 = vmatprep.subr.bf16.mxu0 0
  %1251 = vmatpush1.bf16.msra.mxu0 0
  %1252 = vmatprep.subr.bf16.mxu0 0
  %1253 = vmatpush1.bf16.msra.mxu0 %v586
  %1254 = vmatprep.subr.bf16.mxu0 0
  %1255 = vmatpush1.bf16.msra.mxu0 %v585
  %1256 = vmatprep.subr.bf16.mxu0 0
  %1257 = vmatpush1.bf16.msra.mxu0 %v584
  %1258 = vmatprep.subr.bf16.mxu0 0
  %1259 = vmatpush1.bf16.msra.mxu0 %v583
  %1260 = vmatprep.subr.bf16.mxu0 0
  %1261 = vmatpush1.bf16.msra.mxu0 %v582
  %1262 = vmatprep.subr.bf16.mxu0 0
  %1263 = vmatpush1.bf16.msra.mxu0 %v581
  %1264 = vmatprep.subr.bf16.mxu0 0
  %1265 = vmatpush2.bf16.msra.mxu0 0
  %1266 = vmatprep.subr.bf16.mxu0 0
  %1267 = vmatpush2.bf16.msra.mxu0 0
  %1268 = vmatprep.subr.bf16.mxu0 0
  %1269 = vmatpush2.bf16.msra.mxu0 0
  %1270 = vmatprep.subr.bf16.mxu0 0
  %1271 = vmatpush2.bf16.msra.mxu0 0
  %1272 = vmatprep.subr.bf16.mxu0 0
  %1273 = vmatpush2.bf16.msra.mxu0 0
  %1274 = vmatprep.subr.bf16.mxu0 0
  %1275 = vmatpush2.bf16.msra.mxu0 0
  %1276 = vmatprep.subr.bf16.mxu0 0
  %1277 = vmatpush2.bf16.msra.mxu0 0
  %1278 = vmatprep.subr.bf16.mxu0 0
  %1279 = vmatpush2.bf16.msra.mxu0 0
  %1280 = vmatprep.mubr.bf16.mxu0 0
  %1281 = vmatmul.mubr.bf16.gmra.mxu0 %v1205
  %v1282 = vpop.f32.mrf.mxu0
  %v1283 = vadd.f32 0.0, %v1282
  %v1284 = vpop.f32.mrf.mxu0
  %v1285 = vpop.f32.mrf.mxu0
  %v1286 = vpop.f32.mrf.mxu0
  %1287 = vdwg.mxu0
  %v1288 = vadd.f32 %v1198, %v1283
  %v1289 = vrot.slane %v1031, 1
  %v1290 = vrot.slane %v1033, 2
  %v1291 = vor.u32 %v1289, %v1290
  %v1293 = vsel %vm201, %v1291, 0
  %1295 = vmatprep.subr.bf16.mxu0 0
  %1296 = vmatpush1.bf16.msra.mxu0 0
  %1297 = vmatprep.subr.bf16.mxu0 0
  %1298 = vmatpush1.bf16.msra.mxu0 0
  %1299 = vmatprep.subr.bf16.mxu0 0
  %1300 = vmatpush1.bf16.msra.mxu0 %v666
  %1301 = vmatprep.subr.bf16.mxu0 0
  %1302 = vmatpush1.bf16.msra.mxu0 %v665
  %1303 = vmatprep.subr.bf16.mxu0 0
  %1304 = vmatpush1.bf16.msra.mxu0 %v664
  %1305 = vmatprep.subr.bf16.mxu0 0
  %1306 = vmatpush1.bf16.msra.mxu0 %v663
  %1307 = vmatprep.subr.bf16.mxu0 0
  %1308 = vmatpush1.bf16.msra.mxu0 %v662
  %1309 = vmatprep.subr.bf16.mxu0 0
  %1310 = vmatpush1.bf16.msra.mxu0 %v661
  %1311 = vmatprep.subr.bf16.mxu0 0
  %1312 = vmatpush2.bf16.msra.mxu0 0
  %1313 = vmatprep.subr.bf16.mxu0 0
  %1314 = vmatpush2.bf16.msra.mxu0 0
  %1315 = vmatprep.subr.bf16.mxu0 0
  %1316 = vmatpush2.bf16.msra.mxu0 0
  %1317 = vmatprep.subr.bf16.mxu0 0
  %1318 = vmatpush2.bf16.msra.mxu0 0
  %1319 = vmatprep.subr.bf16.mxu0 0
  %1320 = vmatpush2.bf16.msra.mxu0 0
  %1321 = vmatprep.subr.bf16.mxu0 0
  %1322 = vmatpush2.bf16.msra.mxu0 0
  %1323 = vmatprep.subr.bf16.mxu0 0
  %1324 = vmatpush2.bf16.msra.mxu0 0
  %1325 = vmatprep.subr.bf16.mxu0 0
  %1326 = vmatpush2.bf16.msra.mxu0 0
  %1327 = vmatprep.mubr.bf16.mxu0 0
  %1328 = vmatmul.mubr.bf16.gmra.mxu0 %v1293
  %v1329 = vpop.f32.mrf.mxu0
  %v1330 = vadd.f32 0.0, %v1329
  %v1331 = vpop.f32.mrf.mxu0
  %v1332 = vpop.f32.mrf.mxu0
  %v1333 = vpop.f32.mrf.mxu0
  %1334 = vdwg.mxu0
  %v1335 = vadd.f32 %v1247, %v1330
  %1336 = vmatprep.subr.bf16.mxu0 0
  %1337 = vmatpush1.bf16.msra.mxu0 0
  %1338 = vmatprep.subr.bf16.mxu0 0
  %1339 = vmatpush1.bf16.msra.mxu0 0
  %1340 = vmatprep.subr.bf16.mxu0 0
  %1341 = vmatpush1.bf16.msra.mxu0 %v746
  %1342 = vmatprep.subr.bf16.mxu0 0
  %1343 = vmatpush1.bf16.msra.mxu0 %v745
  %1344 = vmatprep.subr.bf16.mxu0 0
  %1345 = vmatpush1.bf16.msra.mxu0 %v744
  %1346 = vmatprep.subr.bf16.mxu0 0
  %1347 = vmatpush1.bf16.msra.mxu0 %v743
  %1348 = vmatprep.subr.bf16.mxu0 0
  %1349 = vmatpush1.bf16.msra.mxu0 %v742
  %1350 = vmatprep.subr.bf16.mxu0 0
  %1351 = vmatpush1.bf16.msra.mxu0 %v741
  %1352 = vmatprep.subr.bf16.mxu0 0
  %1353 = vmatpush2.bf16.msra.mxu0 0
  %1354 = vmatprep.subr.bf16.mxu0 0
  %1355 = vmatpush2.bf16.msra.mxu0 0
  %1356 = vmatprep.subr.bf16.mxu0 0
  %1357 = vmatpush2.bf16.msra.mxu0 0
  %1358 = vmatprep.subr.bf16.mxu0 0
  %1359 = vmatpush2.bf16.msra.mxu0 0
  %1360 = vmatprep.subr.bf16.mxu0 0
  %1361 = vmatpush2.bf16.msra.mxu0 0
  %1362 = vmatprep.subr.bf16.mxu0 0
  %1363 = vmatpush2.bf16.msra.mxu0 0
  %1364 = vmatprep.subr.bf16.mxu0 0
  %1365 = vmatpush2.bf16.msra.mxu0 0
  %1366 = vmatprep.subr.bf16.mxu0 0
  %1367 = vmatpush2.bf16.msra.mxu0 0
  %1368 = vmatprep.mubr.bf16.mxu0 0
  %1369 = vmatmul.mubr.bf16.gmra.mxu0 %v1293
  %v1370 = vpop.f32.mrf.mxu0
  %v1371 = vadd.f32 0.0, %v1370
  %v1372 = vpop.f32.mrf.mxu0
  %v1373 = vpop.f32.mrf.mxu0
  %v1374 = vpop.f32.mrf.mxu0
  %1375 = vdwg.mxu0
  %v1376 = vadd.f32 %v1288, %v1371
  %v1377 = vrot.slane %v1029, 2
  %v1379 = vsel %vm201, %v1377, 0
  %1381 = vmatprep.subr.bf16.mxu0 0
  %1382 = vmatpush1.bf16.msra.mxu0 0
  %1383 = vmatprep.subr.bf16.mxu0 0
  %1384 = vmatpush1.bf16.msra.mxu0 0
  %1385 = vmatprep.subr.bf16.mxu0 0
  %1386 = vmatpush1.bf16.msra.mxu0 %v824
  %1387 = vmatprep.subr.bf16.mxu0 0
  %1388 = vmatpush1.bf16.msra.mxu0 %v823
  %1389 = vmatprep.subr.bf16.mxu0 0
  %1390 = vmatpush1.bf16.msra.mxu0 %v822
  %1391 = vmatprep.subr.bf16.mxu0 0
  %1392 = vmatpush1.bf16.msra.mxu0 %v821
  %1393 = vmatprep.subr.bf16.mxu0 0
  %1394 = vmatpush1.bf16.msra.mxu0 %v820
  %1395 = vmatprep.subr.bf16.mxu0 0
  %1396 = vmatpush1.bf16.msra.mxu0 %v819
  %1397 = vmatprep.subr.bf16.mxu0 0
  %1398 = vmatpush2.bf16.msra.mxu0 0
  %1399 = vmatprep.subr.bf16.mxu0 0
  %1400 = vmatpush2.bf16.msra.mxu0 0
  %1401 = vmatprep.subr.bf16.mxu0 0
  %1402 = vmatpush2.bf16.msra.mxu0 0
  %1403 = vmatprep.subr.bf16.mxu0 0
  %1404 = vmatpush2.bf16.msra.mxu0 0
  %1405 = vmatprep.subr.bf16.mxu0 0
  %1406 = vmatpush2.bf16.msra.mxu0 0
  %1407 = vmatprep.subr.bf16.mxu0 0
  %1408 = vmatpush2.bf16.msra.mxu0 0
  %1409 = vmatprep.subr.bf16.mxu0 0
  %1410 = vmatpush2.bf16.msra.mxu0 0
  %1411 = vmatprep.subr.bf16.mxu0 0
  %1412 = vmatpush2.bf16.msra.mxu0 0
  %1413 = vmatprep.mubr.bf16.mxu0 0
  %1414 = vmatmul.mubr.bf16.gmra.mxu0 %v1379
  %v1415 = vpop.f32.mrf.mxu0
  %v1416 = vadd.f32 0.0, %v1415
  %v1417 = vpop.f32.mrf.mxu0
  %v1418 = vpop.f32.mrf.mxu0
  %v1419 = vpop.f32.mrf.mxu0
  %1420 = vdwg.mxu0
  %v1421 = vadd.f32 %v1335, %v1416
  %1422 = vmatprep.subr.bf16.mxu0 0
  %1423 = vmatpush1.bf16.msra.mxu0 0
  %1424 = vmatprep.subr.bf16.mxu0 0
  %1425 = vmatpush1.bf16.msra.mxu0 0
  %1426 = vmatprep.subr.bf16.mxu0 0
  %1427 = vmatpush1.bf16.msra.mxu0 %v904
  %1428 = vmatprep.subr.bf16.mxu0 0
  %1429 = vmatpush1.bf16.msra.mxu0 %v903
  %1430 = vmatprep.subr.bf16.mxu0 0
  %1431 = vmatpush1.bf16.msra.mxu0 %v902
  %1432 = vmatprep.subr.bf16.mxu0 0
  %1433 = vmatpush1.bf16.msra.mxu0 %v901
  %1434 = vmatprep.subr.bf16.mxu0 0
  %1435 = vmatpush1.bf16.msra.mxu0 %v900
  %1436 = vmatprep.subr.bf16.mxu0 0
  %1437 = vmatpush1.bf16.msra.mxu0 %v899
  %1438 = vmatprep.subr.bf16.mxu0 0
  %1439 = vmatpush2.bf16.msra.mxu0 0
  %1440 = vmatprep.subr.bf16.mxu0 0
  %1441 = vmatpush2.bf16.msra.mxu0 0
  %1442 = vmatprep.subr.bf16.mxu0 0
  %1443 = vmatpush2.bf16.msra.mxu0 0
  %1444 = vmatprep.subr.bf16.mxu0 0
  %1445 = vmatpush2.bf16.msra.mxu0 0
  %1446 = vmatprep.subr.bf16.mxu0 0
  %1447 = vmatpush2.bf16.msra.mxu0 0
  %1448 = vmatprep.subr.bf16.mxu0 0
  %1449 = vmatpush2.bf16.msra.mxu0 0
  %1450 = vmatprep.subr.bf16.mxu0 0
  %1451 = vmatpush2.bf16.msra.mxu0 0
  %1452 = vmatprep.subr.bf16.mxu0 0
  %1453 = vmatpush2.bf16.msra.mxu0 0
  %1454 = vmatprep.mubr.bf16.mxu0 0
  %1455 = vmatmul.mubr.bf16.gmra.mxu0 %v1379
  %v1456 = vpop.f32.mrf.mxu0
  %v1457 = vadd.f32 0.0, %v1456
  %v1458 = vpop.f32.mrf.mxu0
  %v1459 = vpop.f32.mrf.mxu0
  %v1460 = vpop.f32.mrf.mxu0
  %1461 = vdwg.mxu0
  %v1462 = vadd.f32 %v1376, %v1457
  %v1463 = vadd.f32 %v1421, %v956
  %v1464 = vmax.f32 %v1463, 0.0
  %v1465 = vadd.f32 %v1462, %v956
  %v1466 = vmax.f32 %v1465, 0.0
  %v1467 = vmax.f32 %v1464, %v1466
  %v1469 = vrot.slane %v1467, 1
  %v1471 = vmax.f32 %v1467, %v1469
  %v1472 = vpack.c.bf16 %v1471, %v1471
  %v1474 = vand.u32 %v1472, %v975
  %1476 = vmatprep.subr.bf16.mxu0 0
  %1477 = vmatpush1.bf16.msra.mxu0 0
  %1478 = vmatprep.subr.bf16.mxu0 0
  %1479 = vmatpush1.bf16.msra.mxu0 0
  %1480 = vmatprep.subr.bf16.mxu0 0
  %1481 = vmatpush1.bf16.msra.mxu0 0
  %1482 = vmatprep.subr.bf16.mxu0 0
  %1483 = vmatpush1.bf16.msra.mxu0 0
  %1484 = vmatprep.subr.bf16.mxu0 0
  %1485 = vmatpush1.bf16.msra.mxu0 0
  %1486 = vmatprep.subr.bf16.mxu0 0
  %1487 = vmatpush1.bf16.msra.mxu0 0
  %1488 = vmatprep.subr.bf16.mxu0 0
  %1489 = vmatpush1.bf16.msra.mxu0 0
  %1490 = vmatprep.subr.bf16.mxu0 0
  %1491 = vmatpush1.bf16.msra.mxu0 %v1474
  %1492 = vmatprep.subr.bf16.mxu0 0
  %1493 = vmatpush2.bf16.msra.mxu0 0
  %1494 = vmatprep.subr.bf16.mxu0 0
  %1495 = vmatpush2.bf16.msra.mxu0 0
  %1496 = vmatprep.subr.bf16.mxu0 0
  %1497 = vmatpush2.bf16.msra.mxu0 0
  %1498 = vmatprep.subr.bf16.mxu0 0
  %1499 = vmatpush2.bf16.msra.mxu0 0
  %1500 = vmatprep.subr.bf16.mxu0 0
  %1501 = vmatpush2.bf16.msra.mxu0 0
  %1502 = vmatprep.subr.bf16.mxu0 0
  %1503 = vmatpush2.bf16.msra.mxu0 0
  %1504 = vmatprep.subr.bf16.mxu0 0
  %1505 = vmatpush2.bf16.msra.mxu0 0
  %1506 = vmatprep.subr.bf16.mxu0 0
  %1507 = vmatpush2.bf16.msra.mxu0 0
  %1508 = vmatprep.mubr.bf16.mxu0 0
  %1509 = vmatmul.mubr.bf16.gmra.mxu0 %v970
  %v1510 = vpop.f32.mrf.mxu0
  %v1511 = vadd.f32 0.0, %v1510
  %v1512 = vpop.f32.mrf.mxu0
  %v1513 = vpop.f32.mrf.mxu0
  %v1514 = vpop.f32.mrf.mxu0
  %1515 = vdwg.mxu0
  %v1516 = vpack.c.bf16 %v1511, %v1511
  %s1517 = scalar_lea.vmem %s5, 2
  %1518 = vst.msk [vmem:[%s1517] sm:$0x3] %vm1020, %v1516
  // Predicated region
  $region22: #{simple_cnn_forward.4} parent=0 // pred_check
    _
  $region23: #{simple_cnn_forward.4} parent=0 // pred_check_branch
    %1520 = sbr.rel (0) target = $region25
  $region24: #{simple_cnn_forward.4} parent=0 // pred_region
    _
  $region25: #{simple_cnn_forward.4} parent=0 // pred_fallthru
    _
  // Predicated region
  $region26: #{simple_cnn_forward.4} parent=0 // pred_check
    _
  $region27: #{simple_cnn_forward.4} parent=0 // pred_check_branch
    %1522 = sbr.rel (0) target = $region29
  $region28: #{simple_cnn_forward.4} parent=0 // pred_region
    _
  $region29: #{simple_cnn_forward.4} parent=0 // pred_fallthru
    _

</llo_original>
